<compile_context>
chip_gen: v7x
topology: tpu7x:2x2x1
jax: 0.10.0
libtpu: 0.0.40
codegen_flags: <defaults>
</compile_context>

<pallas_src>
import functools

import jax
import jax.numpy as jnp
from jax.experimental import pallas as pl
from jax.experimental.pallas import tpu as pltpu

VOCAB = 23
EMBED_DIM = 128
C1, K1 = 10, 10
C2, K2 = 10, 8
C3, K3 = 10, 5
HIDDEN = 80
GATE = 128          # per-gate column width, padded to a full lane group


def _round_up(x, m):
    return ((x + m - 1) // m) * m


def _conv_block(x, w_ref, b_ref, k, t_out_pad):
    """Valid 1-D conv over time (axis 1) + bias + ReLU via im2col + one flat matmul.

    x: (Bt, T_in, C_in) f32;  w_ref: (k*C_in, C_out) bf16;  b_ref: (1, C_out) f32.
    t_out_pad is a multiple of 8; rows >= the true T_out are garbage and are never
    read by any valid downstream output.  Returns (Bt, t_out_pad, C_out) f32.
    """
    bt, t_in, c_in = x.shape
    c_out = w_ref.shape[1]
    need = t_out_pad + k - 1
    xb = x.astype(jnp.bfloat16)
    if need > t_in:   # zero-pad time so every (padded) window stays in-bounds
        xb = jnp.concatenate(
            [xb, jnp.zeros((bt, need - t_in, c_in), jnp.bfloat16)], axis=1)
    win = jnp.concatenate([xb[:, i:i + t_out_pad, :] for i in range(k)], axis=-1)
    win = win.reshape(bt * t_out_pad, k * c_in)        # tile-aligned merge (t_out_pad % 8 == 0)
    y = jnp.dot(win, w_ref[...], preferred_element_type=jnp.float32)
    y = jnp.maximum(y + b_ref[...], 0.0)
    return y.reshape(bt, t_out_pad, c_out)             # tile-aligned split


def _maxpool2(x, n_pairs):
    """MaxPool1d(2), floor mode, over time (axis 1) -> n_pairs valid rows."""
    ev = jnp.concatenate([x[:, 2 * p:2 * p + 1, :] for p in range(n_pairs)], axis=1)
    od = jnp.concatenate([x[:, 2 * p + 1:2 * p + 2, :] for p in range(n_pairs)], axis=1)
    return jnp.maximum(ev, od)


def protein_kernel(win1_ref, wc1_ref, b1_ref, w2_ref, b2_ref, w3_ref, b3_ref,
                   wih_ref, whh_ref, bl_ref, out_ref, *, t2p, p2, t3p, p3):
    bt, p1p, wide = win1_ref.shape

    # ---- conv1 (+ fused MaxPool1d(2)) ----------------------------------------
    # Wrapper-built stride-2 wide windows x paired (even|odd) weight: one deep
    # (bt*p1p, 1408) matmul; pooling = max over the two 10-lane output halves.
    x1 = win1_ref[...].reshape(bt * p1p, wide)          # p1p % 8 == 0 -> trivial merge
    y1 = jnp.dot(x1, wc1_ref[...], preferred_element_type=jnp.float32)
    y1 = jnp.maximum(y1 + b1_ref[...], 0.0)             # (bt*p1p, 2*C1)
    a1 = jnp.maximum(y1[:, :C1], y1[:, C1:2 * C1])      # pool1
    a1 = a1.reshape(bt, p1p, C1)                        # valid time rows: P1

    # ---- conv2 + pool2, conv3 + pool3 ----------------------------------------
    a2 = _maxpool2(_conv_block(a1, w2_ref, b2_ref, K2, t2p), p2)   # (bt, p2, 10)
    xl = _maxpool2(_conv_block(a2, w3_ref, b3_ref, K3, t3p), p3)   # (bt, p3, 10)

    # ---- LSTM (fused gates, 128-aligned columns; PyTorch order i, f, g, o) ----
    wih = wih_ref[...]                                   # (10, 4*GATE) bf16
    whh = whh_ref[...]                                   # (80, 4*GATE) bf16
    bl = bl_ref[...]                                     # (1, 4*GATE) f32 (= b_ih + b_hh)
    h = jnp.zeros((bt, HIDDEN), jnp.float32)
    c = jnp.zeros((bt, HIDDEN), jnp.float32)
    for t in range(p3):                                  # p3 is tiny (3 for L=64)
        x_t = xl[:, t, :].astype(jnp.bfloat16)
        gates = (jnp.dot(x_t, wih, preferred_element_type=jnp.float32)
                 + jnp.dot(h.astype(jnp.bfloat16), whh,
                           preferred_element_type=jnp.float32)
                 + bl)
        i_g = jax.nn.sigmoid(gates[:, 0 * GATE:0 * GATE + HIDDEN])
        f_g = jax.nn.sigmoid(gates[:, 1 * GATE:1 * GATE + HIDDEN])
        g_g = jnp.tanh(gates[:, 2 * GATE:2 * GATE + HIDDEN])
        o_g = jax.nn.sigmoid(gates[:, 3 * GATE:3 * GATE + HIDDEN])
        c = f_g * c + i_g * g_g
        h = o_g * jnp.tanh(c)

    # torch.cat((hn[-1], hn[-1]), dim=1) -> one dense (bt, 160) store.
    out_ref[...] = jnp.concatenate([h, h], axis=-1)


def _cores_per_chip():
    # Dual-TensorCore chips want a grid divisible by 2 ("parallel" axis shards
    # across cores); single-TC chips (v5e/v6e) want one big batch tile.
    try:
        kind = jax.devices()[0].device_kind.lower()
    except Exception:
        return 1
    if "v6" in kind or "v5e" in kind or "lite" in kind:
        return 1
    if "v7" in kind or "7x" in kind or "v4" in kind or "v5p" in kind or "v5 p" in kind:
        return 2
    return 1


def prepare_params(params):
    """PyTorch-layout weights -> fused / padded kernel layouts."""
    embed, w1, b1, w2, b2, w3, b3, w_ih, w_hh, b_ih, b_hh = params

    def conv_kco(w):                        # (C_out, C_in, K) -> (K, C_in, C_out)
        return jnp.transpose(w, (2, 1, 0))

    # conv1: paired even/odd weight over a (K1+1)-row wide window.
    w1k = conv_kco(w1)                                          # (K1, 128, C1)
    z = jnp.zeros((1, EMBED_DIM, C1), w1.dtype)
    wc1 = jnp.concatenate([jnp.concatenate([w1k, z], axis=0),   # even conv position
                           jnp.concatenate([z, w1k], axis=0)],  # odd conv position
                          axis=-1)                              # (K1+1, 128, 2*C1)
    wc1 = wc1.reshape((K1 + 1) * EMBED_DIM, 2 * C1).astype(jnp.bfloat16)
    b1p = jnp.concatenate([b1, b1]).reshape(1, 2 * C1)

    w2f = conv_kco(w2).reshape(K2 * C1, C2).astype(jnp.bfloat16)
    w3f = conv_kco(w3).reshape(K3 * C2, C3).astype(jnp.bfloat16)

    def fuse_gates(w):                      # torch (4H, in) -> (in, 4*GATE), gate g at cols [g*GATE, g*GATE+H)
        return jnp.concatenate(
            [jnp.pad(w[g * HIDDEN:(g + 1) * HIDDEN, :].T,
                     ((0, 0), (0, GATE - HIDDEN))) for g in range(4)], axis=1)

    wih_p = fuse_gates(w_ih).astype(jnp.bfloat16)               # (C3, 512)
    whh_p = fuse_gates(w_hh).astype(jnp.bfloat16)               # (H, 512)
    b = b_ih + b_hh
    bl = jnp.concatenate(
        [jnp.pad(b[g * HIDDEN:(g + 1) * HIDDEN], (0, GATE - HIDDEN))
         for g in range(4)]).reshape(1, 4 * GATE)
    return (embed, wc1, b1p, w2f, b2.reshape(1, C2), w3f, b3.reshape(1, C3),
            wih_p, whh_p, bl)


def protein_forward(x_ids, params):
    (embed, wc1, b1p, w2f, b2r, w3f, b3r, wih_p, whh_p, bl) = prepare_params(params)
    B, L = x_ids.shape

    # conv/pool chain sizes (floor-mode MaxPool1d(2))
    T1 = L - K1 + 1
    P1 = T1 // 2
    T2 = P1 - K2 + 1
    P2 = T2 // 2
    T3 = P2 - K3 + 1
    P3 = T3 // 2
    assert P3 >= 1, "sequence too short for the conv/pool chain"
    P1P, T2P, T3P = _round_up(P1, 8), _round_up(T2, 8), _round_up(T3, 8)

    # Generation-aware batch tiling.
    n_cores = _cores_per_chip()
    unit = 8 * n_cores
    Bp = _round_up(max(B, unit), unit)
    b_tile = Bp // n_cores
    while b_tile > 128 and b_tile % 16 == 0:    # keep per-step VMEM modest for big batches
        b_tile //= 2
    grid = (Bp // b_tile,)

    # Glue (wrapper / XLA): embedding gather + stride-2 wide im2col for conv1.
    ids = jnp.pad(x_ids, ((0, Bp - B), (0, 0)))
    emb = jnp.take(embed, ids, axis=0)                           # (Bp, L, 128) f32
    L_need = 2 * (P1P - 1) + K1 + 1
    if L_need > L:
        emb = jnp.pad(emb, ((0, 0), (0, L_need - L), (0, 0)))
    win1 = jnp.concatenate(
        [emb[:, j:j + 2 * P1P:2, :] for j in range(K1 + 1)], axis=-1
    ).astype(jnp.bfloat16)                                       # (Bp, P1P, (K1+1)*128)

    wide = (K1 + 1) * EMBED_DIM
    kernel = functools.partial(protein_kernel, t2p=T2P, p2=P2, t3p=T3P, p3=P3)
    out = pl.pallas_call(
        kernel,
        out_shape=jax.ShapeDtypeStruct((Bp, 2 * HIDDEN), jnp.float32),
        grid_spec=pltpu.PrefetchScalarGridSpec(
            num_scalar_prefetch=0,
            grid=grid,
            in_specs=[
                pl.BlockSpec((b_tile, P1P, wide), lambda b: (b, 0, 0)),
                pl.BlockSpec((wide, 2 * C1), lambda b: (0, 0)),
                pl.BlockSpec((1, 2 * C1), lambda b: (0, 0)),
                pl.BlockSpec((K2 * C1, C2), lambda b: (0, 0)),
                pl.BlockSpec((1, C2), lambda b: (0, 0)),
                pl.BlockSpec((K3 * C2, C3), lambda b: (0, 0)),
                pl.BlockSpec((1, C3), lambda b: (0, 0)),
                pl.BlockSpec((C3, 4 * GATE), lambda b: (0, 0)),
                pl.BlockSpec((HIDDEN, 4 * GATE), lambda b: (0, 0)),
                pl.BlockSpec((1, 4 * GATE), lambda b: (0, 0)),
            ],
            out_specs=pl.BlockSpec((b_tile, 2 * HIDDEN), lambda b: (b, 0)),
        ),
        compiler_params=pltpu.CompilerParams(
            dimension_semantics=("parallel",)),
    )(win1, wc1, b1p, w2f, b2r, w3f, b3r, wih_p, whh_p, bl)
    return out[:B]


def init_params(key):
    """Random params in PyTorch layouts: conv (C_out,C_in,K); LSTM (4H,in)/(4H,H)."""
    ks = jax.random.split(key, 11)

    def u(k, shape, fan_in):
        s = 1.0 / (fan_in ** 0.5)
        return jax.random.uniform(k, shape, jnp.float32, -s, s)

    embed = jax.random.normal(ks[0], (VOCAB, EMBED_DIM), jnp.float32)
    w1 = u(ks[1], (C1, EMBED_DIM, K1), EMBED_DIM * K1)
    b1 = u(ks[2], (C1,), EMBED_DIM * K1)
    w2 = u(ks[3], (C2, C1, K2), C1 * K2)
    b2 = u(ks[4], (C2,), C1 * K2)
    w3 = u(ks[5], (C3, C2, K3), C2 * K3)
    b3 = u(ks[6], (C3,), C2 * K3)
    w_ih = u(ks[7], (4 * HIDDEN, C3), HIDDEN)
    w_hh = u(ks[8], (4 * HIDDEN, HIDDEN), HIDDEN)
    b_ih = u(ks[9], (4 * HIDDEN,), HIDDEN)
    b_hh = u(ks[10], (4 * HIDDEN,), HIDDEN)
    return (embed, w1, b1, w2, b2, w3, b3, w_ih, w_hh, b_ih, b_hh)


# TODO(synk): self.fc (Linear(160, 1)) exists in the module but is never called in
# forward(), so it is intentionally not implemented.

if __name__ == "__main__":
    key = jax.random.PRNGKey(0)
    k_ids, k_params = jax.random.split(key)

    B, L = 4, 64   # L=64 -> conv/pool chain: 55 -> 27 -> 20 -> 10 -> 6 -> 3 LSTM steps
    x_ids = jax.random.randint(k_ids, (B, L), 0, VOCAB, dtype=jnp.int32)
    params = init_params(k_params)

    out = jax.jit(protein_forward)(x_ids, params)
    out = jax.block_until_ready(out)
    assert out.shape == (B, 2 * HIDDEN) and out.dtype == jnp.float32
    assert bool(jnp.all(jnp.isfinite(out)))
    print("KERNEL_OK")
</pallas_src>

<mosaic_0001>
module attributes {stable_mosaic.version = 11 : i64} {
  func.func @protein_kernel(%arg0: i32, %arg1: memref<8x32x1408xbf16, #tpu.memory_space<vmem>>, %arg2: memref<1408x20xbf16, #tpu.memory_space<vmem>>, %arg3: memref<1x20xf32, #tpu.memory_space<vmem>>, %arg4: memref<80x10xbf16, #tpu.memory_space<vmem>>, %arg5: memref<1x10xf32, #tpu.memory_space<vmem>>, %arg6: memref<50x10xbf16, #tpu.memory_space<vmem>>, %arg7: memref<1x10xf32, #tpu.memory_space<vmem>>, %arg8: memref<10x512xbf16, #tpu.memory_space<vmem>>, %arg9: memref<80x512xbf16, #tpu.memory_space<vmem>>, %arg10: memref<1x512xf32, #tpu.memory_space<vmem>>, %arg11: memref<8x160xf32, #tpu.memory_space<vmem>>) attributes {dimension_semantics = [#tpu.dimension_semantics<parallel>], iteration_bounds = array<i64: 1>, scalar_prefetch = 0 : i64, scratch_operands = 0 : i64, tpu.core_type = #tpu.core_type<tc>, window_params = [{transform_indices = @transform_0, window_bounds = array<i64: 8, 32, 1408>}, {pipeline_mode = #tpu.pipeline_mode<synchronous>, transform_indices = @transform_1, window_bounds = array<i64: 1408, 20>}, {pipeline_mode = #tpu.pipeline_mode<synchronous>, transform_indices = @transform_2, window_bounds = array<i64: 1, 20>}, {pipeline_mode = #tpu.pipeline_mode<synchronous>, transform_indices = @transform_3, window_bounds = array<i64: 80, 10>}, {pipeline_mode = #tpu.pipeline_mode<synchronous>, transform_indices = @transform_4, window_bounds = array<i64: 1, 10>}, {pipeline_mode = #tpu.pipeline_mode<synchronous>, transform_indices = @transform_5, window_bounds = array<i64: 50, 10>}, {pipeline_mode = #tpu.pipeline_mode<synchronous>, transform_indices = @transform_6, window_bounds = array<i64: 1, 10>}, {pipeline_mode = #tpu.pipeline_mode<synchronous>, transform_indices = @transform_7, window_bounds = array<i64: 10, 512>}, {pipeline_mode = #tpu.pipeline_mode<synchronous>, transform_indices = @transform_8, window_bounds = array<i64: 80, 512>}, {pipeline_mode = #tpu.pipeline_mode<synchronous>, transform_indices = @transform_9, window_bounds = array<i64: 1, 512>}, {transform_indices = @transform_10, window_bounds = array<i64: 8, 160>}]} {
    %c0 = arith.constant 0 : index
    %c0_0 = arith.constant 0 : index
    %c0_1 = arith.constant 0 : index
    %0 = vector.load %arg1[%c0, %c0_0, %c0_1] : memref<8x32x1408xbf16, #tpu.memory_space<vmem>>, vector<8x32x1408xbf16>
    %1 = vector.shape_cast %0 : vector<8x32x1408xbf16> to vector<256x1408xbf16>
    %c0_2 = arith.constant 0 : index
    %c0_3 = arith.constant 0 : index
    %2 = vector.load %arg2[%c0_2, %c0_3] : memref<1408x20xbf16, #tpu.memory_space<vmem>>, vector<1408x20xbf16>
    %cst = arith.constant dense<0.000000e+00> : vector<256x20xf32>
    %3 = tpu.matmul %1, %2, %cst {dimension_numbers = #tpu.dot_dimension_numbers<[1], [0], [0], [1], [0, 0, 1, 1], [], []>} : vector<256x1408xbf16>, vector<1408x20xbf16>, vector<256x20xf32> -> vector<256x20xf32>
    %c0_4 = arith.constant 0 : index
    %c0_5 = arith.constant 0 : index
    %4 = vector.load %arg3[%c0_4, %c0_5] : memref<1x20xf32, #tpu.memory_space<vmem>>, vector<1x20xf32>
    %5 = vector.broadcast %4 : vector<1x20xf32> to vector<256x20xf32>
    %6 = arith.addf %3, %5 : vector<256x20xf32>
    %cst_6 = arith.constant 0.000000e+00 : f32
    %7 = vector.broadcast %cst_6 : f32 to vector<256x20xf32>
    %8 = arith.maximumf %6, %7 : vector<256x20xf32>
    %9 = vector.extract_strided_slice %8 {offsets = [0, 0], sizes = [256, 10], strides = [1, 1]} : vector<256x20xf32> to vector<256x10xf32>
    %10 = vector.extract_strided_slice %8 {offsets = [0, 10], sizes = [256, 10], strides = [1, 1]} : vector<256x20xf32> to vector<256x10xf32>
    %11 = arith.maximumf %9, %10 : vector<256x10xf32>
    %12 = vector.shape_cast %11 : vector<256x10xf32> to vector<8x32x10xf32>
    %13 = arith.truncf %12 : vector<8x32x10xf32> to vector<8x32x10xbf16>
    %14 = vector.extract_strided_slice %13 {offsets = [0, 0, 0], sizes = [8, 24, 10], strides = [1, 1, 1]} : vector<8x32x10xbf16> to vector<8x24x10xbf16>
    %15 = vector.extract_strided_slice %13 {offsets = [0, 1, 0], sizes = [8, 24, 10], strides = [1, 1, 1]} : vector<8x32x10xbf16> to vector<8x24x10xbf16>
    %16 = vector.extract_strided_slice %13 {offsets = [0, 2, 0], sizes = [8, 24, 10], strides = [1, 1, 1]} : vector<8x32x10xbf16> to vector<8x24x10xbf16>
    %17 = vector.extract_strided_slice %13 {offsets = [0, 3, 0], sizes = [8, 24, 10], strides = [1, 1, 1]} : vector<8x32x10xbf16> to vector<8x24x10xbf16>
    %18 = vector.extract_strided_slice %13 {offsets = [0, 4, 0], sizes = [8, 24, 10], strides = [1, 1, 1]} : vector<8x32x10xbf16> to vector<8x24x10xbf16>
    %19 = vector.extract_strided_slice %13 {offsets = [0, 5, 0], sizes = [8, 24, 10], strides = [1, 1, 1]} : vector<8x32x10xbf16> to vector<8x24x10xbf16>
    %20 = vector.extract_strided_slice %13 {offsets = [0, 6, 0], sizes = [8, 24, 10], strides = [1, 1, 1]} : vector<8x32x10xbf16> to vector<8x24x10xbf16>
    %21 = vector.extract_strided_slice %13 {offsets = [0, 7, 0], sizes = [8, 24, 10], strides = [1, 1, 1]} : vector<8x32x10xbf16> to vector<8x24x10xbf16>
    %22 = tpu.concatenate %14, %15, %16, %17, %18, %19, %20, %21 in 2 : vector<8x24x10xbf16>, vector<8x24x10xbf16>, vector<8x24x10xbf16>, vector<8x24x10xbf16>, vector<8x24x10xbf16>, vector<8x24x10xbf16>, vector<8x24x10xbf16>, vector<8x24x10xbf16> -> vector<8x24x80xbf16>
    %23 = vector.shape_cast %22 : vector<8x24x80xbf16> to vector<192x80xbf16>
    %c0_7 = arith.constant 0 : index
    %c0_8 = arith.constant 0 : index
    %24 = vector.load %arg4[%c0_7, %c0_8] : memref<80x10xbf16, #tpu.memory_space<vmem>>, vector<80x10xbf16>
    %cst_9 = arith.constant dense<0.000000e+00> : vector<192x10xf32>
    %25 = tpu.matmul %23, %24, %cst_9 {dimension_numbers = #tpu.dot_dimension_numbers<[1], [0], [0], [1], [0, 0, 1, 1], [], []>} : vector<192x80xbf16>, vector<80x10xbf16>, vector<192x10xf32> -> vector<192x10xf32>
    %c0_10 = arith.constant 0 : index
    %c0_11 = arith.constant 0 : index
    %26 = vector.load %arg5[%c0_10, %c0_11] : memref<1x10xf32, #tpu.memory_space<vmem>>, vector<1x10xf32>
    %27 = vector.broadcast %26 : vector<1x10xf32> to vector<192x10xf32>
    %28 = arith.addf %25, %27 : vector<192x10xf32>
    %cst_12 = arith.constant 0.000000e+00 : f32
    %29 = vector.broadcast %cst_12 : f32 to vector<192x10xf32>
    %30 = arith.maximumf %28, %29 : vector<192x10xf32>
    %31 = vector.shape_cast %30 : vector<192x10xf32> to vector<8x24x10xf32>
    %32 = vector.extract_strided_slice %31 {offsets = [0, 0, 0], sizes = [8, 1, 10], strides = [1, 1, 1]} : vector<8x24x10xf32> to vector<8x1x10xf32>
    %33 = vector.extract_strided_slice %31 {offsets = [0, 2, 0], sizes = [8, 1, 10], strides = [1, 1, 1]} : vector<8x24x10xf32> to vector<8x1x10xf32>
    %34 = vector.extract_strided_slice %31 {offsets = [0, 4, 0], sizes = [8, 1, 10], strides = [1, 1, 1]} : vector<8x24x10xf32> to vector<8x1x10xf32>
    %35 = vector.extract_strided_slice %31 {offsets = [0, 6, 0], sizes = [8, 1, 10], strides = [1, 1, 1]} : vector<8x24x10xf32> to vector<8x1x10xf32>
    %36 = vector.extract_strided_slice %31 {offsets = [0, 8, 0], sizes = [8, 1, 10], strides = [1, 1, 1]} : vector<8x24x10xf32> to vector<8x1x10xf32>
    %37 = vector.extract_strided_slice %31 {offsets = [0, 10, 0], sizes = [8, 1, 10], strides = [1, 1, 1]} : vector<8x24x10xf32> to vector<8x1x10xf32>
    %38 = vector.extract_strided_slice %31 {offsets = [0, 12, 0], sizes = [8, 1, 10], strides = [1, 1, 1]} : vector<8x24x10xf32> to vector<8x1x10xf32>
    %39 = vector.extract_strided_slice %31 {offsets = [0, 14, 0], sizes = [8, 1, 10], strides = [1, 1, 1]} : vector<8x24x10xf32> to vector<8x1x10xf32>
    %40 = vector.extract_strided_slice %31 {offsets = [0, 16, 0], sizes = [8, 1, 10], strides = [1, 1, 1]} : vector<8x24x10xf32> to vector<8x1x10xf32>
    %41 = vector.extract_strided_slice %31 {offsets = [0, 18, 0], sizes = [8, 1, 10], strides = [1, 1, 1]} : vector<8x24x10xf32> to vector<8x1x10xf32>
    %42 = tpu.concatenate %32, %33, %34, %35, %36, %37, %38, %39, %40, %41 in 1 : vector<8x1x10xf32>, vector<8x1x10xf32>, vector<8x1x10xf32>, vector<8x1x10xf32>, vector<8x1x10xf32>, vector<8x1x10xf32>, vector<8x1x10xf32>, vector<8x1x10xf32>, vector<8x1x10xf32>, vector<8x1x10xf32> -> vector<8x10x10xf32>
    %43 = vector.extract_strided_slice %31 {offsets = [0, 1, 0], sizes = [8, 1, 10], strides = [1, 1, 1]} : vector<8x24x10xf32> to vector<8x1x10xf32>
    %44 = vector.extract_strided_slice %31 {offsets = [0, 3, 0], sizes = [8, 1, 10], strides = [1, 1, 1]} : vector<8x24x10xf32> to vector<8x1x10xf32>
    %45 = vector.extract_strided_slice %31 {offsets = [0, 5, 0], sizes = [8, 1, 10], strides = [1, 1, 1]} : vector<8x24x10xf32> to vector<8x1x10xf32>
    %46 = vector.extract_strided_slice %31 {offsets = [0, 7, 0], sizes = [8, 1, 10], strides = [1, 1, 1]} : vector<8x24x10xf32> to vector<8x1x10xf32>
    %47 = vector.extract_strided_slice %31 {offsets = [0, 9, 0], sizes = [8, 1, 10], strides = [1, 1, 1]} : vector<8x24x10xf32> to vector<8x1x10xf32>
    %48 = vector.extract_strided_slice %31 {offsets = [0, 11, 0], sizes = [8, 1, 10], strides = [1, 1, 1]} : vector<8x24x10xf32> to vector<8x1x10xf32>
    %49 = vector.extract_strided_slice %31 {offsets = [0, 13, 0], sizes = [8, 1, 10], strides = [1, 1, 1]} : vector<8x24x10xf32> to vector<8x1x10xf32>
    %50 = vector.extract_strided_slice %31 {offsets = [0, 15, 0], sizes = [8, 1, 10], strides = [1, 1, 1]} : vector<8x24x10xf32> to vector<8x1x10xf32>
    %51 = vector.extract_strided_slice %31 {offsets = [0, 17, 0], sizes = [8, 1, 10], strides = [1, 1, 1]} : vector<8x24x10xf32> to vector<8x1x10xf32>
    %52 = vector.extract_strided_slice %31 {offsets = [0, 19, 0], sizes = [8, 1, 10], strides = [1, 1, 1]} : vector<8x24x10xf32> to vector<8x1x10xf32>
    %53 = tpu.concatenate %43, %44, %45, %46, %47, %48, %49, %50, %51, %52 in 1 : vector<8x1x10xf32>, vector<8x1x10xf32>, vector<8x1x10xf32>, vector<8x1x10xf32>, vector<8x1x10xf32>, vector<8x1x10xf32>, vector<8x1x10xf32>, vector<8x1x10xf32>, vector<8x1x10xf32>, vector<8x1x10xf32> -> vector<8x10x10xf32>
    %54 = arith.maximumf %42, %53 : vector<8x10x10xf32>
    %55 = arith.truncf %54 : vector<8x10x10xf32> to vector<8x10x10xbf16>
    %cst_13 = arith.constant 0.000000e+00 : bf16
    %56 = vector.broadcast %cst_13 : bf16 to vector<8x2x10xbf16>
    %57 = tpu.concatenate %55, %56 in 1 : vector<8x10x10xbf16>, vector<8x2x10xbf16> -> vector<8x12x10xbf16>
    %58 = vector.extract_strided_slice %57 {offsets = [0, 0, 0], sizes = [8, 8, 10], strides = [1, 1, 1]} : vector<8x12x10xbf16> to vector<8x8x10xbf16>
    %59 = vector.extract_strided_slice %57 {offsets = [0, 1, 0], sizes = [8, 8, 10], strides = [1, 1, 1]} : vector<8x12x10xbf16> to vector<8x8x10xbf16>
    %60 = vector.extract_strided_slice %57 {offsets = [0, 2, 0], sizes = [8, 8, 10], strides = [1, 1, 1]} : vector<8x12x10xbf16> to vector<8x8x10xbf16>
    %61 = vector.extract_strided_slice %57 {offsets = [0, 3, 0], sizes = [8, 8, 10], strides = [1, 1, 1]} : vector<8x12x10xbf16> to vector<8x8x10xbf16>
    %62 = vector.extract_strided_slice %57 {offsets = [0, 4, 0], sizes = [8, 8, 10], strides = [1, 1, 1]} : vector<8x12x10xbf16> to vector<8x8x10xbf16>
    %63 = tpu.concatenate %58, %59, %60, %61, %62 in 2 : vector<8x8x10xbf16>, vector<8x8x10xbf16>, vector<8x8x10xbf16>, vector<8x8x10xbf16>, vector<8x8x10xbf16> -> vector<8x8x50xbf16>
    %64 = vector.shape_cast %63 : vector<8x8x50xbf16> to vector<64x50xbf16>
    %c0_14 = arith.constant 0 : index
    %c0_15 = arith.constant 0 : index
    %65 = vector.load %arg6[%c0_14, %c0_15] : memref<50x10xbf16, #tpu.memory_space<vmem>>, vector<50x10xbf16>
    %cst_16 = arith.constant dense<0.000000e+00> : vector<64x10xf32>
    %66 = tpu.matmul %64, %65, %cst_16 {dimension_numbers = #tpu.dot_dimension_numbers<[1], [0], [0], [1], [0, 0, 1, 1], [], []>} : vector<64x50xbf16>, vector<50x10xbf16>, vector<64x10xf32> -> vector<64x10xf32>
    %c0_17 = arith.constant 0 : index
    %c0_18 = arith.constant 0 : index
    %67 = vector.load %arg7[%c0_17, %c0_18] : memref<1x10xf32, #tpu.memory_space<vmem>>, vector<1x10xf32>
    %68 = vector.broadcast %67 : vector<1x10xf32> to vector<64x10xf32>
    %69 = arith.addf %66, %68 : vector<64x10xf32>
    %cst_19 = arith.constant 0.000000e+00 : f32
    %70 = vector.broadcast %cst_19 : f32 to vector<64x10xf32>
    %71 = arith.maximumf %69, %70 : vector<64x10xf32>
    %72 = vector.shape_cast %71 : vector<64x10xf32> to vector<8x8x10xf32>
    %73 = vector.extract_strided_slice %72 {offsets = [0, 0, 0], sizes = [8, 1, 10], strides = [1, 1, 1]} : vector<8x8x10xf32> to vector<8x1x10xf32>
    %74 = vector.extract_strided_slice %72 {offsets = [0, 2, 0], sizes = [8, 1, 10], strides = [1, 1, 1]} : vector<8x8x10xf32> to vector<8x1x10xf32>
    %75 = vector.extract_strided_slice %72 {offsets = [0, 4, 0], sizes = [8, 1, 10], strides = [1, 1, 1]} : vector<8x8x10xf32> to vector<8x1x10xf32>
    %76 = tpu.concatenate %73, %74, %75 in 1 : vector<8x1x10xf32>, vector<8x1x10xf32>, vector<8x1x10xf32> -> vector<8x3x10xf32>
    %77 = vector.extract_strided_slice %72 {offsets = [0, 1, 0], sizes = [8, 1, 10], strides = [1, 1, 1]} : vector<8x8x10xf32> to vector<8x1x10xf32>
    %78 = vector.extract_strided_slice %72 {offsets = [0, 3, 0], sizes = [8, 1, 10], strides = [1, 1, 1]} : vector<8x8x10xf32> to vector<8x1x10xf32>
    %79 = vector.extract_strided_slice %72 {offsets = [0, 5, 0], sizes = [8, 1, 10], strides = [1, 1, 1]} : vector<8x8x10xf32> to vector<8x1x10xf32>
    %80 = tpu.concatenate %77, %78, %79 in 1 : vector<8x1x10xf32>, vector<8x1x10xf32>, vector<8x1x10xf32> -> vector<8x3x10xf32>
    %81 = arith.maximumf %76, %80 : vector<8x3x10xf32>
    %c0_20 = arith.constant 0 : index
    %c0_21 = arith.constant 0 : index
    %82 = vector.load %arg8[%c0_20, %c0_21] : memref<10x512xbf16, #tpu.memory_space<vmem>>, vector<10x512xbf16>
    %c0_22 = arith.constant 0 : index
    %c0_23 = arith.constant 0 : index
    %83 = vector.load %arg9[%c0_22, %c0_23] : memref<80x512xbf16, #tpu.memory_space<vmem>>, vector<80x512xbf16>
    %c0_24 = arith.constant 0 : index
    %c0_25 = arith.constant 0 : index
    %84 = vector.load %arg10[%c0_24, %c0_25] : memref<1x512xf32, #tpu.memory_space<vmem>>, vector<1x512xf32>
    %cst_26 = arith.constant 0.000000e+00 : f32
    %85 = vector.broadcast %cst_26 : f32 to vector<8x80xf32>
    %cst_27 = arith.constant 0.000000e+00 : f32
    %86 = vector.broadcast %cst_27 : f32 to vector<8x80xf32>
    %87 = vector.extract_strided_slice %81 {offsets = [0, 0, 0], sizes = [8, 1, 10], strides = [1, 1, 1]} : vector<8x3x10xf32> to vector<8x1x10xf32>
    %88 = vector.shape_cast %87 : vector<8x1x10xf32> to vector<8x10xf32>
    %89 = arith.truncf %88 : vector<8x10xf32> to vector<8x10xbf16>
    %cst_28 = arith.constant dense<0.000000e+00> : vector<8x512xf32>
    %90 = tpu.matmul %89, %82, %cst_28 {dimension_numbers = #tpu.dot_dimension_numbers<[1], [0], [0], [1], [0, 0, 1, 1], [], []>} : vector<8x10xbf16>, vector<10x512xbf16>, vector<8x512xf32> -> vector<8x512xf32>
    %91 = arith.truncf %85 : vector<8x80xf32> to vector<8x80xbf16>
    %cst_29 = arith.constant dense<0.000000e+00> : vector<8x512xf32>
    %92 = tpu.matmul %91, %83, %cst_29 {dimension_numbers = #tpu.dot_dimension_numbers<[1], [0], [0], [1], [0, 0, 1, 1], [], []>} : vector<8x80xbf16>, vector<80x512xbf16>, vector<8x512xf32> -> vector<8x512xf32>
    %93 = arith.addf %90, %92 : vector<8x512xf32>
    %94 = vector.broadcast %84 : vector<1x512xf32> to vector<8x512xf32>
    %95 = arith.addf %93, %94 : vector<8x512xf32>
    %96 = vector.extract_strided_slice %95 {offsets = [0, 0], sizes = [8, 80], strides = [1, 1]} : vector<8x512xf32> to vector<8x80xf32>
    %97 = arith.negf %96 : vector<8x80xf32>
    %98 = math.exp %97 : vector<8x80xf32>
    %cst_30 = arith.constant 1.000000e+00 : f32
    %99 = vector.broadcast %cst_30 : f32 to vector<8x80xf32>
    %100 = arith.addf %99, %98 : vector<8x80xf32>
    %101 = arith.divf %99, %100 : vector<8x80xf32>
    %102 = vector.extract_strided_slice %95 {offsets = [0, 128], sizes = [8, 80], strides = [1, 1]} : vector<8x512xf32> to vector<8x80xf32>
    %103 = arith.negf %102 : vector<8x80xf32>
    %104 = math.exp %103 : vector<8x80xf32>
    %cst_31 = arith.constant 1.000000e+00 : f32
    %105 = vector.broadcast %cst_31 : f32 to vector<8x80xf32>
    %106 = arith.addf %105, %104 : vector<8x80xf32>
    %107 = arith.divf %105, %106 : vector<8x80xf32>
    %108 = vector.extract_strided_slice %95 {offsets = [0, 256], sizes = [8, 80], strides = [1, 1]} : vector<8x512xf32> to vector<8x80xf32>
    %109 = math.tanh %108 : vector<8x80xf32>
    %110 = vector.extract_strided_slice %95 {offsets = [0, 384], sizes = [8, 80], strides = [1, 1]} : vector<8x512xf32> to vector<8x80xf32>
    %111 = arith.negf %110 : vector<8x80xf32>
    %112 = math.exp %111 : vector<8x80xf32>
    %cst_32 = arith.constant 1.000000e+00 : f32
    %113 = vector.broadcast %cst_32 : f32 to vector<8x80xf32>
    %114 = arith.addf %113, %112 : vector<8x80xf32>
    %115 = arith.divf %113, %114 : vector<8x80xf32>
    %116 = arith.mulf %107, %86 : vector<8x80xf32>
    %117 = arith.mulf %101, %109 : vector<8x80xf32>
    %118 = arith.addf %116, %117 : vector<8x80xf32>
    %119 = math.tanh %118 : vector<8x80xf32>
    %120 = arith.mulf %115, %119 : vector<8x80xf32>
    %121 = vector.extract_strided_slice %81 {offsets = [0, 1, 0], sizes = [8, 1, 10], strides = [1, 1, 1]} : vector<8x3x10xf32> to vector<8x1x10xf32>
    %122 = vector.shape_cast %121 : vector<8x1x10xf32> to vector<8x10xf32>
    %123 = arith.truncf %122 : vector<8x10xf32> to vector<8x10xbf16>
    %cst_33 = arith.constant dense<0.000000e+00> : vector<8x512xf32>
    %124 = tpu.matmul %123, %82, %cst_33 {dimension_numbers = #tpu.dot_dimension_numbers<[1], [0], [0], [1], [0, 0, 1, 1], [], []>} : vector<8x10xbf16>, vector<10x512xbf16>, vector<8x512xf32> -> vector<8x512xf32>
    %125 = arith.truncf %120 : vector<8x80xf32> to vector<8x80xbf16>
    %cst_34 = arith.constant dense<0.000000e+00> : vector<8x512xf32>
    %126 = tpu.matmul %125, %83, %cst_34 {dimension_numbers = #tpu.dot_dimension_numbers<[1], [0], [0], [1], [0, 0, 1, 1], [], []>} : vector<8x80xbf16>, vector<80x512xbf16>, vector<8x512xf32> -> vector<8x512xf32>
    %127 = arith.addf %124, %126 : vector<8x512xf32>
    %128 = vector.broadcast %84 : vector<1x512xf32> to vector<8x512xf32>
    %129 = arith.addf %127, %128 : vector<8x512xf32>
    %130 = vector.extract_strided_slice %129 {offsets = [0, 0], sizes = [8, 80], strides = [1, 1]} : vector<8x512xf32> to vector<8x80xf32>
    %131 = arith.negf %130 : vector<8x80xf32>
    %132 = math.exp %131 : vector<8x80xf32>
    %cst_35 = arith.constant 1.000000e+00 : f32
    %133 = vector.broadcast %cst_35 : f32 to vector<8x80xf32>
    %134 = arith.addf %133, %132 : vector<8x80xf32>
    %135 = arith.divf %133, %134 : vector<8x80xf32>
    %136 = vector.extract_strided_slice %129 {offsets = [0, 128], sizes = [8, 80], strides = [1, 1]} : vector<8x512xf32> to vector<8x80xf32>
    %137 = arith.negf %136 : vector<8x80xf32>
    %138 = math.exp %137 : vector<8x80xf32>
    %cst_36 = arith.constant 1.000000e+00 : f32
    %139 = vector.broadcast %cst_36 : f32 to vector<8x80xf32>
    %140 = arith.addf %139, %138 : vector<8x80xf32>
    %141 = arith.divf %139, %140 : vector<8x80xf32>
    %142 = vector.extract_strided_slice %129 {offsets = [0, 256], sizes = [8, 80], strides = [1, 1]} : vector<8x512xf32> to vector<8x80xf32>
    %143 = math.tanh %142 : vector<8x80xf32>
    %144 = vector.extract_strided_slice %129 {offsets = [0, 384], sizes = [8, 80], strides = [1, 1]} : vector<8x512xf32> to vector<8x80xf32>
    %145 = arith.negf %144 : vector<8x80xf32>
    %146 = math.exp %145 : vector<8x80xf32>
    %cst_37 = arith.constant 1.000000e+00 : f32
    %147 = vector.broadcast %cst_37 : f32 to vector<8x80xf32>
    %148 = arith.addf %147, %146 : vector<8x80xf32>
    %149 = arith.divf %147, %148 : vector<8x80xf32>
    %150 = arith.mulf %141, %118 : vector<8x80xf32>
    %151 = arith.mulf %135, %143 : vector<8x80xf32>
    %152 = arith.addf %150, %151 : vector<8x80xf32>
    %153 = math.tanh %152 : vector<8x80xf32>
    %154 = arith.mulf %149, %153 : vector<8x80xf32>
    %155 = vector.extract_strided_slice %81 {offsets = [0, 2, 0], sizes = [8, 1, 10], strides = [1, 1, 1]} : vector<8x3x10xf32> to vector<8x1x10xf32>
    %156 = vector.shape_cast %155 : vector<8x1x10xf32> to vector<8x10xf32>
    %157 = arith.truncf %156 : vector<8x10xf32> to vector<8x10xbf16>
    %cst_38 = arith.constant dense<0.000000e+00> : vector<8x512xf32>
    %158 = tpu.matmul %157, %82, %cst_38 {dimension_numbers = #tpu.dot_dimension_numbers<[1], [0], [0], [1], [0, 0, 1, 1], [], []>} : vector<8x10xbf16>, vector<10x512xbf16>, vector<8x512xf32> -> vector<8x512xf32>
    %159 = arith.truncf %154 : vector<8x80xf32> to vector<8x80xbf16>
    %cst_39 = arith.constant dense<0.000000e+00> : vector<8x512xf32>
    %160 = tpu.matmul %159, %83, %cst_39 {dimension_numbers = #tpu.dot_dimension_numbers<[1], [0], [0], [1], [0, 0, 1, 1], [], []>} : vector<8x80xbf16>, vector<80x512xbf16>, vector<8x512xf32> -> vector<8x512xf32>
    %161 = arith.addf %158, %160 : vector<8x512xf32>
    %162 = vector.broadcast %84 : vector<1x512xf32> to vector<8x512xf32>
    %163 = arith.addf %161, %162 : vector<8x512xf32>
    %164 = vector.extract_strided_slice %163 {offsets = [0, 0], sizes = [8, 80], strides = [1, 1]} : vector<8x512xf32> to vector<8x80xf32>
    %165 = arith.negf %164 : vector<8x80xf32>
    %166 = math.exp %165 : vector<8x80xf32>
    %cst_40 = arith.constant 1.000000e+00 : f32
    %167 = vector.broadcast %cst_40 : f32 to vector<8x80xf32>
    %168 = arith.addf %167, %166 : vector<8x80xf32>
    %169 = arith.divf %167, %168 : vector<8x80xf32>
    %170 = vector.extract_strided_slice %163 {offsets = [0, 128], sizes = [8, 80], strides = [1, 1]} : vector<8x512xf32> to vector<8x80xf32>
    %171 = arith.negf %170 : vector<8x80xf32>
    %172 = math.exp %171 : vector<8x80xf32>
    %cst_41 = arith.constant 1.000000e+00 : f32
    %173 = vector.broadcast %cst_41 : f32 to vector<8x80xf32>
    %174 = arith.addf %173, %172 : vector<8x80xf32>
    %175 = arith.divf %173, %174 : vector<8x80xf32>
    %176 = vector.extract_strided_slice %163 {offsets = [0, 256], sizes = [8, 80], strides = [1, 1]} : vector<8x512xf32> to vector<8x80xf32>
    %177 = math.tanh %176 : vector<8x80xf32>
    %178 = vector.extract_strided_slice %163 {offsets = [0, 384], sizes = [8, 80], strides = [1, 1]} : vector<8x512xf32> to vector<8x80xf32>
    %179 = arith.negf %178 : vector<8x80xf32>
    %180 = math.exp %179 : vector<8x80xf32>
    %cst_42 = arith.constant 1.000000e+00 : f32
    %181 = vector.broadcast %cst_42 : f32 to vector<8x80xf32>
    %182 = arith.addf %181, %180 : vector<8x80xf32>
    %183 = arith.divf %181, %182 : vector<8x80xf32>
    %184 = arith.mulf %175, %152 : vector<8x80xf32>
    %185 = arith.mulf %169, %177 : vector<8x80xf32>
    %186 = arith.addf %184, %185 : vector<8x80xf32>
    %187 = math.tanh %186 : vector<8x80xf32>
    %188 = arith.mulf %183, %187 : vector<8x80xf32>
    %189 = tpu.concatenate %188, %188 in 1 : vector<8x80xf32>, vector<8x80xf32> -> vector<8x160xf32>
    %c0_43 = arith.constant 0 : index
    %c0_44 = arith.constant 0 : index
    %190 = vector.load %arg11[%c0_43, %c0_44] : memref<8x160xf32, #tpu.memory_space<vmem>>, vector<8x160xf32>
    tpu.vector_store %arg11[%c0_43, %c0_44], %189 {strides = array<i32>} : memref<8x160xf32, #tpu.memory_space<vmem>>, vector<8x160xf32>,
    return
  }
  func.func @transform_0(%arg0: i32) -> (i32, i32, i32) {
    %c0_i32 = arith.constant 0 : i32
    %c0_i32_0 = arith.constant 0 : i32
    %c0_i32_1 = arith.constant 0 : i32
    return %arg0, %c0_i32, %c0_i32_0 : i32, i32, i32
  }
  func.func @transform_1(%arg0: i32) -> (i32, i32) {
    %c0_i32 = arith.constant 0 : i32
    %c0_i32_0 = arith.constant 0 : i32
    %c0_i32_1 = arith.constant 0 : i32
    return %c0_i32, %c0_i32_0 : i32, i32
  }
  func.func @transform_2(%arg0: i32) -> (i32, i32) {
    %c0_i32 = arith.constant 0 : i32
    %c0_i32_0 = arith.constant 0 : i32
    %c0_i32_1 = arith.constant 0 : i32
    return %c0_i32, %c0_i32_0 : i32, i32
  }
  func.func @transform_3(%arg0: i32) -> (i32, i32) {
    %c0_i32 = arith.constant 0 : i32
    %c0_i32_0 = arith.constant 0 : i32
    %c0_i32_1 = arith.constant 0 : i32
    return %c0_i32, %c0_i32_0 : i32, i32
  }
  func.func @transform_4(%arg0: i32) -> (i32, i32) {
    %c0_i32 = arith.constant 0 : i32
    %c0_i32_0 = arith.constant 0 : i32
    %c0_i32_1 = arith.constant 0 : i32
    return %c0_i32, %c0_i32_0 : i32, i32
  }
  func.func @transform_5(%arg0: i32) -> (i32, i32) {
    %c0_i32 = arith.constant 0 : i32
    %c0_i32_0 = arith.constant 0 : i32
    %c0_i32_1 = arith.constant 0 : i32
    return %c0_i32, %c0_i32_0 : i32, i32
  }
  func.func @transform_6(%arg0: i32) -> (i32, i32) {
    %c0_i32 = arith.constant 0 : i32
    %c0_i32_0 = arith.constant 0 : i32
    %c0_i32_1 = arith.constant 0 : i32
    return %c0_i32, %c0_i32_0 : i32, i32
  }
  func.func @transform_7(%arg0: i32) -> (i32, i32) {
    %c0_i32 = arith.constant 0 : i32
    %c0_i32_0 = arith.constant 0 : i32
    %c0_i32_1 = arith.constant 0 : i32
    return %c0_i32, %c0_i32_0 : i32, i32
  }
  func.func @transform_8(%arg0: i32) -> (i32, i32) {
    %c0_i32 = arith.constant 0 : i32
    %c0_i32_0 = arith.constant 0 : i32
    %c0_i32_1 = arith.constant 0 : i32
    return %c0_i32, %c0_i32_0 : i32, i32
  }
  func.func @transform_9(%arg0: i32) -> (i32, i32) {
    %c0_i32 = arith.constant 0 : i32
    %c0_i32_0 = arith.constant 0 : i32
    %c0_i32_1 = arith.constant 0 : i32
    return %c0_i32, %c0_i32_0 : i32, i32
  }
  func.func @transform_10(%arg0: i32) -> (i32, i32) {
    %c0_i32 = arith.constant 0 : i32
    %c0_i32_0 = arith.constant 0 : i32
    return %arg0, %c0_i32 : i32, i32
  }
}

</mosaic_0001>

<llo_original>
// kernel: protein_forward.1
$region0: #{protein_forward.1}
  #allocation0 [shape = 'u32[]', space=smem, size = 0x4, offset = 0x4, fixed_abs, tag = 'smem constant byte address 0x4 - core index']
  #allocation1 [shape = 'u32[144,128]{1,0:T(1,128)}', space=vmem, size = 0x12000, scoped, tag = 'internal scratch']
  %s0 = inlined_call_operand.vmem [shape: bf16[8,32,1408], index: 0, kind: input, shape index: {}]
  %s1 = inlined_call_operand.vmem [shape: bf16[1408,20], index: 1, kind: input, shape index: {}]
  %s2 = inlined_call_operand.vmem [shape: f32[1,20], index: 2, kind: input, shape index: {}]
  %s3 = inlined_call_operand.vmem [shape: bf16[80,10], index: 3, kind: input, shape index: {}]
  %s4 = inlined_call_operand.vmem [shape: f32[1,10], index: 4, kind: input, shape index: {}]
  %s5 = inlined_call_operand.vmem [shape: bf16[50,10], index: 5, kind: input, shape index: {}]
  %s6 = inlined_call_operand.vmem [shape: f32[1,10], index: 6, kind: input, shape index: {}]
  %s7 = inlined_call_operand.vmem [shape: bf16[10,512], index: 7, kind: input, shape index: {}]
  %s8 = inlined_call_operand.vmem [shape: bf16[80,512], index: 8, kind: input, shape index: {}]
  %s9 = inlined_call_operand.vmem [shape: f32[1,512], index: 9, kind: input, shape index: {}]
  %s10 = inlined_call_operand.vmem [shape: f32[8,160], index: 10, kind: output, shape index: {}]
  %s11 = sld [smem:[#allocation0]]
  $region50: #{protein_forward.1} parent=0
    _
  %s13 = ssub.s32 1, %s11
  %s14 = scalar_select 0, %s13, %s11
  // Predicated region
  $region2: #{protein_forward.1} parent=0 // pred_check
    _
  $region3: #{protein_forward.1} parent=0 // pred_check_branch
    %16 = sbr.rel (0) target = $region5
  $region4: #{protein_forward.1} parent=0 // pred_region
    _
  $region5: #{protein_forward.1} parent=0 // pred_fallthru
    _
  // Predicated region
  $region6: #{protein_forward.1} parent=0 // pred_check
    _
  $region7: #{protein_forward.1} parent=0 // pred_check_branch
    %18 = sbr.rel (0) target = $region9
  $region8: #{protein_forward.1} parent=0 // pred_region
    _
  $region9: #{protein_forward.1} parent=0 // pred_fallthru
    _
  // Predicated region
  $region10: #{protein_forward.1} parent=0 // pred_check
    _
  $region11: #{protein_forward.1} parent=0 // pred_check_branch
    %20 = sbr.rel (0) target = $region13
  $region12: #{protein_forward.1} parent=0 // pred_region
    _
  $region13: #{protein_forward.1} parent=0 // pred_fallthru
    _
  // Predicated region
  $region14: #{protein_forward.1} parent=0 // pred_check
    _
  $region15: #{protein_forward.1} parent=0 // pred_check_branch
    %22 = sbr.rel (0) target = $region17
  $region16: #{protein_forward.1} parent=0 // pred_region
    _
  $region17: #{protein_forward.1} parent=0 // pred_fallthru
    _
  // Predicated region
  $region18: #{protein_forward.1} parent=0 // pred_check
    _
  $region19: #{protein_forward.1} parent=0 // pred_check_branch
    %24 = sbr.rel (0) target = $region21
  $region20: #{protein_forward.1} parent=0 // pred_region
    _
  $region21: #{protein_forward.1} parent=0 // pred_fallthru
    _
  // Predicated region
  $region22: #{protein_forward.1} parent=0 // pred_check
    _
  $region23: #{protein_forward.1} parent=0 // pred_check_branch
    %26 = sbr.rel (0) target = $region25
  $region24: #{protein_forward.1} parent=0 // pred_region
    _
  $region25: #{protein_forward.1} parent=0 // pred_fallthru
    _
  // Predicated region
  $region26: #{protein_forward.1} parent=0 // pred_check
    _
  $region27: #{protein_forward.1} parent=0 // pred_check_branch
    %28 = sbr.rel (0) target = $region29
  $region28: #{protein_forward.1} parent=0 // pred_region
    _
  $region29: #{protein_forward.1} parent=0 // pred_fallthru
    _
  // Predicated region
  $region30: #{protein_forward.1} parent=0 // pred_check
    _
  $region31: #{protein_forward.1} parent=0 // pred_check_branch
    %30 = sbr.rel (0) target = $region33
  $region32: #{protein_forward.1} parent=0 // pred_region
    _
  $region33: #{protein_forward.1} parent=0 // pred_fallthru
    _
  // Predicated region
  $region34: #{protein_forward.1} parent=0 // pred_check
    _
  $region35: #{protein_forward.1} parent=0 // pred_check_branch
    %32 = sbr.rel (0) target = $region37
  $region36: #{protein_forward.1} parent=0 // pred_region
    _
  $region37: #{protein_forward.1} parent=0 // pred_fallthru
    _
  // Predicated region
  $region38: #{protein_forward.1} parent=0 // pred_check
    _
  $region39: #{protein_forward.1} parent=0 // pred_check_branch
    %34 = sbr.rel (0) target = $region41
  $region40: #{protein_forward.1} parent=0 // pred_region
    _
  $region41: #{protein_forward.1} parent=0 // pred_fallthru
    _
  %v36 = vld [vmem:[%s0] sm:$0xff]
  %v37 = vld [vmem:[%s0 + $0x8] sm:$0xff]
  %v38 = vld [vmem:[%s0 + $0x10] sm:$0xff]
  %v39 = vld [vmem:[%s0 + $0x18] sm:$0xff]
  %v40 = vld [vmem:[%s0 + $0x20] sm:$0xff]
  %v41 = vld [vmem:[%s0 + $0x28] sm:$0xf]
  %v42 = vld [vmem:[%s0 + $0x2c] sm:$0xff]
  %v43 = vld [vmem:[%s0 + $0x34] sm:$0xff]
  %v44 = vld [vmem:[%s0 + $0x3c] sm:$0xff]
  %v45 = vld [vmem:[%s0 + $0x44] sm:$0xff]
  %v46 = vld [vmem:[%s0 + $0x4c] sm:$0xff]
  %v47 = vld [vmem:[%s0 + $0x54] sm:$0xf]
  %v48 = vld [vmem:[%s0 + $0x58] sm:$0xff]
  %v49 = vld [vmem:[%s0 + $0x60] sm:$0xff]
  %v50 = vld [vmem:[%s0 + $0x68] sm:$0xff]
  %v51 = vld [vmem:[%s0 + $0x70] sm:$0xff]
  %v52 = vld [vmem:[%s0 + $0x78] sm:$0xff]
  %v53 = vld [vmem:[%s0 + $0x80] sm:$0xf]
  %v54 = vld [vmem:[%s0 + $0x84] sm:$0xff]
  %v55 = vld [vmem:[%s0 + $0x8c] sm:$0xff]
  %v56 = vld [vmem:[%s0 + $0x94] sm:$0xff]
  %v57 = vld [vmem:[%s0 + $0x9c] sm:$0xff]
  %v58 = vld [vmem:[%s0 + $0xa4] sm:$0xff]
  %v59 = vld [vmem:[%s0 + $0xac] sm:$0xf]
  %v60 = vld [vmem:[%s0 + $0xb0] sm:$0xff]
  %v61 = vld [vmem:[%s0 + $0xb8] sm:$0xff]
  %v62 = vld [vmem:[%s0 + $0xc0] sm:$0xff]
  %v63 = vld [vmem:[%s0 + $0xc8] sm:$0xff]
  %v64 = vld [vmem:[%s0 + $0xd0] sm:$0xff]
  %v65 = vld [vmem:[%s0 + $0xd8] sm:$0xf]
  %v66 = vld [vmem:[%s0 + $0xdc] sm:$0xff]
  %v67 = vld [vmem:[%s0 + $0xe4] sm:$0xff]
  %v68 = vld [vmem:[%s0 + $0xec] sm:$0xff]
  %v69 = vld [vmem:[%s0 + $0xf4] sm:$0xff]
  %v70 = vld [vmem:[%s0 + $0xfc] sm:$0xff]
  %v71 = vld [vmem:[%s0 + $0x104] sm:$0xf]
  %v72 = vld [vmem:[%s0 + $0x108] sm:$0xff]
  %v73 = vld [vmem:[%s0 + $0x110] sm:$0xff]
  %v74 = vld [vmem:[%s0 + $0x118] sm:$0xff]
  %v75 = vld [vmem:[%s0 + $0x120] sm:$0xff]
  %v76 = vld [vmem:[%s0 + $0x128] sm:$0xff]
  %v77 = vld [vmem:[%s0 + $0x130] sm:$0xf]
  %v78 = vld [vmem:[%s0 + $0x134] sm:$0xff]
  %v79 = vld [vmem:[%s0 + $0x13c] sm:$0xff]
  %v80 = vld [vmem:[%s0 + $0x144] sm:$0xff]
  %v81 = vld [vmem:[%s0 + $0x14c] sm:$0xff]
  %v82 = vld [vmem:[%s0 + $0x154] sm:$0xff]
  %v83 = vld [vmem:[%s0 + $0x15c] sm:$0xf]
  %v84 = vld [vmem:[%s0 + $0x160] sm:$0xff]
  %v85 = vld [vmem:[%s0 + $0x168] sm:$0xff]
  %v86 = vld [vmem:[%s0 + $0x170] sm:$0xff]
  %v87 = vld [vmem:[%s0 + $0x178] sm:$0xff]
  %v88 = vld [vmem:[%s0 + $0x180] sm:$0xff]
  %v89 = vld [vmem:[%s0 + $0x188] sm:$0xf]
  %v90 = vld [vmem:[%s0 + $0x18c] sm:$0xff]
  %v91 = vld [vmem:[%s0 + $0x194] sm:$0xff]
  %v92 = vld [vmem:[%s0 + $0x19c] sm:$0xff]
  %v93 = vld [vmem:[%s0 + $0x1a4] sm:$0xff]
  %v94 = vld [vmem:[%s0 + $0x1ac] sm:$0xff]
  %v95 = vld [vmem:[%s0 + $0x1b4] sm:$0xf]
  %v96 = vld [vmem:[%s0 + $0x1b8] sm:$0xff]
  %v97 = vld [vmem:[%s0 + $0x1c0] sm:$0xff]
  %v98 = vld [vmem:[%s0 + $0x1c8] sm:$0xff]
  %v99 = vld [vmem:[%s0 + $0x1d0] sm:$0xff]
  %v100 = vld [vmem:[%s0 + $0x1d8] sm:$0xff]
  %v101 = vld [vmem:[%s0 + $0x1e0] sm:$0xf]
  %v102 = vld [vmem:[%s0 + $0x1e4] sm:$0xff]
  %v103 = vld [vmem:[%s0 + $0x1ec] sm:$0xff]
  %v104 = vld [vmem:[%s0 + $0x1f4] sm:$0xff]
  %v105 = vld [vmem:[%s0 + $0x1fc] sm:$0xff]
  %v106 = vld [vmem:[%s0 + $0x204] sm:$0xff]
  %v107 = vld [vmem:[%s0 + $0x20c] sm:$0xf]
  %v108 = vld [vmem:[%s0 + $0x210] sm:$0xff]
  %v109 = vld [vmem:[%s0 + $0x218] sm:$0xff]
  %v110 = vld [vmem:[%s0 + $0x220] sm:$0xff]
  %v111 = vld [vmem:[%s0 + $0x228] sm:$0xff]
  %v112 = vld [vmem:[%s0 + $0x230] sm:$0xff]
  %v113 = vld [vmem:[%s0 + $0x238] sm:$0xf]
  %v114 = vld [vmem:[%s0 + $0x23c] sm:$0xff]
  %v115 = vld [vmem:[%s0 + $0x244] sm:$0xff]
  %v116 = vld [vmem:[%s0 + $0x24c] sm:$0xff]
  %v117 = vld [vmem:[%s0 + $0x254] sm:$0xff]
  %v118 = vld [vmem:[%s0 + $0x25c] sm:$0xff]
  %v119 = vld [vmem:[%s0 + $0x264] sm:$0xf]
  %v120 = vld [vmem:[%s0 + $0x268] sm:$0xff]
  %v121 = vld [vmem:[%s0 + $0x270] sm:$0xff]
  %v122 = vld [vmem:[%s0 + $0x278] sm:$0xff]
  %v123 = vld [vmem:[%s0 + $0x280] sm:$0xff]
  %v124 = vld [vmem:[%s0 + $0x288] sm:$0xff]
  %v125 = vld [vmem:[%s0 + $0x290] sm:$0xf]
  %v126 = vld [vmem:[%s0 + $0x294] sm:$0xff]
  %v127 = vld [vmem:[%s0 + $0x29c] sm:$0xff]
  %v128 = vld [vmem:[%s0 + $0x2a4] sm:$0xff]
  %v129 = vld [vmem:[%s0 + $0x2ac] sm:$0xff]
  %v130 = vld [vmem:[%s0 + $0x2b4] sm:$0xff]
  %v131 = vld [vmem:[%s0 + $0x2bc] sm:$0xf]
  %v132 = vld [vmem:[%s0 + $0x2c0] sm:$0xff]
  %v133 = vld [vmem:[%s0 + $0x2c8] sm:$0xff]
  %v134 = vld [vmem:[%s0 + $0x2d0] sm:$0xff]
  %v135 = vld [vmem:[%s0 + $0x2d8] sm:$0xff]
  %v136 = vld [vmem:[%s0 + $0x2e0] sm:$0xff]
  %v137 = vld [vmem:[%s0 + $0x2e8] sm:$0xf]
  %v138 = vld [vmem:[%s0 + $0x2ec] sm:$0xff]
  %v139 = vld [vmem:[%s0 + $0x2f4] sm:$0xff]
  %v140 = vld [vmem:[%s0 + $0x2fc] sm:$0xff]
  %v141 = vld [vmem:[%s0 + $0x304] sm:$0xff]
  %v142 = vld [vmem:[%s0 + $0x30c] sm:$0xff]
  %v143 = vld [vmem:[%s0 + $0x314] sm:$0xf]
  %v144 = vld [vmem:[%s0 + $0x318] sm:$0xff]
  %v145 = vld [vmem:[%s0 + $0x320] sm:$0xff]
  %v146 = vld [vmem:[%s0 + $0x328] sm:$0xff]
  %v147 = vld [vmem:[%s0 + $0x330] sm:$0xff]
  %v148 = vld [vmem:[%s0 + $0x338] sm:$0xff]
  %v149 = vld [vmem:[%s0 + $0x340] sm:$0xf]
  %v150 = vld [vmem:[%s0 + $0x344] sm:$0xff]
  %v151 = vld [vmem:[%s0 + $0x34c] sm:$0xff]
  %v152 = vld [vmem:[%s0 + $0x354] sm:$0xff]
  %v153 = vld [vmem:[%s0 + $0x35c] sm:$0xff]
  %v154 = vld [vmem:[%s0 + $0x364] sm:$0xff]
  %v155 = vld [vmem:[%s0 + $0x36c] sm:$0xf]
  %v156 = vld [vmem:[%s0 + $0x370] sm:$0xff]
  %v157 = vld [vmem:[%s0 + $0x378] sm:$0xff]
  %v158 = vld [vmem:[%s0 + $0x380] sm:$0xff]
  %v159 = vld [vmem:[%s0 + $0x388] sm:$0xff]
  %v160 = vld [vmem:[%s0 + $0x390] sm:$0xff]
  %v161 = vld [vmem:[%s0 + $0x398] sm:$0xf]
  %v162 = vld [vmem:[%s0 + $0x39c] sm:$0xff]
  %v163 = vld [vmem:[%s0 + $0x3a4] sm:$0xff]
  %v164 = vld [vmem:[%s0 + $0x3ac] sm:$0xff]
  %v165 = vld [vmem:[%s0 + $0x3b4] sm:$0xff]
  %v166 = vld [vmem:[%s0 + $0x3bc] sm:$0xff]
  %v167 = vld [vmem:[%s0 + $0x3c4] sm:$0xf]
  %v168 = vld [vmem:[%s0 + $0x3c8] sm:$0xff]
  %v169 = vld [vmem:[%s0 + $0x3d0] sm:$0xff]
  %v170 = vld [vmem:[%s0 + $0x3d8] sm:$0xff]
  %v171 = vld [vmem:[%s0 + $0x3e0] sm:$0xff]
  %v172 = vld [vmem:[%s0 + $0x3e8] sm:$0xff]
  %v173 = vld [vmem:[%s0 + $0x3f0] sm:$0xf]
  %v174 = vld [vmem:[%s0 + $0x3f4] sm:$0xff]
  %v175 = vld [vmem:[%s0 + $0x3fc] sm:$0xff]
  %v176 = vld [vmem:[%s0 + $0x404] sm:$0xff]
  %v177 = vld [vmem:[%s0 + $0x40c] sm:$0xff]
  %v178 = vld [vmem:[%s0 + $0x414] sm:$0xff]
  %v179 = vld [vmem:[%s0 + $0x41c] sm:$0xf]
  %v180 = vld [vmem:[%s0 + $0x420] sm:$0xff]
  %v181 = vld [vmem:[%s0 + $0x428] sm:$0xff]
  %v182 = vld [vmem:[%s0 + $0x430] sm:$0xff]
  %v183 = vld [vmem:[%s0 + $0x438] sm:$0xff]
  %v184 = vld [vmem:[%s0 + $0x440] sm:$0xff]
  %v185 = vld [vmem:[%s0 + $0x448] sm:$0xf]
  %v186 = vld [vmem:[%s0 + $0x44c] sm:$0xff]
  %v187 = vld [vmem:[%s0 + $0x454] sm:$0xff]
  %v188 = vld [vmem:[%s0 + $0x45c] sm:$0xff]
  %v189 = vld [vmem:[%s0 + $0x464] sm:$0xff]
  %v190 = vld [vmem:[%s0 + $0x46c] sm:$0xff]
  %v191 = vld [vmem:[%s0 + $0x474] sm:$0xf]
  %v192 = vld [vmem:[%s0 + $0x478] sm:$0xff]
  %v193 = vld [vmem:[%s0 + $0x480] sm:$0xff]
  %v194 = vld [vmem:[%s0 + $0x488] sm:$0xff]
  %v195 = vld [vmem:[%s0 + $0x490] sm:$0xff]
  %v196 = vld [vmem:[%s0 + $0x498] sm:$0xff]
  %v197 = vld [vmem:[%s0 + $0x4a0] sm:$0xf]
  %v198 = vld [vmem:[%s0 + $0x4a4] sm:$0xff]
  %v199 = vld [vmem:[%s0 + $0x4ac] sm:$0xff]
  %v200 = vld [vmem:[%s0 + $0x4b4] sm:$0xff]
  %v201 = vld [vmem:[%s0 + $0x4bc] sm:$0xff]
  %v202 = vld [vmem:[%s0 + $0x4c4] sm:$0xff]
  %v203 = vld [vmem:[%s0 + $0x4cc] sm:$0xf]
  %v204 = vld [vmem:[%s0 + $0x4d0] sm:$0xff]
  %v205 = vld [vmem:[%s0 + $0x4d8] sm:$0xff]
  %v206 = vld [vmem:[%s0 + $0x4e0] sm:$0xff]
  %v207 = vld [vmem:[%s0 + $0x4e8] sm:$0xff]
  %v208 = vld [vmem:[%s0 + $0x4f0] sm:$0xff]
  %v209 = vld [vmem:[%s0 + $0x4f8] sm:$0xf]
  %v210 = vld [vmem:[%s0 + $0x4fc] sm:$0xff]
  %v211 = vld [vmem:[%s0 + $0x504] sm:$0xff]
  %v212 = vld [vmem:[%s0 + $0x50c] sm:$0xff]
  %v213 = vld [vmem:[%s0 + $0x514] sm:$0xff]
  %v214 = vld [vmem:[%s0 + $0x51c] sm:$0xff]
  %v215 = vld [vmem:[%s0 + $0x524] sm:$0xf]
  %v216 = vld [vmem:[%s0 + $0x528] sm:$0xff]
  %v217 = vld [vmem:[%s0 + $0x530] sm:$0xff]
  %v218 = vld [vmem:[%s0 + $0x538] sm:$0xff]
  %v219 = vld [vmem:[%s0 + $0x540] sm:$0xff]
  %v220 = vld [vmem:[%s0 + $0x548] sm:$0xff]
  %v221 = vld [vmem:[%s0 + $0x550] sm:$0xf]
  %v222 = vld [vmem:[%s0 + $0x554] sm:$0xff]
  %v223 = vld [vmem:[%s0 + $0x55c] sm:$0xff]
  %v224 = vld [vmem:[%s0 + $0x564] sm:$0xff]
  %v225 = vld [vmem:[%s0 + $0x56c] sm:$0xff]
  %v226 = vld [vmem:[%s0 + $0x574] sm:$0xff]
  %v227 = vld [vmem:[%s0 + $0x57c] sm:$0xf]
  %v228 = vld [vmem:[%s1] sm:$0xf]
  %v229 = vld [vmem:[%s1 + $0x4] sm:$0xf]
  %v230 = vld [vmem:[%s1 + $0x8] sm:$0xf]
  %v231 = vld [vmem:[%s1 + $0xc] sm:$0xf]
  %v232 = vld [vmem:[%s1 + $0x10] sm:$0xf]
  %v233 = vld [vmem:[%s1 + $0x14] sm:$0xf]
  %v234 = vld [vmem:[%s1 + $0x18] sm:$0xf]
  %v235 = vld [vmem:[%s1 + $0x1c] sm:$0xf]
  %v236 = vld [vmem:[%s1 + $0x20] sm:$0xf]
  %v237 = vld [vmem:[%s1 + $0x24] sm:$0xf]
  %v238 = vld [vmem:[%s1 + $0x28] sm:$0xf]
  %v239 = vld [vmem:[%s1 + $0x2c] sm:$0xf]
  %v240 = vld [vmem:[%s1 + $0x30] sm:$0xf]
  %v241 = vld [vmem:[%s1 + $0x34] sm:$0xf]
  %v242 = vld [vmem:[%s1 + $0x38] sm:$0xf]
  %v243 = vld [vmem:[%s1 + $0x3c] sm:$0xf]
  %v244 = vld [vmem:[%s1 + $0x40] sm:$0xf]
  %v245 = vld [vmem:[%s1 + $0x44] sm:$0xf]
  %v246 = vld [vmem:[%s1 + $0x48] sm:$0xf]
  %v247 = vld [vmem:[%s1 + $0x4c] sm:$0xf]
  %v248 = vld [vmem:[%s1 + $0x50] sm:$0xf]
  %v249 = vld [vmem:[%s1 + $0x54] sm:$0xf]
  %v250 = vld [vmem:[%s1 + $0x58] sm:$0xf]
  %v251 = vld [vmem:[%s1 + $0x5c] sm:$0xf]
  %v252 = vld [vmem:[%s1 + $0x60] sm:$0xf]
  %v253 = vld [vmem:[%s1 + $0x64] sm:$0xf]
  %v254 = vld [vmem:[%s1 + $0x68] sm:$0xf]
  %v255 = vld [vmem:[%s1 + $0x6c] sm:$0xf]
  %v256 = vld [vmem:[%s1 + $0x70] sm:$0xf]
  %v257 = vld [vmem:[%s1 + $0x74] sm:$0xf]
  %v258 = vld [vmem:[%s1 + $0x78] sm:$0xf]
  %v259 = vld [vmem:[%s1 + $0x7c] sm:$0xf]
  %v260 = vld [vmem:[%s1 + $0x80] sm:$0xf]
  %v261 = vld [vmem:[%s1 + $0x84] sm:$0xf]
  %v262 = vld [vmem:[%s1 + $0x88] sm:$0xf]
  %v263 = vld [vmem:[%s1 + $0x8c] sm:$0xf]
  %v264 = vld [vmem:[%s1 + $0x90] sm:$0xf]
  %v265 = vld [vmem:[%s1 + $0x94] sm:$0xf]
  %v266 = vld [vmem:[%s1 + $0x98] sm:$0xf]
  %v267 = vld [vmem:[%s1 + $0x9c] sm:$0xf]
  %v268 = vld [vmem:[%s1 + $0xa0] sm:$0xf]
  %v269 = vld [vmem:[%s1 + $0xa4] sm:$0xf]
  %v270 = vld [vmem:[%s1 + $0xa8] sm:$0xf]
  %v271 = vld [vmem:[%s1 + $0xac] sm:$0xf]
  %v272 = vld [vmem:[%s1 + $0xb0] sm:$0xf]
  %v273 = vld [vmem:[%s1 + $0xb4] sm:$0xf]
  %v274 = vld [vmem:[%s1 + $0xb8] sm:$0xf]
  %v275 = vld [vmem:[%s1 + $0xbc] sm:$0xf]
  %v276 = vld [vmem:[%s1 + $0xc0] sm:$0xf]
  %v277 = vld [vmem:[%s1 + $0xc4] sm:$0xf]
  %v278 = vld [vmem:[%s1 + $0xc8] sm:$0xf]
  %v279 = vld [vmem:[%s1 + $0xcc] sm:$0xf]
  %v280 = vld [vmem:[%s1 + $0xd0] sm:$0xf]
  %v281 = vld [vmem:[%s1 + $0xd4] sm:$0xf]
  %v282 = vld [vmem:[%s1 + $0xd8] sm:$0xf]
  %v283 = vld [vmem:[%s1 + $0xdc] sm:$0xf]
  %v284 = vld [vmem:[%s1 + $0xe0] sm:$0xf]
  %v285 = vld [vmem:[%s1 + $0xe4] sm:$0xf]
  %v286 = vld [vmem:[%s1 + $0xe8] sm:$0xf]
  %v287 = vld [vmem:[%s1 + $0xec] sm:$0xf]
  %v288 = vld [vmem:[%s1 + $0xf0] sm:$0xf]
  %v289 = vld [vmem:[%s1 + $0xf4] sm:$0xf]
  %v290 = vld [vmem:[%s1 + $0xf8] sm:$0xf]
  %v291 = vld [vmem:[%s1 + $0xfc] sm:$0xf]
  %v292 = vld [vmem:[%s1 + $0x100] sm:$0xf]
  %v293 = vld [vmem:[%s1 + $0x104] sm:$0xf]
  %v294 = vld [vmem:[%s1 + $0x108] sm:$0xf]
  %v295 = vld [vmem:[%s1 + $0x10c] sm:$0xf]
  %v296 = vld [vmem:[%s1 + $0x110] sm:$0xf]
  %v297 = vld [vmem:[%s1 + $0x114] sm:$0xf]
  %v298 = vld [vmem:[%s1 + $0x118] sm:$0xf]
  %v299 = vld [vmem:[%s1 + $0x11c] sm:$0xf]
  %v300 = vld [vmem:[%s1 + $0x120] sm:$0xf]
  %v301 = vld [vmem:[%s1 + $0x124] sm:$0xf]
  %v302 = vld [vmem:[%s1 + $0x128] sm:$0xf]
  %v303 = vld [vmem:[%s1 + $0x12c] sm:$0xf]
  %v304 = vld [vmem:[%s1 + $0x130] sm:$0xf]
  %v305 = vld [vmem:[%s1 + $0x134] sm:$0xf]
  %v306 = vld [vmem:[%s1 + $0x138] sm:$0xf]
  %v307 = vld [vmem:[%s1 + $0x13c] sm:$0xf]
  %v308 = vld [vmem:[%s1 + $0x140] sm:$0xf]
  %v309 = vld [vmem:[%s1 + $0x144] sm:$0xf]
  %v310 = vld [vmem:[%s1 + $0x148] sm:$0xf]
  %v311 = vld [vmem:[%s1 + $0x14c] sm:$0xf]
  %v312 = vld [vmem:[%s1 + $0x150] sm:$0xf]
  %v313 = vld [vmem:[%s1 + $0x154] sm:$0xf]
  %v314 = vld [vmem:[%s1 + $0x158] sm:$0xf]
  %v315 = vld [vmem:[%s1 + $0x15c] sm:$0xf]
  %v316 = vld [vmem:[%s1 + $0x160] sm:$0xf]
  %v317 = vld [vmem:[%s1 + $0x164] sm:$0xf]
  %v318 = vld [vmem:[%s1 + $0x168] sm:$0xf]
  %v319 = vld [vmem:[%s1 + $0x16c] sm:$0xf]
  %v320 = vld [vmem:[%s1 + $0x170] sm:$0xf]
  %v321 = vld [vmem:[%s1 + $0x174] sm:$0xf]
  %v322 = vld [vmem:[%s1 + $0x178] sm:$0xf]
  %v323 = vld [vmem:[%s1 + $0x17c] sm:$0xf]
  %v324 = vld [vmem:[%s1 + $0x180] sm:$0xf]
  %v325 = vld [vmem:[%s1 + $0x184] sm:$0xf]
  %v326 = vld [vmem:[%s1 + $0x188] sm:$0xf]
  %v327 = vld [vmem:[%s1 + $0x18c] sm:$0xf]
  %v328 = vld [vmem:[%s1 + $0x190] sm:$0xf]
  %v329 = vld [vmem:[%s1 + $0x194] sm:$0xf]
  %v330 = vld [vmem:[%s1 + $0x198] sm:$0xf]
  %v331 = vld [vmem:[%s1 + $0x19c] sm:$0xf]
  %v332 = vld [vmem:[%s1 + $0x1a0] sm:$0xf]
  %v333 = vld [vmem:[%s1 + $0x1a4] sm:$0xf]
  %v334 = vld [vmem:[%s1 + $0x1a8] sm:$0xf]
  %v335 = vld [vmem:[%s1 + $0x1ac] sm:$0xf]
  %v336 = vld [vmem:[%s1 + $0x1b0] sm:$0xf]
  %v337 = vld [vmem:[%s1 + $0x1b4] sm:$0xf]
  %v338 = vld [vmem:[%s1 + $0x1b8] sm:$0xf]
  %v339 = vld [vmem:[%s1 + $0x1bc] sm:$0xf]
  %v340 = vld [vmem:[%s1 + $0x1c0] sm:$0xf]
  %v341 = vld [vmem:[%s1 + $0x1c4] sm:$0xf]
  %v342 = vld [vmem:[%s1 + $0x1c8] sm:$0xf]
  %v343 = vld [vmem:[%s1 + $0x1cc] sm:$0xf]
  %v344 = vld [vmem:[%s1 + $0x1d0] sm:$0xf]
  %v345 = vld [vmem:[%s1 + $0x1d4] sm:$0xf]
  %v346 = vld [vmem:[%s1 + $0x1d8] sm:$0xf]
  %v347 = vld [vmem:[%s1 + $0x1dc] sm:$0xf]
  %v348 = vld [vmem:[%s1 + $0x1e0] sm:$0xf]
  %v349 = vld [vmem:[%s1 + $0x1e4] sm:$0xf]
  %v350 = vld [vmem:[%s1 + $0x1e8] sm:$0xf]
  %v351 = vld [vmem:[%s1 + $0x1ec] sm:$0xf]
  %v352 = vld [vmem:[%s1 + $0x1f0] sm:$0xf]
  %v353 = vld [vmem:[%s1 + $0x1f4] sm:$0xf]
  %v354 = vld [vmem:[%s1 + $0x1f8] sm:$0xf]
  %v355 = vld [vmem:[%s1 + $0x1fc] sm:$0xf]
  %v356 = vld [vmem:[%s1 + $0x200] sm:$0xf]
  %v357 = vld [vmem:[%s1 + $0x204] sm:$0xf]
  %v358 = vld [vmem:[%s1 + $0x208] sm:$0xf]
  %v359 = vld [vmem:[%s1 + $0x20c] sm:$0xf]
  %v360 = vld [vmem:[%s1 + $0x210] sm:$0xf]
  %v361 = vld [vmem:[%s1 + $0x214] sm:$0xf]
  %v362 = vld [vmem:[%s1 + $0x218] sm:$0xf]
  %v363 = vld [vmem:[%s1 + $0x21c] sm:$0xf]
  %v364 = vld [vmem:[%s1 + $0x220] sm:$0xf]
  %v365 = vld [vmem:[%s1 + $0x224] sm:$0xf]
  %v366 = vld [vmem:[%s1 + $0x228] sm:$0xf]
  %v367 = vld [vmem:[%s1 + $0x22c] sm:$0xf]
  %v368 = vld [vmem:[%s1 + $0x230] sm:$0xf]
  %v369 = vld [vmem:[%s1 + $0x234] sm:$0xf]
  %v370 = vld [vmem:[%s1 + $0x238] sm:$0xf]
  %v371 = vld [vmem:[%s1 + $0x23c] sm:$0xf]
  %v372 = vld [vmem:[%s1 + $0x240] sm:$0xf]
  %v373 = vld [vmem:[%s1 + $0x244] sm:$0xf]
  %v374 = vld [vmem:[%s1 + $0x248] sm:$0xf]
  %v375 = vld [vmem:[%s1 + $0x24c] sm:$0xf]
  %v376 = vld [vmem:[%s1 + $0x250] sm:$0xf]
  %v377 = vld [vmem:[%s1 + $0x254] sm:$0xf]
  %v378 = vld [vmem:[%s1 + $0x258] sm:$0xf]
  %v379 = vld [vmem:[%s1 + $0x25c] sm:$0xf]
  %v380 = vld [vmem:[%s1 + $0x260] sm:$0xf]
  %v381 = vld [vmem:[%s1 + $0x264] sm:$0xf]
  %v382 = vld [vmem:[%s1 + $0x268] sm:$0xf]
  %v383 = vld [vmem:[%s1 + $0x26c] sm:$0xf]
  %v384 = vld [vmem:[%s1 + $0x270] sm:$0xf]
  %v385 = vld [vmem:[%s1 + $0x274] sm:$0xf]
  %v386 = vld [vmem:[%s1 + $0x278] sm:$0xf]
  %v387 = vld [vmem:[%s1 + $0x27c] sm:$0xf]
  %v388 = vld [vmem:[%s1 + $0x280] sm:$0xf]
  %v389 = vld [vmem:[%s1 + $0x284] sm:$0xf]
  %v390 = vld [vmem:[%s1 + $0x288] sm:$0xf]
  %v391 = vld [vmem:[%s1 + $0x28c] sm:$0xf]
  %v392 = vld [vmem:[%s1 + $0x290] sm:$0xf]
  %v393 = vld [vmem:[%s1 + $0x294] sm:$0xf]
  %v394 = vld [vmem:[%s1 + $0x298] sm:$0xf]
  %v395 = vld [vmem:[%s1 + $0x29c] sm:$0xf]
  %v396 = vld [vmem:[%s1 + $0x2a0] sm:$0xf]
  %v397 = vld [vmem:[%s1 + $0x2a4] sm:$0xf]
  %v398 = vld [vmem:[%s1 + $0x2a8] sm:$0xf]
  %v399 = vld [vmem:[%s1 + $0x2ac] sm:$0xf]
  %v400 = vld [vmem:[%s1 + $0x2b0] sm:$0xf]
  %v401 = vld [vmem:[%s1 + $0x2b4] sm:$0xf]
  %v402 = vld [vmem:[%s1 + $0x2b8] sm:$0xf]
  %v403 = vld [vmem:[%s1 + $0x2bc] sm:$0xf]
  %v404 = vld [vmem:[%s2] sm:$0x1]
  %v406 = vlaneseq
  %v407 = vshrl.u32 %v406, 7
  %v408 = vsub.s32 0, %v407
  %v409 = vrot.slane %v404, %v408
  %v603 = vunpack.c.l.b16 %v36
  %v604 = vunpack.c.h.b16 %v36
  %v605 = vunpack.c.l.b16 %v37
  %v606 = vunpack.c.h.b16 %v37
  %v607 = vunpack.c.l.b16 %v38
  %v608 = vunpack.c.h.b16 %v38
  %v609 = vunpack.c.l.b16 %v39
  %v610 = vunpack.c.h.b16 %v39
  %v611 = vunpack.c.l.b16 %v40
  %v612 = vunpack.c.h.b16 %v40
  %v613 = vunpack.c.l.b16 %v41
  %v614 = vunpack.c.l.b16 %v42
  %v615 = vunpack.c.h.b16 %v42
  %v616 = vunpack.c.l.b16 %v43
  %v617 = vunpack.c.h.b16 %v43
  %v618 = vunpack.c.l.b16 %v44
  %v619 = vunpack.c.h.b16 %v44
  %v620 = vunpack.c.l.b16 %v45
  %v621 = vunpack.c.h.b16 %v45
  %v622 = vunpack.c.l.b16 %v46
  %v623 = vunpack.c.h.b16 %v46
  %v624 = vunpack.c.l.b16 %v47
  %v625 = vunpack.c.l.b16 %v48
  %v626 = vunpack.c.h.b16 %v48
  %v627 = vunpack.c.l.b16 %v49
  %v628 = vunpack.c.h.b16 %v49
  %v629 = vunpack.c.l.b16 %v50
  %v630 = vunpack.c.h.b16 %v50
  %v631 = vunpack.c.l.b16 %v51
  %v632 = vunpack.c.h.b16 %v51
  %v633 = vunpack.c.l.b16 %v52
  %v634 = vunpack.c.h.b16 %v52
  %v635 = vunpack.c.l.b16 %v53
  %v636 = vunpack.c.l.b16 %v54
  %v637 = vunpack.c.h.b16 %v54
  %v638 = vunpack.c.l.b16 %v55
  %v639 = vunpack.c.h.b16 %v55
  %v640 = vunpack.c.l.b16 %v56
  %v641 = vunpack.c.h.b16 %v56
  %v642 = vunpack.c.l.b16 %v57
  %v643 = vunpack.c.h.b16 %v57
  %v644 = vunpack.c.l.b16 %v58
  %v645 = vunpack.c.h.b16 %v58
  %v646 = vunpack.c.l.b16 %v59
  %v647 = vunpack.c.l.b16 %v60
  %v648 = vunpack.c.h.b16 %v60
  %v649 = vunpack.c.l.b16 %v61
  %v650 = vunpack.c.h.b16 %v61
  %v651 = vunpack.c.l.b16 %v62
  %v652 = vunpack.c.h.b16 %v62
  %v653 = vunpack.c.l.b16 %v63
  %v654 = vunpack.c.h.b16 %v63
  %v655 = vunpack.c.l.b16 %v64
  %v656 = vunpack.c.h.b16 %v64
  %v657 = vunpack.c.l.b16 %v65
  %v658 = vunpack.c.l.b16 %v66
  %v659 = vunpack.c.h.b16 %v66
  %v660 = vunpack.c.l.b16 %v67
  %v661 = vunpack.c.h.b16 %v67
  %v662 = vunpack.c.l.b16 %v68
  %v663 = vunpack.c.h.b16 %v68
  %v664 = vunpack.c.l.b16 %v69
  %v665 = vunpack.c.h.b16 %v69
  %v666 = vunpack.c.l.b16 %v70
  %v667 = vunpack.c.h.b16 %v70
  %v668 = vunpack.c.l.b16 %v71
  %v669 = vunpack.c.l.b16 %v72
  %v670 = vunpack.c.h.b16 %v72
  %v671 = vunpack.c.l.b16 %v73
  %v672 = vunpack.c.h.b16 %v73
  %v673 = vunpack.c.l.b16 %v74
  %v674 = vunpack.c.h.b16 %v74
  %v675 = vunpack.c.l.b16 %v75
  %v676 = vunpack.c.h.b16 %v75
  %v677 = vunpack.c.l.b16 %v76
  %v678 = vunpack.c.h.b16 %v76
  %v679 = vunpack.c.l.b16 %v77
  %v680 = vunpack.c.l.b16 %v78
  %v681 = vunpack.c.h.b16 %v78
  %v682 = vunpack.c.l.b16 %v79
  %v683 = vunpack.c.h.b16 %v79
  %v684 = vunpack.c.l.b16 %v80
  %v685 = vunpack.c.h.b16 %v80
  %v686 = vunpack.c.l.b16 %v81
  %v687 = vunpack.c.h.b16 %v81
  %v688 = vunpack.c.l.b16 %v82
  %v689 = vunpack.c.h.b16 %v82
  %v690 = vunpack.c.l.b16 %v83
  %v691 = vunpack.c.l.b16 %v84
  %v692 = vunpack.c.h.b16 %v84
  %v693 = vunpack.c.l.b16 %v85
  %v694 = vunpack.c.h.b16 %v85
  %v695 = vunpack.c.l.b16 %v86
  %v696 = vunpack.c.h.b16 %v86
  %v697 = vunpack.c.l.b16 %v87
  %v698 = vunpack.c.h.b16 %v87
  %v699 = vunpack.c.l.b16 %v88
  %v700 = vunpack.c.h.b16 %v88
  %v701 = vunpack.c.l.b16 %v89
  %v702 = vunpack.c.l.b16 %v90
  %v703 = vunpack.c.h.b16 %v90
  %v704 = vunpack.c.l.b16 %v91
  %v705 = vunpack.c.h.b16 %v91
  %v706 = vunpack.c.l.b16 %v92
  %v707 = vunpack.c.h.b16 %v92
  %v708 = vunpack.c.l.b16 %v93
  %v709 = vunpack.c.h.b16 %v93
  %v710 = vunpack.c.l.b16 %v94
  %v711 = vunpack.c.h.b16 %v94
  %v712 = vunpack.c.l.b16 %v95
  %v713 = vunpack.c.l.b16 %v96
  %v714 = vunpack.c.h.b16 %v96
  %v715 = vunpack.c.l.b16 %v97
  %v716 = vunpack.c.h.b16 %v97
  %v717 = vunpack.c.l.b16 %v98
  %v718 = vunpack.c.h.b16 %v98
  %v719 = vunpack.c.l.b16 %v99
  %v720 = vunpack.c.h.b16 %v99
  %v721 = vunpack.c.l.b16 %v100
  %v722 = vunpack.c.h.b16 %v100
  %v723 = vunpack.c.l.b16 %v101
  %v724 = vunpack.c.l.b16 %v102
  %v725 = vunpack.c.h.b16 %v102
  %v726 = vunpack.c.l.b16 %v103
  %v727 = vunpack.c.h.b16 %v103
  %v728 = vunpack.c.l.b16 %v104
  %v729 = vunpack.c.h.b16 %v104
  %v730 = vunpack.c.l.b16 %v105
  %v731 = vunpack.c.h.b16 %v105
  %v732 = vunpack.c.l.b16 %v106
  %v733 = vunpack.c.h.b16 %v106
  %v734 = vunpack.c.l.b16 %v107
  %v735 = vunpack.c.l.b16 %v108
  %v736 = vunpack.c.h.b16 %v108
  %v737 = vunpack.c.l.b16 %v109
  %v738 = vunpack.c.h.b16 %v109
  %v739 = vunpack.c.l.b16 %v110
  %v740 = vunpack.c.h.b16 %v110
  %v741 = vunpack.c.l.b16 %v111
  %v742 = vunpack.c.h.b16 %v111
  %v743 = vunpack.c.l.b16 %v112
  %v744 = vunpack.c.h.b16 %v112
  %v745 = vunpack.c.l.b16 %v113
  %v746 = vunpack.c.l.b16 %v114
  %v747 = vunpack.c.h.b16 %v114
  %v748 = vunpack.c.l.b16 %v115
  %v749 = vunpack.c.h.b16 %v115
  %v750 = vunpack.c.l.b16 %v116
  %v751 = vunpack.c.h.b16 %v116
  %v752 = vunpack.c.l.b16 %v117
  %v753 = vunpack.c.h.b16 %v117
  %v754 = vunpack.c.l.b16 %v118
  %v755 = vunpack.c.h.b16 %v118
  %v756 = vunpack.c.l.b16 %v119
  %v757 = vunpack.c.l.b16 %v120
  %v758 = vunpack.c.h.b16 %v120
  %v759 = vunpack.c.l.b16 %v121
  %v760 = vunpack.c.h.b16 %v121
  %v761 = vunpack.c.l.b16 %v122
  %v762 = vunpack.c.h.b16 %v122
  %v763 = vunpack.c.l.b16 %v123
  %v764 = vunpack.c.h.b16 %v123
  %v765 = vunpack.c.l.b16 %v124
  %v766 = vunpack.c.h.b16 %v124
  %v767 = vunpack.c.l.b16 %v125
  %v768 = vunpack.c.l.b16 %v126
  %v769 = vunpack.c.h.b16 %v126
  %v770 = vunpack.c.l.b16 %v127
  %v771 = vunpack.c.h.b16 %v127
  %v772 = vunpack.c.l.b16 %v128
  %v773 = vunpack.c.h.b16 %v128
  %v774 = vunpack.c.l.b16 %v129
  %v775 = vunpack.c.h.b16 %v129
  %v776 = vunpack.c.l.b16 %v130
  %v777 = vunpack.c.h.b16 %v130
  %v778 = vunpack.c.l.b16 %v131
  %v779 = vunpack.c.l.b16 %v132
  %v780 = vunpack.c.h.b16 %v132
  %v781 = vunpack.c.l.b16 %v133
  %v782 = vunpack.c.h.b16 %v133
  %v783 = vunpack.c.l.b16 %v134
  %v784 = vunpack.c.h.b16 %v134
  %v785 = vunpack.c.l.b16 %v135
  %v786 = vunpack.c.h.b16 %v135
  %v787 = vunpack.c.l.b16 %v136
  %v788 = vunpack.c.h.b16 %v136
  %v789 = vunpack.c.l.b16 %v137
  %v790 = vunpack.c.l.b16 %v138
  %v791 = vunpack.c.h.b16 %v138
  %v792 = vunpack.c.l.b16 %v139
  %v793 = vunpack.c.h.b16 %v139
  %v794 = vunpack.c.l.b16 %v140
  %v795 = vunpack.c.h.b16 %v140
  %v796 = vunpack.c.l.b16 %v141
  %v797 = vunpack.c.h.b16 %v141
  %v798 = vunpack.c.l.b16 %v142
  %v799 = vunpack.c.h.b16 %v142
  %v800 = vunpack.c.l.b16 %v143
  %v801 = vunpack.c.l.b16 %v144
  %v802 = vunpack.c.h.b16 %v144
  %v803 = vunpack.c.l.b16 %v145
  %v804 = vunpack.c.h.b16 %v145
  %v805 = vunpack.c.l.b16 %v146
  %v806 = vunpack.c.h.b16 %v146
  %v807 = vunpack.c.l.b16 %v147
  %v808 = vunpack.c.h.b16 %v147
  %v809 = vunpack.c.l.b16 %v148
  %v810 = vunpack.c.h.b16 %v148
  %v811 = vunpack.c.l.b16 %v149
  %v812 = vunpack.c.l.b16 %v150
  %v813 = vunpack.c.h.b16 %v150
  %v814 = vunpack.c.l.b16 %v151
  %v815 = vunpack.c.h.b16 %v151
  %v816 = vunpack.c.l.b16 %v152
  %v817 = vunpack.c.h.b16 %v152
  %v818 = vunpack.c.l.b16 %v153
  %v819 = vunpack.c.h.b16 %v153
  %v820 = vunpack.c.l.b16 %v154
  %v821 = vunpack.c.h.b16 %v154
  %v822 = vunpack.c.l.b16 %v155
  %v823 = vunpack.c.l.b16 %v156
  %v824 = vunpack.c.h.b16 %v156
  %v825 = vunpack.c.l.b16 %v157
  %v826 = vunpack.c.h.b16 %v157
  %v827 = vunpack.c.l.b16 %v158
  %v828 = vunpack.c.h.b16 %v158
  %v829 = vunpack.c.l.b16 %v159
  %v830 = vunpack.c.h.b16 %v159
  %v831 = vunpack.c.l.b16 %v160
  %v832 = vunpack.c.h.b16 %v160
  %v833 = vunpack.c.l.b16 %v161
  %v834 = vunpack.c.l.b16 %v162
  %v835 = vunpack.c.h.b16 %v162
  %v836 = vunpack.c.l.b16 %v163
  %v837 = vunpack.c.h.b16 %v163
  %v838 = vunpack.c.l.b16 %v164
  %v839 = vunpack.c.h.b16 %v164
  %v840 = vunpack.c.l.b16 %v165
  %v841 = vunpack.c.h.b16 %v165
  %v842 = vunpack.c.l.b16 %v166
  %v843 = vunpack.c.h.b16 %v166
  %v844 = vunpack.c.l.b16 %v167
  %v845 = vunpack.c.l.b16 %v168
  %v846 = vunpack.c.h.b16 %v168
  %v847 = vunpack.c.l.b16 %v169
  %v848 = vunpack.c.h.b16 %v169
  %v849 = vunpack.c.l.b16 %v170
  %v850 = vunpack.c.h.b16 %v170
  %v851 = vunpack.c.l.b16 %v171
  %v852 = vunpack.c.h.b16 %v171
  %v853 = vunpack.c.l.b16 %v172
  %v854 = vunpack.c.h.b16 %v172
  %v855 = vunpack.c.l.b16 %v173
  %v856 = vunpack.c.l.b16 %v174
  %v857 = vunpack.c.h.b16 %v174
  %v858 = vunpack.c.l.b16 %v175
  %v859 = vunpack.c.h.b16 %v175
  %v860 = vunpack.c.l.b16 %v176
  %v861 = vunpack.c.h.b16 %v176
  %v862 = vunpack.c.l.b16 %v177
  %v863 = vunpack.c.h.b16 %v177
  %v864 = vunpack.c.l.b16 %v178
  %v865 = vunpack.c.h.b16 %v178
  %v866 = vunpack.c.l.b16 %v179
  %v867 = vunpack.c.l.b16 %v180
  %v868 = vunpack.c.h.b16 %v180
  %v869 = vunpack.c.l.b16 %v181
  %v870 = vunpack.c.h.b16 %v181
  %v871 = vunpack.c.l.b16 %v182
  %v872 = vunpack.c.h.b16 %v182
  %v873 = vunpack.c.l.b16 %v183
  %v874 = vunpack.c.h.b16 %v183
  %v875 = vunpack.c.l.b16 %v184
  %v876 = vunpack.c.h.b16 %v184
  %v877 = vunpack.c.l.b16 %v185
  %v878 = vunpack.c.l.b16 %v186
  %v879 = vunpack.c.h.b16 %v186
  %v880 = vunpack.c.l.b16 %v187
  %v881 = vunpack.c.h.b16 %v187
  %v882 = vunpack.c.l.b16 %v188
  %v883 = vunpack.c.h.b16 %v188
  %v884 = vunpack.c.l.b16 %v189
  %v885 = vunpack.c.h.b16 %v189
  %v886 = vunpack.c.l.b16 %v190
  %v887 = vunpack.c.h.b16 %v190
  %v888 = vunpack.c.l.b16 %v191
  %v889 = vunpack.c.l.b16 %v192
  %v890 = vunpack.c.h.b16 %v192
  %v891 = vunpack.c.l.b16 %v193
  %v892 = vunpack.c.h.b16 %v193
  %v893 = vunpack.c.l.b16 %v194
  %v894 = vunpack.c.h.b16 %v194
  %v895 = vunpack.c.l.b16 %v195
  %v896 = vunpack.c.h.b16 %v195
  %v897 = vunpack.c.l.b16 %v196
  %v898 = vunpack.c.h.b16 %v196
  %v899 = vunpack.c.l.b16 %v197
  %v900 = vunpack.c.l.b16 %v198
  %v901 = vunpack.c.h.b16 %v198
  %v902 = vunpack.c.l.b16 %v199
  %v903 = vunpack.c.h.b16 %v199
  %v904 = vunpack.c.l.b16 %v200
  %v905 = vunpack.c.h.b16 %v200
  %v906 = vunpack.c.l.b16 %v201
  %v907 = vunpack.c.h.b16 %v201
  %v908 = vunpack.c.l.b16 %v202
  %v909 = vunpack.c.h.b16 %v202
  %v910 = vunpack.c.l.b16 %v203
  %v911 = vunpack.c.l.b16 %v204
  %v912 = vunpack.c.h.b16 %v204
  %v913 = vunpack.c.l.b16 %v205
  %v914 = vunpack.c.h.b16 %v205
  %v915 = vunpack.c.l.b16 %v206
  %v916 = vunpack.c.h.b16 %v206
  %v917 = vunpack.c.l.b16 %v207
  %v918 = vunpack.c.h.b16 %v207
  %v919 = vunpack.c.l.b16 %v208
  %v920 = vunpack.c.h.b16 %v208
  %v921 = vunpack.c.l.b16 %v209
  %v922 = vunpack.c.l.b16 %v210
  %v923 = vunpack.c.h.b16 %v210
  %v924 = vunpack.c.l.b16 %v211
  %v925 = vunpack.c.h.b16 %v211
  %v926 = vunpack.c.l.b16 %v212
  %v927 = vunpack.c.h.b16 %v212
  %v928 = vunpack.c.l.b16 %v213
  %v929 = vunpack.c.h.b16 %v213
  %v930 = vunpack.c.l.b16 %v214
  %v931 = vunpack.c.h.b16 %v214
  %v932 = vunpack.c.l.b16 %v215
  %v933 = vunpack.c.l.b16 %v216
  %v934 = vunpack.c.h.b16 %v216
  %v935 = vunpack.c.l.b16 %v217
  %v936 = vunpack.c.h.b16 %v217
  %v937 = vunpack.c.l.b16 %v218
  %v938 = vunpack.c.h.b16 %v218
  %v939 = vunpack.c.l.b16 %v219
  %v940 = vunpack.c.h.b16 %v219
  %v941 = vunpack.c.l.b16 %v220
  %v942 = vunpack.c.h.b16 %v220
  %v943 = vunpack.c.l.b16 %v221
  %v944 = vunpack.c.l.b16 %v222
  %v945 = vunpack.c.h.b16 %v222
  %v946 = vunpack.c.l.b16 %v223
  %v947 = vunpack.c.h.b16 %v223
  %v948 = vunpack.c.l.b16 %v224
  %v949 = vunpack.c.h.b16 %v224
  %v950 = vunpack.c.l.b16 %v225
  %v951 = vunpack.c.h.b16 %v225
  %v952 = vunpack.c.l.b16 %v226
  %v953 = vunpack.c.h.b16 %v226
  %v954 = vunpack.c.l.b16 %v227
  %v955 = vpack.c.b16 %v614, %v603
  %v956 = vpack.c.b16 %v615, %v604
  %v957 = vpack.c.b16 %v616, %v605
  %v958 = vpack.c.b16 %v617, %v606
  %v959 = vpack.c.b16 %v618, %v607
  %v960 = vpack.c.b16 %v619, %v608
  %v961 = vpack.c.b16 %v620, %v609
  %v962 = vpack.c.b16 %v621, %v610
  %v963 = vpack.c.b16 %v622, %v611
  %v964 = vpack.c.b16 %v623, %v612
  %v965 = vpack.c.b16 %v624, %v613
  %v966 = vpack.c.b16 %v636, %v625
  %v967 = vpack.c.b16 %v637, %v626
  %v968 = vpack.c.b16 %v638, %v627
  %v969 = vpack.c.b16 %v639, %v628
  %v970 = vpack.c.b16 %v640, %v629
  %v971 = vpack.c.b16 %v641, %v630
  %v972 = vpack.c.b16 %v642, %v631
  %v973 = vpack.c.b16 %v643, %v632
  %v974 = vpack.c.b16 %v644, %v633
  %v975 = vpack.c.b16 %v645, %v634
  %v976 = vpack.c.b16 %v646, %v635
  %v977 = vpack.c.b16 %v658, %v647
  %v978 = vpack.c.b16 %v659, %v648
  %v979 = vpack.c.b16 %v660, %v649
  %v980 = vpack.c.b16 %v661, %v650
  %v981 = vpack.c.b16 %v662, %v651
  %v982 = vpack.c.b16 %v663, %v652
  %v983 = vpack.c.b16 %v664, %v653
  %v984 = vpack.c.b16 %v665, %v654
  %v985 = vpack.c.b16 %v666, %v655
  %v986 = vpack.c.b16 %v667, %v656
  %v987 = vpack.c.b16 %v668, %v657
  %v988 = vpack.c.b16 %v680, %v669
  %v989 = vpack.c.b16 %v681, %v670
  %v990 = vpack.c.b16 %v682, %v671
  %v991 = vpack.c.b16 %v683, %v672
  %v992 = vpack.c.b16 %v684, %v673
  %v993 = vpack.c.b16 %v685, %v674
  %v994 = vpack.c.b16 %v686, %v675
  %v995 = vpack.c.b16 %v687, %v676
  %v996 = vpack.c.b16 %v688, %v677
  %v997 = vpack.c.b16 %v689, %v678
  %v998 = vpack.c.b16 %v690, %v679
  %v999 = vpack.c.b16 %v702, %v691
  %v1000 = vpack.c.b16 %v703, %v692
  %v1001 = vpack.c.b16 %v704, %v693
  %v1002 = vpack.c.b16 %v705, %v694
  %v1003 = vpack.c.b16 %v706, %v695
  %v1004 = vpack.c.b16 %v707, %v696
  %v1005 = vpack.c.b16 %v708, %v697
  %v1006 = vpack.c.b16 %v709, %v698
  %v1007 = vpack.c.b16 %v710, %v699
  %v1008 = vpack.c.b16 %v711, %v700
  %v1009 = vpack.c.b16 %v712, %v701
  %v1010 = vpack.c.b16 %v724, %v713
  %v1011 = vpack.c.b16 %v725, %v714
  %v1012 = vpack.c.b16 %v726, %v715
  %v1013 = vpack.c.b16 %v727, %v716
  %v1014 = vpack.c.b16 %v728, %v717
  %v1015 = vpack.c.b16 %v729, %v718
  %v1016 = vpack.c.b16 %v730, %v719
  %v1017 = vpack.c.b16 %v731, %v720
  %v1018 = vpack.c.b16 %v732, %v721
  %v1019 = vpack.c.b16 %v733, %v722
  %v1020 = vpack.c.b16 %v734, %v723
  %v1021 = vpack.c.b16 %v746, %v735
  %v1022 = vpack.c.b16 %v747, %v736
  %v1023 = vpack.c.b16 %v748, %v737
  %v1024 = vpack.c.b16 %v749, %v738
  %v1025 = vpack.c.b16 %v750, %v739
  %v1026 = vpack.c.b16 %v751, %v740
  %v1027 = vpack.c.b16 %v752, %v741
  %v1028 = vpack.c.b16 %v753, %v742
  %v1029 = vpack.c.b16 %v754, %v743
  %v1030 = vpack.c.b16 %v755, %v744
  %v1031 = vpack.c.b16 %v756, %v745
  %v1032 = vpack.c.b16 %v768, %v757
  %v1033 = vpack.c.b16 %v769, %v758
  %v1034 = vpack.c.b16 %v770, %v759
  %v1035 = vpack.c.b16 %v771, %v760
  %v1036 = vpack.c.b16 %v772, %v761
  %v1037 = vpack.c.b16 %v773, %v762
  %v1038 = vpack.c.b16 %v774, %v763
  %v1039 = vpack.c.b16 %v775, %v764
  %v1040 = vpack.c.b16 %v776, %v765
  %v1041 = vpack.c.b16 %v777, %v766
  %v1042 = vpack.c.b16 %v778, %v767
  %v1043 = vpack.c.b16 %v790, %v779
  %v1044 = vpack.c.b16 %v791, %v780
  %v1045 = vpack.c.b16 %v792, %v781
  %v1046 = vpack.c.b16 %v793, %v782
  %v1047 = vpack.c.b16 %v794, %v783
  %v1048 = vpack.c.b16 %v795, %v784
  %v1049 = vpack.c.b16 %v796, %v785
  %v1050 = vpack.c.b16 %v797, %v786
  %v1051 = vpack.c.b16 %v798, %v787
  %v1052 = vpack.c.b16 %v799, %v788
  %v1053 = vpack.c.b16 %v800, %v789
  %v1054 = vpack.c.b16 %v812, %v801
  %v1055 = vpack.c.b16 %v813, %v802
  %v1056 = vpack.c.b16 %v814, %v803
  %v1057 = vpack.c.b16 %v815, %v804
  %v1058 = vpack.c.b16 %v816, %v805
  %v1059 = vpack.c.b16 %v817, %v806
  %v1060 = vpack.c.b16 %v818, %v807
  %v1061 = vpack.c.b16 %v819, %v808
  %v1062 = vpack.c.b16 %v820, %v809
  %v1063 = vpack.c.b16 %v821, %v810
  %v1064 = vpack.c.b16 %v822, %v811
  %v1065 = vpack.c.b16 %v834, %v823
  %v1066 = vpack.c.b16 %v835, %v824
  %v1067 = vpack.c.b16 %v836, %v825
  %v1068 = vpack.c.b16 %v837, %v826
  %v1069 = vpack.c.b16 %v838, %v827
  %v1070 = vpack.c.b16 %v839, %v828
  %v1071 = vpack.c.b16 %v840, %v829
  %v1072 = vpack.c.b16 %v841, %v830
  %v1073 = vpack.c.b16 %v842, %v831
  %v1074 = vpack.c.b16 %v843, %v832
  %v1075 = vpack.c.b16 %v844, %v833
  %v1076 = vpack.c.b16 %v856, %v845
  %v1077 = vpack.c.b16 %v857, %v846
  %v1078 = vpack.c.b16 %v858, %v847
  %v1079 = vpack.c.b16 %v859, %v848
  %v1080 = vpack.c.b16 %v860, %v849
  %v1081 = vpack.c.b16 %v861, %v850
  %v1082 = vpack.c.b16 %v862, %v851
  %v1083 = vpack.c.b16 %v863, %v852
  %v1084 = vpack.c.b16 %v864, %v853
  %v1085 = vpack.c.b16 %v865, %v854
  %v1086 = vpack.c.b16 %v866, %v855
  %v1087 = vpack.c.b16 %v878, %v867
  %v1088 = vpack.c.b16 %v879, %v868
  %v1089 = vpack.c.b16 %v880, %v869
  %v1090 = vpack.c.b16 %v881, %v870
  %v1091 = vpack.c.b16 %v882, %v871
  %v1092 = vpack.c.b16 %v883, %v872
  %v1093 = vpack.c.b16 %v884, %v873
  %v1094 = vpack.c.b16 %v885, %v874
  %v1095 = vpack.c.b16 %v886, %v875
  %v1096 = vpack.c.b16 %v887, %v876
  %v1097 = vpack.c.b16 %v888, %v877
  %v1098 = vpack.c.b16 %v900, %v889
  %v1099 = vpack.c.b16 %v901, %v890
  %v1100 = vpack.c.b16 %v902, %v891
  %v1101 = vpack.c.b16 %v903, %v892
  %v1102 = vpack.c.b16 %v904, %v893
  %v1103 = vpack.c.b16 %v905, %v894
  %v1104 = vpack.c.b16 %v906, %v895
  %v1105 = vpack.c.b16 %v907, %v896
  %v1106 = vpack.c.b16 %v908, %v897
  %v1107 = vpack.c.b16 %v909, %v898
  %v1108 = vpack.c.b16 %v910, %v899
  %v1109 = vpack.c.b16 %v922, %v911
  %v1110 = vpack.c.b16 %v923, %v912
  %v1111 = vpack.c.b16 %v924, %v913
  %v1112 = vpack.c.b16 %v925, %v914
  %v1113 = vpack.c.b16 %v926, %v915
  %v1114 = vpack.c.b16 %v927, %v916
  %v1115 = vpack.c.b16 %v928, %v917
  %v1116 = vpack.c.b16 %v929, %v918
  %v1117 = vpack.c.b16 %v930, %v919
  %v1118 = vpack.c.b16 %v931, %v920
  %v1119 = vpack.c.b16 %v932, %v921
  %v1120 = vpack.c.b16 %v944, %v933
  %v1121 = vpack.c.b16 %v945, %v934
  %v1122 = vpack.c.b16 %v946, %v935
  %v1123 = vpack.c.b16 %v947, %v936
  %v1124 = vpack.c.b16 %v948, %v937
  %v1125 = vpack.c.b16 %v949, %v938
  %v1126 = vpack.c.b16 %v950, %v939
  %v1127 = vpack.c.b16 %v951, %v940
  %v1128 = vpack.c.b16 %v952, %v941
  %v1129 = vpack.c.b16 %v953, %v942
  %v1130 = vpack.c.b16 %v954, %v943
  %v1483 = vunpack.c.l.b16 %v228
  %v1484 = vunpack.c.l.b16 %v229
  %v1485 = vunpack.c.l.b16 %v230
  %v1486 = vunpack.c.l.b16 %v231
  %v1487 = vunpack.c.l.b16 %v232
  %v1488 = vunpack.c.l.b16 %v233
  %v1489 = vunpack.c.l.b16 %v234
  %v1490 = vunpack.c.l.b16 %v235
  %v1491 = vunpack.c.l.b16 %v236
  %v1492 = vunpack.c.l.b16 %v237
  %v1493 = vunpack.c.l.b16 %v238
  %v1494 = vunpack.c.l.b16 %v239
  %v1495 = vunpack.c.l.b16 %v240
  %v1496 = vunpack.c.l.b16 %v241
  %v1497 = vunpack.c.l.b16 %v242
  %v1498 = vunpack.c.l.b16 %v243
  %v1499 = vunpack.c.l.b16 %v244
  %v1500 = vunpack.c.l.b16 %v245
  %v1501 = vunpack.c.l.b16 %v246
  %v1502 = vunpack.c.l.b16 %v247
  %v1503 = vunpack.c.l.b16 %v248
  %v1504 = vunpack.c.l.b16 %v249
  %v1505 = vunpack.c.l.b16 %v250
  %v1506 = vunpack.c.l.b16 %v251
  %v1507 = vunpack.c.l.b16 %v252
  %v1508 = vunpack.c.l.b16 %v253
  %v1509 = vunpack.c.l.b16 %v254
  %v1510 = vunpack.c.l.b16 %v255
  %v1511 = vunpack.c.l.b16 %v256
  %v1512 = vunpack.c.l.b16 %v257
  %v1513 = vunpack.c.l.b16 %v258
  %v1514 = vunpack.c.l.b16 %v259
  %v1515 = vunpack.c.l.b16 %v260
  %v1516 = vunpack.c.l.b16 %v261
  %v1517 = vunpack.c.l.b16 %v262
  %v1518 = vunpack.c.l.b16 %v263
  %v1519 = vunpack.c.l.b16 %v264
  %v1520 = vunpack.c.l.b16 %v265
  %v1521 = vunpack.c.l.b16 %v266
  %v1522 = vunpack.c.l.b16 %v267
  %v1523 = vunpack.c.l.b16 %v268
  %v1524 = vunpack.c.l.b16 %v269
  %v1525 = vunpack.c.l.b16 %v270
  %v1526 = vunpack.c.l.b16 %v271
  %v1527 = vunpack.c.l.b16 %v272
  %v1528 = vunpack.c.l.b16 %v273
  %v1529 = vunpack.c.l.b16 %v274
  %v1530 = vunpack.c.l.b16 %v275
  %v1531 = vunpack.c.l.b16 %v276
  %v1532 = vunpack.c.l.b16 %v277
  %v1533 = vunpack.c.l.b16 %v278
  %v1534 = vunpack.c.l.b16 %v279
  %v1535 = vunpack.c.l.b16 %v280
  %v1536 = vunpack.c.l.b16 %v281
  %v1537 = vunpack.c.l.b16 %v282
  %v1538 = vunpack.c.l.b16 %v283
  %v1539 = vunpack.c.l.b16 %v284
  %v1540 = vunpack.c.l.b16 %v285
  %v1541 = vunpack.c.l.b16 %v286
  %v1542 = vunpack.c.l.b16 %v287
  %v1543 = vunpack.c.l.b16 %v288
  %v1544 = vunpack.c.l.b16 %v289
  %v1545 = vunpack.c.l.b16 %v290
  %v1546 = vunpack.c.l.b16 %v291
  %v1547 = vunpack.c.l.b16 %v292
  %v1548 = vunpack.c.l.b16 %v293
  %v1549 = vunpack.c.l.b16 %v294
  %v1550 = vunpack.c.l.b16 %v295
  %v1551 = vunpack.c.l.b16 %v296
  %v1552 = vunpack.c.l.b16 %v297
  %v1553 = vunpack.c.l.b16 %v298
  %v1554 = vunpack.c.l.b16 %v299
  %v1555 = vunpack.c.l.b16 %v300
  %v1556 = vunpack.c.l.b16 %v301
  %v1557 = vunpack.c.l.b16 %v302
  %v1558 = vunpack.c.l.b16 %v303
  %v1559 = vunpack.c.l.b16 %v304
  %v1560 = vunpack.c.l.b16 %v305
  %v1561 = vunpack.c.l.b16 %v306
  %v1562 = vunpack.c.l.b16 %v307
  %v1563 = vunpack.c.l.b16 %v308
  %v1564 = vunpack.c.l.b16 %v309
  %v1565 = vunpack.c.l.b16 %v310
  %v1566 = vunpack.c.l.b16 %v311
  %v1567 = vunpack.c.l.b16 %v312
  %v1568 = vunpack.c.l.b16 %v313
  %v1569 = vunpack.c.l.b16 %v314
  %v1570 = vunpack.c.l.b16 %v315
  %v1571 = vunpack.c.l.b16 %v316
  %v1572 = vunpack.c.l.b16 %v317
  %v1573 = vunpack.c.l.b16 %v318
  %v1574 = vunpack.c.l.b16 %v319
  %v1575 = vunpack.c.l.b16 %v320
  %v1576 = vunpack.c.l.b16 %v321
  %v1577 = vunpack.c.l.b16 %v322
  %v1578 = vunpack.c.l.b16 %v323
  %v1579 = vunpack.c.l.b16 %v324
  %v1580 = vunpack.c.l.b16 %v325
  %v1581 = vunpack.c.l.b16 %v326
  %v1582 = vunpack.c.l.b16 %v327
  %v1583 = vunpack.c.l.b16 %v328
  %v1584 = vunpack.c.l.b16 %v329
  %v1585 = vunpack.c.l.b16 %v330
  %v1586 = vunpack.c.l.b16 %v331
  %v1587 = vunpack.c.l.b16 %v332
  %v1588 = vunpack.c.l.b16 %v333
  %v1589 = vunpack.c.l.b16 %v334
  %v1590 = vunpack.c.l.b16 %v335
  %v1591 = vunpack.c.l.b16 %v336
  %v1592 = vunpack.c.l.b16 %v337
  %v1593 = vunpack.c.l.b16 %v338
  %v1594 = vunpack.c.l.b16 %v339
  %v1595 = vunpack.c.l.b16 %v340
  %v1596 = vunpack.c.l.b16 %v341
  %v1597 = vunpack.c.l.b16 %v342
  %v1598 = vunpack.c.l.b16 %v343
  %v1599 = vunpack.c.l.b16 %v344
  %v1600 = vunpack.c.l.b16 %v345
  %v1601 = vunpack.c.l.b16 %v346
  %v1602 = vunpack.c.l.b16 %v347
  %v1603 = vunpack.c.l.b16 %v348
  %v1604 = vunpack.c.l.b16 %v349
  %v1605 = vunpack.c.l.b16 %v350
  %v1606 = vunpack.c.l.b16 %v351
  %v1607 = vunpack.c.l.b16 %v352
  %v1608 = vunpack.c.l.b16 %v353
  %v1609 = vunpack.c.l.b16 %v354
  %v1610 = vunpack.c.l.b16 %v355
  %v1611 = vunpack.c.l.b16 %v356
  %v1612 = vunpack.c.l.b16 %v357
  %v1613 = vunpack.c.l.b16 %v358
  %v1614 = vunpack.c.l.b16 %v359
  %v1615 = vunpack.c.l.b16 %v360
  %v1616 = vunpack.c.l.b16 %v361
  %v1617 = vunpack.c.l.b16 %v362
  %v1618 = vunpack.c.l.b16 %v363
  %v1619 = vunpack.c.l.b16 %v364
  %v1620 = vunpack.c.l.b16 %v365
  %v1621 = vunpack.c.l.b16 %v366
  %v1622 = vunpack.c.l.b16 %v367
  %v1623 = vunpack.c.l.b16 %v368
  %v1624 = vunpack.c.l.b16 %v369
  %v1625 = vunpack.c.l.b16 %v370
  %v1626 = vunpack.c.l.b16 %v371
  %v1627 = vunpack.c.l.b16 %v372
  %v1628 = vunpack.c.l.b16 %v373
  %v1629 = vunpack.c.l.b16 %v374
  %v1630 = vunpack.c.l.b16 %v375
  %v1631 = vunpack.c.l.b16 %v376
  %v1632 = vunpack.c.l.b16 %v377
  %v1633 = vunpack.c.l.b16 %v378
  %v1634 = vunpack.c.l.b16 %v379
  %v1635 = vunpack.c.l.b16 %v380
  %v1636 = vunpack.c.l.b16 %v381
  %v1637 = vunpack.c.l.b16 %v382
  %v1638 = vunpack.c.l.b16 %v383
  %v1639 = vunpack.c.l.b16 %v384
  %v1640 = vunpack.c.l.b16 %v385
  %v1641 = vunpack.c.l.b16 %v386
  %v1642 = vunpack.c.l.b16 %v387
  %v1643 = vunpack.c.l.b16 %v388
  %v1644 = vunpack.c.l.b16 %v389
  %v1645 = vunpack.c.l.b16 %v390
  %v1646 = vunpack.c.l.b16 %v391
  %v1647 = vunpack.c.l.b16 %v392
  %v1648 = vunpack.c.l.b16 %v393
  %v1649 = vunpack.c.l.b16 %v394
  %v1650 = vunpack.c.l.b16 %v395
  %v1651 = vunpack.c.l.b16 %v396
  %v1652 = vunpack.c.l.b16 %v397
  %v1653 = vunpack.c.l.b16 %v398
  %v1654 = vunpack.c.l.b16 %v399
  %v1655 = vunpack.c.l.b16 %v400
  %v1656 = vunpack.c.l.b16 %v401
  %v1657 = vunpack.c.l.b16 %v402
  %v1658 = vunpack.c.l.b16 %v403
  %v1659 = vpack.c.b16 %v1484, %v1483
  %v1660 = vpack.c.b16 %v1486, %v1485
  %v1661 = vpack.c.b16 %v1488, %v1487
  %v1662 = vpack.c.b16 %v1490, %v1489
  %v1663 = vpack.c.b16 %v1492, %v1491
  %v1664 = vpack.c.b16 %v1494, %v1493
  %v1665 = vpack.c.b16 %v1496, %v1495
  %v1666 = vpack.c.b16 %v1498, %v1497
  %v1667 = vpack.c.b16 %v1500, %v1499
  %v1668 = vpack.c.b16 %v1502, %v1501
  %v1669 = vpack.c.b16 %v1504, %v1503
  %v1670 = vpack.c.b16 %v1506, %v1505
  %v1671 = vpack.c.b16 %v1508, %v1507
  %v1672 = vpack.c.b16 %v1510, %v1509
  %v1673 = vpack.c.b16 %v1512, %v1511
  %v1674 = vpack.c.b16 %v1514, %v1513
  %v1675 = vpack.c.b16 %v1516, %v1515
  %v1676 = vpack.c.b16 %v1518, %v1517
  %v1677 = vpack.c.b16 %v1520, %v1519
  %v1678 = vpack.c.b16 %v1522, %v1521
  %v1679 = vpack.c.b16 %v1524, %v1523
  %v1680 = vpack.c.b16 %v1526, %v1525
  %v1681 = vpack.c.b16 %v1528, %v1527
  %v1682 = vpack.c.b16 %v1530, %v1529
  %v1683 = vpack.c.b16 %v1532, %v1531
  %v1684 = vpack.c.b16 %v1534, %v1533
  %v1685 = vpack.c.b16 %v1536, %v1535
  %v1686 = vpack.c.b16 %v1538, %v1537
  %v1687 = vpack.c.b16 %v1540, %v1539
  %v1688 = vpack.c.b16 %v1542, %v1541
  %v1689 = vpack.c.b16 %v1544, %v1543
  %v1690 = vpack.c.b16 %v1546, %v1545
  %v1691 = vpack.c.b16 %v1548, %v1547
  %v1692 = vpack.c.b16 %v1550, %v1549
  %v1693 = vpack.c.b16 %v1552, %v1551
  %v1694 = vpack.c.b16 %v1554, %v1553
  %v1695 = vpack.c.b16 %v1556, %v1555
  %v1696 = vpack.c.b16 %v1558, %v1557
  %v1697 = vpack.c.b16 %v1560, %v1559
  %v1698 = vpack.c.b16 %v1562, %v1561
  %v1699 = vpack.c.b16 %v1564, %v1563
  %v1700 = vpack.c.b16 %v1566, %v1565
  %v1701 = vpack.c.b16 %v1568, %v1567
  %v1702 = vpack.c.b16 %v1570, %v1569
  %v1703 = vpack.c.b16 %v1572, %v1571
  %v1704 = vpack.c.b16 %v1574, %v1573
  %v1705 = vpack.c.b16 %v1576, %v1575
  %v1706 = vpack.c.b16 %v1578, %v1577
  %v1707 = vpack.c.b16 %v1580, %v1579
  %v1708 = vpack.c.b16 %v1582, %v1581
  %v1709 = vpack.c.b16 %v1584, %v1583
  %v1710 = vpack.c.b16 %v1586, %v1585
  %v1711 = vpack.c.b16 %v1588, %v1587
  %v1712 = vpack.c.b16 %v1590, %v1589
  %v1713 = vpack.c.b16 %v1592, %v1591
  %v1714 = vpack.c.b16 %v1594, %v1593
  %v1715 = vpack.c.b16 %v1596, %v1595
  %v1716 = vpack.c.b16 %v1598, %v1597
  %v1717 = vpack.c.b16 %v1600, %v1599
  %v1718 = vpack.c.b16 %v1602, %v1601
  %v1719 = vpack.c.b16 %v1604, %v1603
  %v1720 = vpack.c.b16 %v1606, %v1605
  %v1721 = vpack.c.b16 %v1608, %v1607
  %v1722 = vpack.c.b16 %v1610, %v1609
  %v1723 = vpack.c.b16 %v1612, %v1611
  %v1724 = vpack.c.b16 %v1614, %v1613
  %v1725 = vpack.c.b16 %v1616, %v1615
  %v1726 = vpack.c.b16 %v1618, %v1617
  %v1727 = vpack.c.b16 %v1620, %v1619
  %v1728 = vpack.c.b16 %v1622, %v1621
  %v1729 = vpack.c.b16 %v1624, %v1623
  %v1730 = vpack.c.b16 %v1626, %v1625
  %v1731 = vpack.c.b16 %v1628, %v1627
  %v1732 = vpack.c.b16 %v1630, %v1629
  %v1733 = vpack.c.b16 %v1632, %v1631
  %v1734 = vpack.c.b16 %v1634, %v1633
  %v1735 = vpack.c.b16 %v1636, %v1635
  %v1736 = vpack.c.b16 %v1638, %v1637
  %v1737 = vpack.c.b16 %v1640, %v1639
  %v1738 = vpack.c.b16 %v1642, %v1641
  %v1739 = vpack.c.b16 %v1644, %v1643
  %v1740 = vpack.c.b16 %v1646, %v1645
  %v1741 = vpack.c.b16 %v1648, %v1647
  %v1742 = vpack.c.b16 %v1650, %v1649
  %v1743 = vpack.c.b16 %v1652, %v1651
  %v1744 = vpack.c.b16 %v1654, %v1653
  %v1745 = vpack.c.b16 %v1656, %v1655
  %v1746 = vpack.c.b16 %v1658, %v1657
  %1835 = vmatprep.subr.bf16.mxu0 0
  %1836 = vmatpush1.bf16.msra.mxu0 %v1659
  %1837 = vmatprep.subr.bf16.mxu0 0
  %1838 = vmatpush1.bf16.msra.mxu0 %v1660
  %1839 = vmatprep.subr.bf16.mxu0 0
  %1840 = vmatpush1.bf16.msra.mxu0 %v1661
  %1841 = vmatprep.subr.bf16.mxu0 0
  %1842 = vmatpush1.bf16.msra.mxu0 %v1662
  %1843 = vmatprep.subr.bf16.mxu0 0
  %1844 = vmatpush1.bf16.msra.mxu0 %v1663
  %1845 = vmatprep.subr.bf16.mxu0 0
  %1846 = vmatpush1.bf16.msra.mxu0 %v1664
  %1847 = vmatprep.subr.bf16.mxu0 0
  %1848 = vmatpush1.bf16.msra.mxu0 %v1665
  %1849 = vmatprep.subr.bf16.mxu0 0
  %1850 = vmatpush1.bf16.msra.mxu0 %v1666
  %1851 = vmatprep.subr.bf16.mxu0 0
  %1852 = vmatpush1.bf16.msra.mxu0 %v1667
  %1853 = vmatprep.subr.bf16.mxu0 0
  %1854 = vmatpush1.bf16.msra.mxu0 %v1668
  %1855 = vmatprep.subr.bf16.mxu0 0
  %1856 = vmatpush1.bf16.msra.mxu0 %v1669
  %1857 = vmatprep.subr.bf16.mxu0 0
  %1858 = vmatpush1.bf16.msra.mxu0 %v1670
  %1859 = vmatprep.subr.bf16.mxu0 0
  %1860 = vmatpush1.bf16.msra.mxu0 %v1671
  %1861 = vmatprep.subr.bf16.mxu0 0
  %1862 = vmatpush1.bf16.msra.mxu0 %v1672
  %1863 = vmatprep.subr.bf16.mxu0 0
  %1864 = vmatpush1.bf16.msra.mxu0 %v1673
  %1865 = vmatprep.subr.bf16.mxu0 0
  %1866 = vmatpush1.bf16.msra.mxu0 %v1674
  %1867 = vmatprep.mubr.bf16.mxu0 %v956
  %1868 = vmatmul.mubr.bf16.gmra.mrb[0].mxu0 %v955
  %v1869 = vpop.f32.mrb[0].mxu0
  %v1870 = vadd.f32 %v409, %v1869
  %v1871 = vpop.f32.mrb[0].mxu0
  %v1872 = vpop.f32.mrb[0].mxu0
  %v1873 = vadd.f32 %v409, %v1872
  %v1874 = vpop.f32.mrb[0].mxu0
  %1875 = vmatprep.mubr.bf16.mxu0 %v967
  %1876 = vmatmul.mubr.bf16.gmra.mrb[0].mxu0 %v966
  %v1877 = vpop.f32.mrb[0].mxu0
  %v1878 = vadd.f32 %v409, %v1877
  %v1879 = vpop.f32.mrb[0].mxu0
  %v1880 = vpop.f32.mrb[0].mxu0
  %v1881 = vadd.f32 %v409, %v1880
  %v1882 = vpop.f32.mrb[0].mxu0
  %1883 = vmatprep.mubr.bf16.mxu0 %v978
  %1884 = vmatmul.mubr.bf16.gmra.mrb[0].mxu0 %v977
  %v1885 = vpop.f32.mrb[0].mxu0
  %v1886 = vadd.f32 %v409, %v1885
  %v1887 = vpop.f32.mrb[0].mxu0
  %v1888 = vpop.f32.mrb[0].mxu0
  %v1889 = vadd.f32 %v409, %v1888
  %v1890 = vpop.f32.mrb[0].mxu0
  %1891 = vmatprep.mubr.bf16.mxu0 %v989
  %1892 = vmatmul.mubr.bf16.gmra.mrb[0].mxu0 %v988
  %v1893 = vpop.f32.mrb[0].mxu0
  %v1894 = vadd.f32 %v409, %v1893
  %v1895 = vpop.f32.mrb[0].mxu0
  %v1896 = vpop.f32.mrb[0].mxu0
  %v1897 = vadd.f32 %v409, %v1896
  %v1898 = vpop.f32.mrb[0].mxu0
  %1899 = vmatprep.mubr.bf16.mxu0 %v1000
  %1900 = vmatmul.mubr.bf16.gmra.mrb[0].mxu0 %v999
  %v1901 = vpop.f32.mrb[0].mxu0
  %v1902 = vadd.f32 %v409, %v1901
  %v1903 = vpop.f32.mrb[0].mxu0
  %v1904 = vpop.f32.mrb[0].mxu0
  %v1905 = vadd.f32 %v409, %v1904
  %v1906 = vpop.f32.mrb[0].mxu0
  %1907 = vmatprep.mubr.bf16.mxu0 %v1011
  %1908 = vmatmul.mubr.bf16.gmra.mrb[0].mxu0 %v1010
  %v1909 = vpop.f32.mrb[0].mxu0
  %v1910 = vadd.f32 %v409, %v1909
  %v1911 = vpop.f32.mrb[0].mxu0
  %v1912 = vpop.f32.mrb[0].mxu0
  %v1913 = vadd.f32 %v409, %v1912
  %v1914 = vpop.f32.mrb[0].mxu0
  %1915 = vmatprep.mubr.bf16.mxu0 %v1022
  %1916 = vmatmul.mubr.bf16.gmra.mrb[0].mxu0 %v1021
  %v1917 = vpop.f32.mrb[0].mxu0
  %v1918 = vadd.f32 %v409, %v1917
  %v1919 = vpop.f32.mrb[0].mxu0
  %v1920 = vpop.f32.mrb[0].mxu0
  %v1921 = vadd.f32 %v409, %v1920
  %v1922 = vpop.f32.mrb[0].mxu0
  %1923 = vmatprep.mubr.bf16.mxu0 %v1033
  %1924 = vmatmul.mubr.bf16.gmra.mrb[0].mxu0 %v1032
  %v1925 = vpop.f32.mrb[0].mxu0
  %v1926 = vadd.f32 %v409, %v1925
  %v1927 = vpop.f32.mrb[0].mxu0
  %v1928 = vpop.f32.mrb[0].mxu0
  %v1929 = vadd.f32 %v409, %v1928
  %v1930 = vpop.f32.mrb[0].mxu0
  %1931 = vmatprep.mubr.bf16.mxu0 %v1044
  %1932 = vmatmul.mubr.bf16.gmra.mrb[0].mxu0 %v1043
  %v1933 = vpop.f32.mrb[0].mxu0
  %v1934 = vadd.f32 %v409, %v1933
  %v1935 = vpop.f32.mrb[0].mxu0
  %v1936 = vpop.f32.mrb[0].mxu0
  %v1937 = vadd.f32 %v409, %v1936
  %v1938 = vpop.f32.mrb[0].mxu0
  %1939 = vmatprep.mubr.bf16.mxu0 %v1055
  %1940 = vmatmul.mubr.bf16.gmra.mrb[0].mxu0 %v1054
  %v1941 = vpop.f32.mrb[0].mxu0
  %v1942 = vadd.f32 %v409, %v1941
  %v1943 = vpop.f32.mrb[0].mxu0
  %v1944 = vpop.f32.mrb[0].mxu0
  %v1945 = vadd.f32 %v409, %v1944
  %v1946 = vpop.f32.mrb[0].mxu0
  %1947 = vmatprep.mubr.bf16.mxu0 %v1066
  %1948 = vmatmul.mubr.bf16.gmra.mrb[0].mxu0 %v1065
  %v1949 = vpop.f32.mrb[0].mxu0
  %v1950 = vadd.f32 %v409, %v1949
  %v1951 = vpop.f32.mrb[0].mxu0
  %v1952 = vpop.f32.mrb[0].mxu0
  %v1953 = vadd.f32 %v409, %v1952
  %v1954 = vpop.f32.mrb[0].mxu0
  %1955 = vmatprep.mubr.bf16.mxu0 %v1077
  %1956 = vmatmul.mubr.bf16.gmra.mrb[0].mxu0 %v1076
  %v1957 = vpop.f32.mrb[0].mxu0
  %v1958 = vadd.f32 %v409, %v1957
  %v1959 = vpop.f32.mrb[0].mxu0
  %v1960 = vpop.f32.mrb[0].mxu0
  %v1961 = vadd.f32 %v409, %v1960
  %v1962 = vpop.f32.mrb[0].mxu0
  %1963 = vmatprep.mubr.bf16.mxu0 %v1088
  %1964 = vmatmul.mubr.bf16.gmra.mrb[0].mxu0 %v1087
  %v1965 = vpop.f32.mrb[0].mxu0
  %v1966 = vadd.f32 %v409, %v1965
  %v1967 = vpop.f32.mrb[0].mxu0
  %v1968 = vpop.f32.mrb[0].mxu0
  %v1969 = vadd.f32 %v409, %v1968
  %v1970 = vpop.f32.mrb[0].mxu0
  %1971 = vmatprep.mubr.bf16.mxu0 %v1099
  %1972 = vmatmul.mubr.bf16.gmra.mrb[0].mxu0 %v1098
  %v1973 = vpop.f32.mrb[0].mxu0
  %v1974 = vadd.f32 %v409, %v1973
  %v1975 = vpop.f32.mrb[0].mxu0
  %v1976 = vpop.f32.mrb[0].mxu0
  %v1977 = vadd.f32 %v409, %v1976
  %v1978 = vpop.f32.mrb[0].mxu0
  %1979 = vmatprep.mubr.bf16.mxu0 %v1110
  %1980 = vmatmul.mubr.bf16.gmra.mrb[0].mxu0 %v1109
  %v1981 = vpop.f32.mrb[0].mxu0
  %v1982 = vadd.f32 %v409, %v1981
  %v1983 = vpop.f32.mrb[0].mxu0
  %v1984 = vpop.f32.mrb[0].mxu0
  %v1985 = vadd.f32 %v409, %v1984
  %v1986 = vpop.f32.mrb[0].mxu0
  %1987 = vmatprep.mubr.bf16.mxu0 %v1121
  %1988 = vmatmul.mubr.bf16.gmra.mrb[0].mxu0 %v1120
  %v1989 = vpop.f32.mrb[0].mxu0
  %v1990 = vadd.f32 %v409, %v1989
  %v1991 = vpop.f32.mrb[0].mxu0
  %v1992 = vpop.f32.mrb[0].mxu0
  %v1993 = vadd.f32 %v409, %v1992
  %v1994 = vpop.f32.mrb[0].mxu0
  %1995 = vdwg.mxu0
  %1996 = vmatprep.subr.bf16.mxu0 0
  %1997 = vmatpush1.bf16.msra.mxu0 %v1675
  %1998 = vmatprep.subr.bf16.mxu0 0
  %1999 = vmatpush1.bf16.msra.mxu0 %v1676
  %2000 = vmatprep.subr.bf16.mxu0 0
  %2001 = vmatpush1.bf16.msra.mxu0 %v1677
  %2002 = vmatprep.subr.bf16.mxu0 0
  %2003 = vmatpush1.bf16.msra.mxu0 %v1678
  %2004 = vmatprep.subr.bf16.mxu0 0
  %2005 = vmatpush1.bf16.msra.mxu0 %v1679
  %2006 = vmatprep.subr.bf16.mxu0 0
  %2007 = vmatpush1.bf16.msra.mxu0 %v1680
  %2008 = vmatprep.subr.bf16.mxu0 0
  %2009 = vmatpush1.bf16.msra.mxu0 %v1681
  %2010 = vmatprep.subr.bf16.mxu0 0
  %2011 = vmatpush1.bf16.msra.mxu0 %v1682
  %2012 = vmatprep.subr.bf16.mxu0 0
  %2013 = vmatpush1.bf16.msra.mxu0 %v1683
  %2014 = vmatprep.subr.bf16.mxu0 0
  %2015 = vmatpush1.bf16.msra.mxu0 %v1684
  %2016 = vmatprep.subr.bf16.mxu0 0
  %2017 = vmatpush1.bf16.msra.mxu0 %v1685
  %2018 = vmatprep.subr.bf16.mxu0 0
  %2019 = vmatpush1.bf16.msra.mxu0 %v1686
  %2020 = vmatprep.subr.bf16.mxu0 0
  %2021 = vmatpush1.bf16.msra.mxu0 %v1687
  %2022 = vmatprep.subr.bf16.mxu0 0
  %2023 = vmatpush1.bf16.msra.mxu0 %v1688
  %2024 = vmatprep.subr.bf16.mxu0 0
  %2025 = vmatpush1.bf16.msra.mxu0 %v1689
  %2026 = vmatprep.subr.bf16.mxu0 0
  %2027 = vmatpush1.bf16.msra.mxu0 %v1690
  %2028 = vmatprep.mubr.bf16.mxu0 %v958
  %2029 = vmatmul.mubr.bf16.gmra.mrb[0].mxu0 %v957
  %v2030 = vpop.f32.mrb[0].mxu0
  %v2031 = vadd.f32 %v1870, %v2030
  %v2032 = vpop.f32.mrb[0].mxu0
  %v2033 = vpop.f32.mrb[0].mxu0
  %v2034 = vadd.f32 %v1873, %v2033
  %v2035 = vpop.f32.mrb[0].mxu0
  %2036 = vmatprep.mubr.bf16.mxu0 %v969
  %2037 = vmatmul.mubr.bf16.gmra.mrb[0].mxu0 %v968
  %v2038 = vpop.f32.mrb[0].mxu0
  %v2039 = vadd.f32 %v1878, %v2038
  %v2040 = vpop.f32.mrb[0].mxu0
  %v2041 = vpop.f32.mrb[0].mxu0
  %v2042 = vadd.f32 %v1881, %v2041
  %v2043 = vpop.f32.mrb[0].mxu0
  %2044 = vmatprep.mubr.bf16.mxu0 %v980
  %2045 = vmatmul.mubr.bf16.gmra.mrb[0].mxu0 %v979
  %v2046 = vpop.f32.mrb[0].mxu0
  %v2047 = vadd.f32 %v1886, %v2046
  %v2048 = vpop.f32.mrb[0].mxu0
  %v2049 = vpop.f32.mrb[0].mxu0
  %v2050 = vadd.f32 %v1889, %v2049
  %v2051 = vpop.f32.mrb[0].mxu0
  %2052 = vmatprep.mubr.bf16.mxu0 %v991
  %2053 = vmatmul.mubr.bf16.gmra.mrb[0].mxu0 %v990
  %v2054 = vpop.f32.mrb[0].mxu0
  %v2055 = vadd.f32 %v1894, %v2054
  %v2056 = vpop.f32.mrb[0].mxu0
  %v2057 = vpop.f32.mrb[0].mxu0
  %v2058 = vadd.f32 %v1897, %v2057
  %v2059 = vpop.f32.mrb[0].mxu0
  %2060 = vmatprep.mubr.bf16.mxu0 %v1002
  %2061 = vmatmul.mubr.bf16.gmra.mrb[0].mxu0 %v1001
  %v2062 = vpop.f32.mrb[0].mxu0
  %v2063 = vadd.f32 %v1902, %v2062
  %v2064 = vpop.f32.mrb[0].mxu0
  %v2065 = vpop.f32.mrb[0].mxu0
  %v2066 = vadd.f32 %v1905, %v2065
  %v2067 = vpop.f32.mrb[0].mxu0
  %2068 = vmatprep.mubr.bf16.mxu0 %v1013
  %2069 = vmatmul.mubr.bf16.gmra.mrb[0].mxu0 %v1012
  %v2070 = vpop.f32.mrb[0].mxu0
  %v2071 = vadd.f32 %v1910, %v2070
  %v2072 = vpop.f32.mrb[0].mxu0
  %v2073 = vpop.f32.mrb[0].mxu0
  %v2074 = vadd.f32 %v1913, %v2073
  %v2075 = vpop.f32.mrb[0].mxu0
  %2076 = vmatprep.mubr.bf16.mxu0 %v1024
  %2077 = vmatmul.mubr.bf16.gmra.mrb[0].mxu0 %v1023
  %v2078 = vpop.f32.mrb[0].mxu0
  %v2079 = vadd.f32 %v1918, %v2078
  %v2080 = vpop.f32.mrb[0].mxu0
  %v2081 = vpop.f32.mrb[0].mxu0
  %v2082 = vadd.f32 %v1921, %v2081
  %v2083 = vpop.f32.mrb[0].mxu0
  %2084 = vmatprep.mubr.bf16.mxu0 %v1035
  %2085 = vmatmul.mubr.bf16.gmra.mrb[0].mxu0 %v1034
  %v2086 = vpop.f32.mrb[0].mxu0
  %v2087 = vadd.f32 %v1926, %v2086
  %v2088 = vpop.f32.mrb[0].mxu0
  %v2089 = vpop.f32.mrb[0].mxu0
  %v2090 = vadd.f32 %v1929, %v2089
  %v2091 = vpop.f32.mrb[0].mxu0
  %2092 = vmatprep.mubr.bf16.mxu0 %v1046
  %2093 = vmatmul.mubr.bf16.gmra.mrb[0].mxu0 %v1045
  %v2094 = vpop.f32.mrb[0].mxu0
  %v2095 = vadd.f32 %v1934, %v2094
  %v2096 = vpop.f32.mrb[0].mxu0
  %v2097 = vpop.f32.mrb[0].mxu0
  %v2098 = vadd.f32 %v1937, %v2097
  %v2099 = vpop.f32.mrb[0].mxu0
  %2100 = vmatprep.mubr.bf16.mxu0 %v1057
  %2101 = vmatmul.mubr.bf16.gmra.mrb[0].mxu0 %v1056
  %v2102 = vpop.f32.mrb[0].mxu0
  %v2103 = vadd.f32 %v1942, %v2102
  %v2104 = vpop.f32.mrb[0].mxu0
  %v2105 = vpop.f32.mrb[0].mxu0
  %v2106 = vadd.f32 %v1945, %v2105
  %v2107 = vpop.f32.mrb[0].mxu0
  %2108 = vmatprep.mubr.bf16.mxu0 %v1068
  %2109 = vmatmul.mubr.bf16.gmra.mrb[0].mxu0 %v1067
  %v2110 = vpop.f32.mrb[0].mxu0
  %v2111 = vadd.f32 %v1950, %v2110
  %v2112 = vpop.f32.mrb[0].mxu0
  %v2113 = vpop.f32.mrb[0].mxu0
  %v2114 = vadd.f32 %v1953, %v2113
  %v2115 = vpop.f32.mrb[0].mxu0
  %2116 = vmatprep.mubr.bf16.mxu0 %v1079
  %2117 = vmatmul.mubr.bf16.gmra.mrb[0].mxu0 %v1078
  %v2118 = vpop.f32.mrb[0].mxu0
  %v2119 = vadd.f32 %v1958, %v2118
  %v2120 = vpop.f32.mrb[0].mxu0
  %v2121 = vpop.f32.mrb[0].mxu0
  %v2122 = vadd.f32 %v1961, %v2121
  %v2123 = vpop.f32.mrb[0].mxu0
  %2124 = vmatprep.mubr.bf16.mxu0 %v1090
  %2125 = vmatmul.mubr.bf16.gmra.mrb[0].mxu0 %v1089
  %v2126 = vpop.f32.mrb[0].mxu0
  %v2127 = vadd.f32 %v1966, %v2126
  %v2128 = vpop.f32.mrb[0].mxu0
  %v2129 = vpop.f32.mrb[0].mxu0
  %v2130 = vadd.f32 %v1969, %v2129
  %v2131 = vpop.f32.mrb[0].mxu0
  %2132 = vmatprep.mubr.bf16.mxu0 %v1101
  %2133 = vmatmul.mubr.bf16.gmra.mrb[0].mxu0 %v1100
  %v2134 = vpop.f32.mrb[0].mxu0
  %v2135 = vadd.f32 %v1974, %v2134
  %v2136 = vpop.f32.mrb[0].mxu0
  %v2137 = vpop.f32.mrb[0].mxu0
  %v2138 = vadd.f32 %v1977, %v2137
  %v2139 = vpop.f32.mrb[0].mxu0
  %2140 = vmatprep.mubr.bf16.mxu0 %v1112
  %2141 = vmatmul.mubr.bf16.gmra.mrb[0].mxu0 %v1111
  %v2142 = vpop.f32.mrb[0].mxu0
  %v2143 = vadd.f32 %v1982, %v2142
  %v2144 = vpop.f32.mrb[0].mxu0
  %v2145 = vpop.f32.mrb[0].mxu0
  %v2146 = vadd.f32 %v1985, %v2145
  %v2147 = vpop.f32.mrb[0].mxu0
  %2148 = vmatprep.mubr.bf16.mxu0 %v1123
  %2149 = vmatmul.mubr.bf16.gmra.mrb[0].mxu0 %v1122
  %v2150 = vpop.f32.mrb[0].mxu0
  %v2151 = vadd.f32 %v1990, %v2150
  %v2152 = vpop.f32.mrb[0].mxu0
  %v2153 = vpop.f32.mrb[0].mxu0
  %v2154 = vadd.f32 %v1993, %v2153
  %v2155 = vpop.f32.mrb[0].mxu0
  %2156 = vdwg.mxu0
  %2157 = vmatprep.subr.bf16.mxu0 0
  %2158 = vmatpush1.bf16.msra.mxu0 %v1691
  %2159 = vmatprep.subr.bf16.mxu0 0
  %2160 = vmatpush1.bf16.msra.mxu0 %v1692
  %2161 = vmatprep.subr.bf16.mxu0 0
  %2162 = vmatpush1.bf16.msra.mxu0 %v1693
  %2163 = vmatprep.subr.bf16.mxu0 0
  %2164 = vmatpush1.bf16.msra.mxu0 %v1694
  %2165 = vmatprep.subr.bf16.mxu0 0
  %2166 = vmatpush1.bf16.msra.mxu0 %v1695
  %2167 = vmatprep.subr.bf16.mxu0 0
  %2168 = vmatpush1.bf16.msra.mxu0 %v1696
  %2169 = vmatprep.subr.bf16.mxu0 0
  %2170 = vmatpush1.bf16.msra.mxu0 %v1697
  %2171 = vmatprep.subr.bf16.mxu0 0
  %2172 = vmatpush1.bf16.msra.mxu0 %v1698
  %2173 = vmatprep.subr.bf16.mxu0 0
  %2174 = vmatpush1.bf16.msra.mxu0 %v1699
  %2175 = vmatprep.subr.bf16.mxu0 0
  %2176 = vmatpush1.bf16.msra.mxu0 %v1700
  %2177 = vmatprep.subr.bf16.mxu0 0
  %2178 = vmatpush1.bf16.msra.mxu0 %v1701
  %2179 = vmatprep.subr.bf16.mxu0 0
  %2180 = vmatpush1.bf16.msra.mxu0 %v1702
  %2181 = vmatprep.subr.bf16.mxu0 0
  %2182 = vmatpush1.bf16.msra.mxu0 %v1703
  %2183 = vmatprep.subr.bf16.mxu0 0
  %2184 = vmatpush1.bf16.msra.mxu0 %v1704
  %2185 = vmatprep.subr.bf16.mxu0 0
  %2186 = vmatpush1.bf16.msra.mxu0 %v1705
  %2187 = vmatprep.subr.bf16.mxu0 0
  %2188 = vmatpush1.bf16.msra.mxu0 %v1706
  %2189 = vmatprep.mubr.bf16.mxu0 %v960
  %2190 = vmatmul.mubr.bf16.gmra.mrb[0].mxu0 %v959
  %v2191 = vpop.f32.mrb[0].mxu0
  %v2192 = vadd.f32 %v2031, %v2191
  %v2193 = vpop.f32.mrb[0].mxu0
  %v2194 = vpop.f32.mrb[0].mxu0
  %v2195 = vadd.f32 %v2034, %v2194
  %v2196 = vpop.f32.mrb[0].mxu0
  %2197 = vmatprep.mubr.bf16.mxu0 %v971
  %2198 = vmatmul.mubr.bf16.gmra.mrb[0].mxu0 %v970
  %v2199 = vpop.f32.mrb[0].mxu0
  %v2200 = vadd.f32 %v2039, %v2199
  %v2201 = vpop.f32.mrb[0].mxu0
  %v2202 = vpop.f32.mrb[0].mxu0
  %v2203 = vadd.f32 %v2042, %v2202
  %v2204 = vpop.f32.mrb[0].mxu0
  %2205 = vmatprep.mubr.bf16.mxu0 %v982
  %2206 = vmatmul.mubr.bf16.gmra.mrb[0].mxu0 %v981
  %v2207 = vpop.f32.mrb[0].mxu0
  %v2208 = vadd.f32 %v2047, %v2207
  %v2209 = vpop.f32.mrb[0].mxu0
  %v2210 = vpop.f32.mrb[0].mxu0
  %v2211 = vadd.f32 %v2050, %v2210
  %v2212 = vpop.f32.mrb[0].mxu0
  %2213 = vmatprep.mubr.bf16.mxu0 %v993
  %2214 = vmatmul.mubr.bf16.gmra.mrb[0].mxu0 %v992
  %v2215 = vpop.f32.mrb[0].mxu0
  %v2216 = vadd.f32 %v2055, %v2215
  %v2217 = vpop.f32.mrb[0].mxu0
  %v2218 = vpop.f32.mrb[0].mxu0
  %v2219 = vadd.f32 %v2058, %v2218
  %v2220 = vpop.f32.mrb[0].mxu0
  %2221 = vmatprep.mubr.bf16.mxu0 %v1004
  %2222 = vmatmul.mubr.bf16.gmra.mrb[0].mxu0 %v1003
  %v2223 = vpop.f32.mrb[0].mxu0
  %v2224 = vadd.f32 %v2063, %v2223
  %v2225 = vpop.f32.mrb[0].mxu0
  %v2226 = vpop.f32.mrb[0].mxu0
  %v2227 = vadd.f32 %v2066, %v2226
  %v2228 = vpop.f32.mrb[0].mxu0
  %2229 = vmatprep.mubr.bf16.mxu0 %v1015
  %2230 = vmatmul.mubr.bf16.gmra.mrb[0].mxu0 %v1014
  %v2231 = vpop.f32.mrb[0].mxu0
  %v2232 = vadd.f32 %v2071, %v2231
  %v2233 = vpop.f32.mrb[0].mxu0
  %v2234 = vpop.f32.mrb[0].mxu0
  %v2235 = vadd.f32 %v2074, %v2234
  %v2236 = vpop.f32.mrb[0].mxu0
  %2237 = vmatprep.mubr.bf16.mxu0 %v1026
  %2238 = vmatmul.mubr.bf16.gmra.mrb[0].mxu0 %v1025
  %v2239 = vpop.f32.mrb[0].mxu0
  %v2240 = vadd.f32 %v2079, %v2239
  %v2241 = vpop.f32.mrb[0].mxu0
  %v2242 = vpop.f32.mrb[0].mxu0
  %v2243 = vadd.f32 %v2082, %v2242
  %v2244 = vpop.f32.mrb[0].mxu0
  %2245 = vmatprep.mubr.bf16.mxu0 %v1037
  %2246 = vmatmul.mubr.bf16.gmra.mrb[0].mxu0 %v1036
  %v2247 = vpop.f32.mrb[0].mxu0
  %v2248 = vadd.f32 %v2087, %v2247
  %v2249 = vpop.f32.mrb[0].mxu0
  %v2250 = vpop.f32.mrb[0].mxu0
  %v2251 = vadd.f32 %v2090, %v2250
  %v2252 = vpop.f32.mrb[0].mxu0
  %2253 = vmatprep.mubr.bf16.mxu0 %v1048
  %2254 = vmatmul.mubr.bf16.gmra.mrb[0].mxu0 %v1047
  %v2255 = vpop.f32.mrb[0].mxu0
  %v2256 = vadd.f32 %v2095, %v2255
  %v2257 = vpop.f32.mrb[0].mxu0
  %v2258 = vpop.f32.mrb[0].mxu0
  %v2259 = vadd.f32 %v2098, %v2258
  %v2260 = vpop.f32.mrb[0].mxu0
  %2261 = vmatprep.mubr.bf16.mxu0 %v1059
  %2262 = vmatmul.mubr.bf16.gmra.mrb[0].mxu0 %v1058
  %v2263 = vpop.f32.mrb[0].mxu0
  %v2264 = vadd.f32 %v2103, %v2263
  %v2265 = vpop.f32.mrb[0].mxu0
  %v2266 = vpop.f32.mrb[0].mxu0
  %v2267 = vadd.f32 %v2106, %v2266
  %v2268 = vpop.f32.mrb[0].mxu0
  %2269 = vmatprep.mubr.bf16.mxu0 %v1070
  %2270 = vmatmul.mubr.bf16.gmra.mrb[0].mxu0 %v1069
  %v2271 = vpop.f32.mrb[0].mxu0
  %v2272 = vadd.f32 %v2111, %v2271
  %v2273 = vpop.f32.mrb[0].mxu0
  %v2274 = vpop.f32.mrb[0].mxu0
  %v2275 = vadd.f32 %v2114, %v2274
  %v2276 = vpop.f32.mrb[0].mxu0
  %2277 = vmatprep.mubr.bf16.mxu0 %v1081
  %2278 = vmatmul.mubr.bf16.gmra.mrb[0].mxu0 %v1080
  %v2279 = vpop.f32.mrb[0].mxu0
  %v2280 = vadd.f32 %v2119, %v2279
  %v2281 = vpop.f32.mrb[0].mxu0
  %v2282 = vpop.f32.mrb[0].mxu0
  %v2283 = vadd.f32 %v2122, %v2282
  %v2284 = vpop.f32.mrb[0].mxu0
  %2285 = vmatprep.mubr.bf16.mxu0 %v1092
  %2286 = vmatmul.mubr.bf16.gmra.mrb[0].mxu0 %v1091
  %v2287 = vpop.f32.mrb[0].mxu0
  %v2288 = vadd.f32 %v2127, %v2287
  %v2289 = vpop.f32.mrb[0].mxu0
  %v2290 = vpop.f32.mrb[0].mxu0
  %v2291 = vadd.f32 %v2130, %v2290
  %v2292 = vpop.f32.mrb[0].mxu0
  %2293 = vmatprep.mubr.bf16.mxu0 %v1103
  %2294 = vmatmul.mubr.bf16.gmra.mrb[0].mxu0 %v1102
  %v2295 = vpop.f32.mrb[0].mxu0
  %v2296 = vadd.f32 %v2135, %v2295
  %v2297 = vpop.f32.mrb[0].mxu0
  %v2298 = vpop.f32.mrb[0].mxu0
  %v2299 = vadd.f32 %v2138, %v2298
  %v2300 = vpop.f32.mrb[0].mxu0
  %2301 = vmatprep.mubr.bf16.mxu0 %v1114
  %2302 = vmatmul.mubr.bf16.gmra.mrb[0].mxu0 %v1113
  %v2303 = vpop.f32.mrb[0].mxu0
  %v2304 = vadd.f32 %v2143, %v2303
  %v2305 = vpop.f32.mrb[0].mxu0
  %v2306 = vpop.f32.mrb[0].mxu0
  %v2307 = vadd.f32 %v2146, %v2306
  %v2308 = vpop.f32.mrb[0].mxu0
  %2309 = vmatprep.mubr.bf16.mxu0 %v1125
  %2310 = vmatmul.mubr.bf16.gmra.mrb[0].mxu0 %v1124
  %v2311 = vpop.f32.mrb[0].mxu0
  %v2312 = vadd.f32 %v2151, %v2311
  %v2313 = vpop.f32.mrb[0].mxu0
  %v2314 = vpop.f32.mrb[0].mxu0
  %v2315 = vadd.f32 %v2154, %v2314
  %v2316 = vpop.f32.mrb[0].mxu0
  %2317 = vdwg.mxu0
  %2318 = vmatprep.subr.bf16.mxu0 0
  %2319 = vmatpush1.bf16.msra.mxu0 %v1707
  %2320 = vmatprep.subr.bf16.mxu0 0
  %2321 = vmatpush1.bf16.msra.mxu0 %v1708
  %2322 = vmatprep.subr.bf16.mxu0 0
  %2323 = vmatpush1.bf16.msra.mxu0 %v1709
  %2324 = vmatprep.subr.bf16.mxu0 0
  %2325 = vmatpush1.bf16.msra.mxu0 %v1710
  %2326 = vmatprep.subr.bf16.mxu0 0
  %2327 = vmatpush1.bf16.msra.mxu0 %v1711
  %2328 = vmatprep.subr.bf16.mxu0 0
  %2329 = vmatpush1.bf16.msra.mxu0 %v1712
  %2330 = vmatprep.subr.bf16.mxu0 0
  %2331 = vmatpush1.bf16.msra.mxu0 %v1713
  %2332 = vmatprep.subr.bf16.mxu0 0
  %2333 = vmatpush1.bf16.msra.mxu0 %v1714
  %2334 = vmatprep.subr.bf16.mxu0 0
  %2335 = vmatpush1.bf16.msra.mxu0 %v1715
  %2336 = vmatprep.subr.bf16.mxu0 0
  %2337 = vmatpush1.bf16.msra.mxu0 %v1716
  %2338 = vmatprep.subr.bf16.mxu0 0
  %2339 = vmatpush1.bf16.msra.mxu0 %v1717
  %2340 = vmatprep.subr.bf16.mxu0 0
  %2341 = vmatpush1.bf16.msra.mxu0 %v1718
  %2342 = vmatprep.subr.bf16.mxu0 0
  %2343 = vmatpush1.bf16.msra.mxu0 %v1719
  %2344 = vmatprep.subr.bf16.mxu0 0
  %2345 = vmatpush1.bf16.msra.mxu0 %v1720
  %2346 = vmatprep.subr.bf16.mxu0 0
  %2347 = vmatpush1.bf16.msra.mxu0 %v1721
  %2348 = vmatprep.subr.bf16.mxu0 0
  %2349 = vmatpush1.bf16.msra.mxu0 %v1722
  %2350 = vmatprep.mubr.bf16.mxu0 %v962
  %2351 = vmatmul.mubr.bf16.gmra.mrb[0].mxu0 %v961
  %v2352 = vpop.f32.mrb[0].mxu0
  %v2353 = vadd.f32 %v2192, %v2352
  %v2354 = vpop.f32.mrb[0].mxu0
  %v2355 = vpop.f32.mrb[0].mxu0
  %v2356 = vadd.f32 %v2195, %v2355
  %v2357 = vpop.f32.mrb[0].mxu0
  %2358 = vmatprep.mubr.bf16.mxu0 %v973
  %2359 = vmatmul.mubr.bf16.gmra.mrb[0].mxu0 %v972
  %v2360 = vpop.f32.mrb[0].mxu0
  %v2361 = vadd.f32 %v2200, %v2360
  %v2362 = vpop.f32.mrb[0].mxu0
  %v2363 = vpop.f32.mrb[0].mxu0
  %v2364 = vadd.f32 %v2203, %v2363
  %v2365 = vpop.f32.mrb[0].mxu0
  %2366 = vmatprep.mubr.bf16.mxu0 %v984
  %2367 = vmatmul.mubr.bf16.gmra.mrb[0].mxu0 %v983
  %v2368 = vpop.f32.mrb[0].mxu0
  %v2369 = vadd.f32 %v2208, %v2368
  %v2370 = vpop.f32.mrb[0].mxu0
  %v2371 = vpop.f32.mrb[0].mxu0
  %v2372 = vadd.f32 %v2211, %v2371
  %v2373 = vpop.f32.mrb[0].mxu0
  %2374 = vmatprep.mubr.bf16.mxu0 %v995
  %2375 = vmatmul.mubr.bf16.gmra.mrb[0].mxu0 %v994
  %v2376 = vpop.f32.mrb[0].mxu0
  %v2377 = vadd.f32 %v2216, %v2376
  %v2378 = vpop.f32.mrb[0].mxu0
  %v2379 = vpop.f32.mrb[0].mxu0
  %v2380 = vadd.f32 %v2219, %v2379
  %v2381 = vpop.f32.mrb[0].mxu0
  %2382 = vmatprep.mubr.bf16.mxu0 %v1006
  %2383 = vmatmul.mubr.bf16.gmra.mrb[0].mxu0 %v1005
  %v2384 = vpop.f32.mrb[0].mxu0
  %v2385 = vadd.f32 %v2224, %v2384
  %v2386 = vpop.f32.mrb[0].mxu0
  %v2387 = vpop.f32.mrb[0].mxu0
  %v2388 = vadd.f32 %v2227, %v2387
  %v2389 = vpop.f32.mrb[0].mxu0
  %2390 = vmatprep.mubr.bf16.mxu0 %v1017
  %2391 = vmatmul.mubr.bf16.gmra.mrb[0].mxu0 %v1016
  %v2392 = vpop.f32.mrb[0].mxu0
  %v2393 = vadd.f32 %v2232, %v2392
  %v2394 = vpop.f32.mrb[0].mxu0
  %v2395 = vpop.f32.mrb[0].mxu0
  %v2396 = vadd.f32 %v2235, %v2395
  %v2397 = vpop.f32.mrb[0].mxu0
  %2398 = vmatprep.mubr.bf16.mxu0 %v1028
  %2399 = vmatmul.mubr.bf16.gmra.mrb[0].mxu0 %v1027
  %v2400 = vpop.f32.mrb[0].mxu0
  %v2401 = vadd.f32 %v2240, %v2400
  %v2402 = vpop.f32.mrb[0].mxu0
  %v2403 = vpop.f32.mrb[0].mxu0
  %v2404 = vadd.f32 %v2243, %v2403
  %v2405 = vpop.f32.mrb[0].mxu0
  %2406 = vmatprep.mubr.bf16.mxu0 %v1039
  %2407 = vmatmul.mubr.bf16.gmra.mrb[0].mxu0 %v1038
  %v2408 = vpop.f32.mrb[0].mxu0
  %v2409 = vadd.f32 %v2248, %v2408
  %v2410 = vpop.f32.mrb[0].mxu0
  %v2411 = vpop.f32.mrb[0].mxu0
  %v2412 = vadd.f32 %v2251, %v2411
  %v2413 = vpop.f32.mrb[0].mxu0
  %2414 = vmatprep.mubr.bf16.mxu0 %v1050
  %2415 = vmatmul.mubr.bf16.gmra.mrb[0].mxu0 %v1049
  %v2416 = vpop.f32.mrb[0].mxu0
  %v2417 = vadd.f32 %v2256, %v2416
  %v2418 = vpop.f32.mrb[0].mxu0
  %v2419 = vpop.f32.mrb[0].mxu0
  %v2420 = vadd.f32 %v2259, %v2419
  %v2421 = vpop.f32.mrb[0].mxu0
  %2422 = vmatprep.mubr.bf16.mxu0 %v1061
  %2423 = vmatmul.mubr.bf16.gmra.mrb[0].mxu0 %v1060
  %v2424 = vpop.f32.mrb[0].mxu0
  %v2425 = vadd.f32 %v2264, %v2424
  %v2426 = vpop.f32.mrb[0].mxu0
  %v2427 = vpop.f32.mrb[0].mxu0
  %v2428 = vadd.f32 %v2267, %v2427
  %v2429 = vpop.f32.mrb[0].mxu0
  %2430 = vmatprep.mubr.bf16.mxu0 %v1072
  %2431 = vmatmul.mubr.bf16.gmra.mrb[0].mxu0 %v1071
  %v2432 = vpop.f32.mrb[0].mxu0
  %v2433 = vadd.f32 %v2272, %v2432
  %v2434 = vpop.f32.mrb[0].mxu0
  %v2435 = vpop.f32.mrb[0].mxu0
  %v2436 = vadd.f32 %v2275, %v2435
  %v2437 = vpop.f32.mrb[0].mxu0
  %2438 = vmatprep.mubr.bf16.mxu0 %v1083
  %2439 = vmatmul.mubr.bf16.gmra.mrb[0].mxu0 %v1082
  %v2440 = vpop.f32.mrb[0].mxu0
  %v2441 = vadd.f32 %v2280, %v2440
  %v2442 = vpop.f32.mrb[0].mxu0
  %v2443 = vpop.f32.mrb[0].mxu0
  %v2444 = vadd.f32 %v2283, %v2443
  %v2445 = vpop.f32.mrb[0].mxu0
  %2446 = vmatprep.mubr.bf16.mxu0 %v1094
  %2447 = vmatmul.mubr.bf16.gmra.mrb[0].mxu0 %v1093
  %v2448 = vpop.f32.mrb[0].mxu0
  %v2449 = vadd.f32 %v2288, %v2448
  %v2450 = vpop.f32.mrb[0].mxu0
  %v2451 = vpop.f32.mrb[0].mxu0
  %v2452 = vadd.f32 %v2291, %v2451
  %v2453 = vpop.f32.mrb[0].mxu0
  %2454 = vmatprep.mubr.bf16.mxu0 %v1105
  %2455 = vmatmul.mubr.bf16.gmra.mrb[0].mxu0 %v1104
  %v2456 = vpop.f32.mrb[0].mxu0
  %v2457 = vadd.f32 %v2296, %v2456
  %v2458 = vpop.f32.mrb[0].mxu0
  %v2459 = vpop.f32.mrb[0].mxu0
  %v2460 = vadd.f32 %v2299, %v2459
  %v2461 = vpop.f32.mrb[0].mxu0
  %2462 = vmatprep.mubr.bf16.mxu0 %v1116
  %2463 = vmatmul.mubr.bf16.gmra.mrb[0].mxu0 %v1115
  %v2464 = vpop.f32.mrb[0].mxu0
  %v2465 = vadd.f32 %v2304, %v2464
  %v2466 = vpop.f32.mrb[0].mxu0
  %v2467 = vpop.f32.mrb[0].mxu0
  %v2468 = vadd.f32 %v2307, %v2467
  %v2469 = vpop.f32.mrb[0].mxu0
  %2470 = vmatprep.mubr.bf16.mxu0 %v1127
  %2471 = vmatmul.mubr.bf16.gmra.mrb[0].mxu0 %v1126
  %v2472 = vpop.f32.mrb[0].mxu0
  %v2473 = vadd.f32 %v2312, %v2472
  %v2474 = vpop.f32.mrb[0].mxu0
  %v2475 = vpop.f32.mrb[0].mxu0
  %v2476 = vadd.f32 %v2315, %v2475
  %v2477 = vpop.f32.mrb[0].mxu0
  %2478 = vdwg.mxu0
  %2479 = vmatprep.subr.bf16.mxu0 0
  %2480 = vmatpush1.bf16.msra.mxu0 %v1723
  %2481 = vmatprep.subr.bf16.mxu0 0
  %2482 = vmatpush1.bf16.msra.mxu0 %v1724
  %2483 = vmatprep.subr.bf16.mxu0 0
  %2484 = vmatpush1.bf16.msra.mxu0 %v1725
  %2485 = vmatprep.subr.bf16.mxu0 0
  %2486 = vmatpush1.bf16.msra.mxu0 %v1726
  %2487 = vmatprep.subr.bf16.mxu0 0
  %2488 = vmatpush1.bf16.msra.mxu0 %v1727
  %2489 = vmatprep.subr.bf16.mxu0 0
  %2490 = vmatpush1.bf16.msra.mxu0 %v1728
  %2491 = vmatprep.subr.bf16.mxu0 0
  %2492 = vmatpush1.bf16.msra.mxu0 %v1729
  %2493 = vmatprep.subr.bf16.mxu0 0
  %2494 = vmatpush1.bf16.msra.mxu0 %v1730
  %2495 = vmatprep.subr.bf16.mxu0 0
  %2496 = vmatpush1.bf16.msra.mxu0 %v1731
  %2497 = vmatprep.subr.bf16.mxu0 0
  %2498 = vmatpush1.bf16.msra.mxu0 %v1732
  %2499 = vmatprep.subr.bf16.mxu0 0
  %2500 = vmatpush1.bf16.msra.mxu0 %v1733
  %2501 = vmatprep.subr.bf16.mxu0 0
  %2502 = vmatpush1.bf16.msra.mxu0 %v1734
  %2503 = vmatprep.subr.bf16.mxu0 0
  %2504 = vmatpush1.bf16.msra.mxu0 %v1735
  %2505 = vmatprep.subr.bf16.mxu0 0
  %2506 = vmatpush1.bf16.msra.mxu0 %v1736
  %2507 = vmatprep.subr.bf16.mxu0 0
  %2508 = vmatpush1.bf16.msra.mxu0 %v1737
  %2509 = vmatprep.subr.bf16.mxu0 0
  %2510 = vmatpush1.bf16.msra.mxu0 %v1738
  %2511 = vmatprep.mubr.bf16.mxu0 %v964
  %2512 = vmatmul.mubr.bf16.gmra.mrb[0].mxu0 %v963
  %v2513 = vpop.f32.mrb[0].mxu0
  %v2514 = vadd.f32 %v2353, %v2513
  %v2515 = vpop.f32.mrb[0].mxu0
  %v2516 = vpop.f32.mrb[0].mxu0
  %v2517 = vadd.f32 %v2356, %v2516
  %v2518 = vpop.f32.mrb[0].mxu0
  %2519 = vmatprep.mubr.bf16.mxu0 %v975
  %2520 = vmatmul.mubr.bf16.gmra.mrb[0].mxu0 %v974
  %v2521 = vpop.f32.mrb[0].mxu0
  %v2522 = vadd.f32 %v2361, %v2521
  %v2523 = vpop.f32.mrb[0].mxu0
  %v2524 = vpop.f32.mrb[0].mxu0
  %v2525 = vadd.f32 %v2364, %v2524
  %v2526 = vpop.f32.mrb[0].mxu0
  %2527 = vmatprep.mubr.bf16.mxu0 %v986
  %2528 = vmatmul.mubr.bf16.gmra.mrb[0].mxu0 %v985
  %v2529 = vpop.f32.mrb[0].mxu0
  %v2530 = vadd.f32 %v2369, %v2529
  %v2531 = vpop.f32.mrb[0].mxu0
  %v2532 = vpop.f32.mrb[0].mxu0
  %v2533 = vadd.f32 %v2372, %v2532
  %v2534 = vpop.f32.mrb[0].mxu0
  %2535 = vmatprep.mubr.bf16.mxu0 %v997
  %2536 = vmatmul.mubr.bf16.gmra.mrb[0].mxu0 %v996
  %v2537 = vpop.f32.mrb[0].mxu0
  %v2538 = vadd.f32 %v2377, %v2537
  %v2539 = vpop.f32.mrb[0].mxu0
  %v2540 = vpop.f32.mrb[0].mxu0
  %v2541 = vadd.f32 %v2380, %v2540
  %v2542 = vpop.f32.mrb[0].mxu0
  %2543 = vmatprep.mubr.bf16.mxu0 %v1008
  %2544 = vmatmul.mubr.bf16.gmra.mrb[0].mxu0 %v1007
  %v2545 = vpop.f32.mrb[0].mxu0
  %v2546 = vadd.f32 %v2385, %v2545
  %v2547 = vpop.f32.mrb[0].mxu0
  %v2548 = vpop.f32.mrb[0].mxu0
  %v2549 = vadd.f32 %v2388, %v2548
  %v2550 = vpop.f32.mrb[0].mxu0
  %2551 = vmatprep.mubr.bf16.mxu0 %v1019
  %2552 = vmatmul.mubr.bf16.gmra.mrb[0].mxu0 %v1018
  %v2553 = vpop.f32.mrb[0].mxu0
  %v2554 = vadd.f32 %v2393, %v2553
  %v2555 = vpop.f32.mrb[0].mxu0
  %v2556 = vpop.f32.mrb[0].mxu0
  %v2557 = vadd.f32 %v2396, %v2556
  %v2558 = vpop.f32.mrb[0].mxu0
  %2559 = vmatprep.mubr.bf16.mxu0 %v1030
  %2560 = vmatmul.mubr.bf16.gmra.mrb[0].mxu0 %v1029
  %v2561 = vpop.f32.mrb[0].mxu0
  %v2562 = vadd.f32 %v2401, %v2561
  %v2563 = vpop.f32.mrb[0].mxu0
  %v2564 = vpop.f32.mrb[0].mxu0
  %v2565 = vadd.f32 %v2404, %v2564
  %v2566 = vpop.f32.mrb[0].mxu0
  %2567 = vmatprep.mubr.bf16.mxu0 %v1041
  %2568 = vmatmul.mubr.bf16.gmra.mrb[0].mxu0 %v1040
  %v2569 = vpop.f32.mrb[0].mxu0
  %v2570 = vadd.f32 %v2409, %v2569
  %v2571 = vpop.f32.mrb[0].mxu0
  %v2572 = vpop.f32.mrb[0].mxu0
  %v2573 = vadd.f32 %v2412, %v2572
  %v2574 = vpop.f32.mrb[0].mxu0
  %2575 = vmatprep.mubr.bf16.mxu0 %v1052
  %2576 = vmatmul.mubr.bf16.gmra.mrb[0].mxu0 %v1051
  %v2577 = vpop.f32.mrb[0].mxu0
  %v2578 = vadd.f32 %v2417, %v2577
  %v2579 = vpop.f32.mrb[0].mxu0
  %v2580 = vpop.f32.mrb[0].mxu0
  %v2581 = vadd.f32 %v2420, %v2580
  %v2582 = vpop.f32.mrb[0].mxu0
  %2583 = vmatprep.mubr.bf16.mxu0 %v1063
  %2584 = vmatmul.mubr.bf16.gmra.mrb[0].mxu0 %v1062
  %v2585 = vpop.f32.mrb[0].mxu0
  %v2586 = vadd.f32 %v2425, %v2585
  %v2587 = vpop.f32.mrb[0].mxu0
  %v2588 = vpop.f32.mrb[0].mxu0
  %v2589 = vadd.f32 %v2428, %v2588
  %v2590 = vpop.f32.mrb[0].mxu0
  %2591 = vmatprep.mubr.bf16.mxu0 %v1074
  %2592 = vmatmul.mubr.bf16.gmra.mrb[0].mxu0 %v1073
  %v2593 = vpop.f32.mrb[0].mxu0
  %v2594 = vadd.f32 %v2433, %v2593
  %v2595 = vpop.f32.mrb[0].mxu0
  %v2596 = vpop.f32.mrb[0].mxu0
  %v2597 = vadd.f32 %v2436, %v2596
  %v2598 = vpop.f32.mrb[0].mxu0
  %2599 = vmatprep.mubr.bf16.mxu0 %v1085
  %2600 = vmatmul.mubr.bf16.gmra.mrb[0].mxu0 %v1084
  %v2601 = vpop.f32.mrb[0].mxu0
  %v2602 = vadd.f32 %v2441, %v2601
  %v2603 = vpop.f32.mrb[0].mxu0
  %v2604 = vpop.f32.mrb[0].mxu0
  %v2605 = vadd.f32 %v2444, %v2604
  %v2606 = vpop.f32.mrb[0].mxu0
  %2607 = vmatprep.mubr.bf16.mxu0 %v1096
  %2608 = vmatmul.mubr.bf16.gmra.mrb[0].mxu0 %v1095
  %v2609 = vpop.f32.mrb[0].mxu0
  %v2610 = vadd.f32 %v2449, %v2609
  %v2611 = vpop.f32.mrb[0].mxu0
  %v2612 = vpop.f32.mrb[0].mxu0
  %v2613 = vadd.f32 %v2452, %v2612
  %v2614 = vpop.f32.mrb[0].mxu0
  %2615 = vmatprep.mubr.bf16.mxu0 %v1107
  %2616 = vmatmul.mubr.bf16.gmra.mrb[0].mxu0 %v1106
  %v2617 = vpop.f32.mrb[0].mxu0
  %v2618 = vadd.f32 %v2457, %v2617
  %v2619 = vpop.f32.mrb[0].mxu0
  %v2620 = vpop.f32.mrb[0].mxu0
  %v2621 = vadd.f32 %v2460, %v2620
  %v2622 = vpop.f32.mrb[0].mxu0
  %2623 = vmatprep.mubr.bf16.mxu0 %v1118
  %2624 = vmatmul.mubr.bf16.gmra.mrb[0].mxu0 %v1117
  %v2625 = vpop.f32.mrb[0].mxu0
  %v2626 = vadd.f32 %v2465, %v2625
  %v2627 = vpop.f32.mrb[0].mxu0
  %v2628 = vpop.f32.mrb[0].mxu0
  %v2629 = vadd.f32 %v2468, %v2628
  %v2630 = vpop.f32.mrb[0].mxu0
  %2631 = vmatprep.mubr.bf16.mxu0 %v1129
  %2632 = vmatmul.mubr.bf16.gmra.mrb[0].mxu0 %v1128
  %v2633 = vpop.f32.mrb[0].mxu0
  %v2634 = vadd.f32 %v2473, %v2633
  %v2635 = vpop.f32.mrb[0].mxu0
  %v2636 = vpop.f32.mrb[0].mxu0
  %v2637 = vadd.f32 %v2476, %v2636
  %v2638 = vpop.f32.mrb[0].mxu0
  %2639 = vdwg.mxu0
  %2640 = vmatprep.subr.bf16.mxu0 0
  %2641 = vmatpush1.bf16.msra.mxu0 %v1739
  %2642 = vmatprep.subr.bf16.mxu0 0
  %2643 = vmatpush1.bf16.msra.mxu0 %v1740
  %2644 = vmatprep.subr.bf16.mxu0 0
  %2645 = vmatpush1.bf16.msra.mxu0 %v1741
  %2646 = vmatprep.subr.bf16.mxu0 0
  %2647 = vmatpush1.bf16.msra.mxu0 %v1742
  %2648 = vmatprep.subr.bf16.mxu0 0
  %2649 = vmatpush1.bf16.msra.mxu0 %v1743
  %2650 = vmatprep.subr.bf16.mxu0 0
  %2651 = vmatpush1.bf16.msra.mxu0 %v1744
  %2652 = vmatprep.subr.bf16.mxu0 0
  %2653 = vmatpush1.bf16.msra.mxu0 %v1745
  %2654 = vmatprep.subr.bf16.mxu0 0
  %2655 = vmatpush1.bf16.msra.mxu0 %v1746
  %2656 = vmatprep.subr.bf16.mxu0 0
  %2657 = vmatpush1.bf16.msra.mxu0 0
  %2658 = vmatprep.subr.bf16.mxu0 0
  %2659 = vmatpush1.bf16.msra.mxu0 0
  %2660 = vmatprep.subr.bf16.mxu0 0
  %2661 = vmatpush1.bf16.msra.mxu0 0
  %2662 = vmatprep.subr.bf16.mxu0 0
  %2663 = vmatpush1.bf16.msra.mxu0 0
  %2664 = vmatprep.subr.bf16.mxu0 0
  %2665 = vmatpush1.bf16.msra.mxu0 0
  %2666 = vmatprep.subr.bf16.mxu0 0
  %2667 = vmatpush1.bf16.msra.mxu0 0
  %2668 = vmatprep.subr.bf16.mxu0 0
  %2669 = vmatpush1.bf16.msra.mxu0 0
  %2670 = vmatprep.subr.bf16.mxu0 0
  %2671 = vmatpush1.bf16.msra.mxu0 0
  %2672 = vmatprep.mubr.bf16.mxu0 0
  %2673 = vmatmul.mubr.bf16.gmra.mrb[0].mxu0 %v965
  %v2674 = vpop.f32.mrb[0].mxu0
  %v2675 = vadd.f32 %v2514, %v2674
  %v2676 = vpop.f32.mrb[0].mxu0
  %v2677 = vpop.f32.mrb[0].mxu0
  %v2678 = vadd.f32 %v2517, %v2677
  %v2679 = vpop.f32.mrb[0].mxu0
  %2680 = vmatprep.mubr.bf16.mxu0 0
  %2681 = vmatmul.mubr.bf16.gmra.mrb[0].mxu0 %v976
  %v2682 = vpop.f32.mrb[0].mxu0
  %v2683 = vadd.f32 %v2522, %v2682
  %v2684 = vpop.f32.mrb[0].mxu0
  %v2685 = vpop.f32.mrb[0].mxu0
  %v2686 = vadd.f32 %v2525, %v2685
  %v2687 = vpop.f32.mrb[0].mxu0
  %2688 = vmatprep.mubr.bf16.mxu0 0
  %2689 = vmatmul.mubr.bf16.gmra.mrb[0].mxu0 %v987
  %v2690 = vpop.f32.mrb[0].mxu0
  %v2691 = vadd.f32 %v2530, %v2690
  %v2692 = vpop.f32.mrb[0].mxu0
  %v2693 = vpop.f32.mrb[0].mxu0
  %v2694 = vadd.f32 %v2533, %v2693
  %v2695 = vpop.f32.mrb[0].mxu0
  %2696 = vmatprep.mubr.bf16.mxu0 0
  %2697 = vmatmul.mubr.bf16.gmra.mrb[0].mxu0 %v998
  %v2698 = vpop.f32.mrb[0].mxu0
  %v2699 = vadd.f32 %v2538, %v2698
  %v2700 = vpop.f32.mrb[0].mxu0
  %v2701 = vpop.f32.mrb[0].mxu0
  %v2702 = vadd.f32 %v2541, %v2701
  %v2703 = vpop.f32.mrb[0].mxu0
  %2704 = vmatprep.mubr.bf16.mxu0 0
  %2705 = vmatmul.mubr.bf16.gmra.mrb[0].mxu0 %v1009
  %v2706 = vpop.f32.mrb[0].mxu0
  %v2707 = vadd.f32 %v2546, %v2706
  %v2708 = vpop.f32.mrb[0].mxu0
  %v2709 = vpop.f32.mrb[0].mxu0
  %v2710 = vadd.f32 %v2549, %v2709
  %v2711 = vpop.f32.mrb[0].mxu0
  %2712 = vmatprep.mubr.bf16.mxu0 0
  %2713 = vmatmul.mubr.bf16.gmra.mrb[0].mxu0 %v1020
  %v2714 = vpop.f32.mrb[0].mxu0
  %v2715 = vadd.f32 %v2554, %v2714
  %v2716 = vpop.f32.mrb[0].mxu0
  %v2717 = vpop.f32.mrb[0].mxu0
  %v2718 = vadd.f32 %v2557, %v2717
  %v2719 = vpop.f32.mrb[0].mxu0
  %2720 = vmatprep.mubr.bf16.mxu0 0
  %2721 = vmatmul.mubr.bf16.gmra.mrb[0].mxu0 %v1031
  %v2722 = vpop.f32.mrb[0].mxu0
  %v2723 = vadd.f32 %v2562, %v2722
  %v2724 = vpop.f32.mrb[0].mxu0
  %v2725 = vpop.f32.mrb[0].mxu0
  %v2726 = vadd.f32 %v2565, %v2725
  %v2727 = vpop.f32.mrb[0].mxu0
  %2728 = vmatprep.mubr.bf16.mxu0 0
  %2729 = vmatmul.mubr.bf16.gmra.mrb[0].mxu0 %v1042
  %v2730 = vpop.f32.mrb[0].mxu0
  %v2731 = vadd.f32 %v2570, %v2730
  %v2732 = vpop.f32.mrb[0].mxu0
  %v2733 = vpop.f32.mrb[0].mxu0
  %v2734 = vadd.f32 %v2573, %v2733
  %v2735 = vpop.f32.mrb[0].mxu0
  %2736 = vmatprep.mubr.bf16.mxu0 0
  %2737 = vmatmul.mubr.bf16.gmra.mrb[0].mxu0 %v1053
  %v2738 = vpop.f32.mrb[0].mxu0
  %v2739 = vadd.f32 %v2578, %v2738
  %v2740 = vpop.f32.mrb[0].mxu0
  %v2741 = vpop.f32.mrb[0].mxu0
  %v2742 = vadd.f32 %v2581, %v2741
  %v2743 = vpop.f32.mrb[0].mxu0
  %2744 = vmatprep.mubr.bf16.mxu0 0
  %2745 = vmatmul.mubr.bf16.gmra.mrb[0].mxu0 %v1064
  %v2746 = vpop.f32.mrb[0].mxu0
  %v2747 = vadd.f32 %v2586, %v2746
  %v2748 = vpop.f32.mrb[0].mxu0
  %v2749 = vpop.f32.mrb[0].mxu0
  %v2750 = vadd.f32 %v2589, %v2749
  %v2751 = vpop.f32.mrb[0].mxu0
  %2752 = vmatprep.mubr.bf16.mxu0 0
  %2753 = vmatmul.mubr.bf16.gmra.mrb[0].mxu0 %v1075
  %v2754 = vpop.f32.mrb[0].mxu0
  %v2755 = vadd.f32 %v2594, %v2754
  %v2756 = vpop.f32.mrb[0].mxu0
  %v2757 = vpop.f32.mrb[0].mxu0
  %v2758 = vadd.f32 %v2597, %v2757
  %v2759 = vpop.f32.mrb[0].mxu0
  %2760 = vmatprep.mubr.bf16.mxu0 0
  %2761 = vmatmul.mubr.bf16.gmra.mrb[0].mxu0 %v1086
  %v2762 = vpop.f32.mrb[0].mxu0
  %v2763 = vadd.f32 %v2602, %v2762
  %v2764 = vpop.f32.mrb[0].mxu0
  %v2765 = vpop.f32.mrb[0].mxu0
  %v2766 = vadd.f32 %v2605, %v2765
  %v2767 = vpop.f32.mrb[0].mxu0
  %2768 = vmatprep.mubr.bf16.mxu0 0
  %2769 = vmatmul.mubr.bf16.gmra.mrb[0].mxu0 %v1097
  %v2770 = vpop.f32.mrb[0].mxu0
  %v2771 = vadd.f32 %v2610, %v2770
  %v2772 = vpop.f32.mrb[0].mxu0
  %v2773 = vpop.f32.mrb[0].mxu0
  %v2774 = vadd.f32 %v2613, %v2773
  %v2775 = vpop.f32.mrb[0].mxu0
  %2776 = vmatprep.mubr.bf16.mxu0 0
  %2777 = vmatmul.mubr.bf16.gmra.mrb[0].mxu0 %v1108
  %v2778 = vpop.f32.mrb[0].mxu0
  %v2779 = vadd.f32 %v2618, %v2778
  %v2780 = vpop.f32.mrb[0].mxu0
  %v2781 = vpop.f32.mrb[0].mxu0
  %v2782 = vadd.f32 %v2621, %v2781
  %v2783 = vpop.f32.mrb[0].mxu0
  %2784 = vmatprep.mubr.bf16.mxu0 0
  %2785 = vmatmul.mubr.bf16.gmra.mrb[0].mxu0 %v1119
  %v2786 = vpop.f32.mrb[0].mxu0
  %v2787 = vadd.f32 %v2626, %v2786
  %v2788 = vpop.f32.mrb[0].mxu0
  %v2789 = vpop.f32.mrb[0].mxu0
  %v2790 = vadd.f32 %v2629, %v2789
  %v2791 = vpop.f32.mrb[0].mxu0
  %2792 = vmatprep.mubr.bf16.mxu0 0
  %2793 = vmatmul.mubr.bf16.gmra.mrb[0].mxu0 %v1130
  %v2794 = vpop.f32.mrb[0].mxu0
  %v2795 = vadd.f32 %v2634, %v2794
  %v2796 = vpop.f32.mrb[0].mxu0
  %v2797 = vpop.f32.mrb[0].mxu0
  %v2798 = vadd.f32 %v2637, %v2797
  %v2799 = vpop.f32.mrb[0].mxu0
  %2800 = vdwg.mxu0
  %v2801 = vmax.f32 %v2675, 0.0
  %v2802 = vmax.f32 %v2678, 0.0
  %v2803 = vmax.f32 %v2683, 0.0
  %v2804 = vmax.f32 %v2686, 0.0
  %v2805 = vmax.f32 %v2691, 0.0
  %v2806 = vmax.f32 %v2694, 0.0
  %v2807 = vmax.f32 %v2699, 0.0
  %v2808 = vmax.f32 %v2702, 0.0
  %v2809 = vmax.f32 %v2707, 0.0
  %v2810 = vmax.f32 %v2710, 0.0
  %v2811 = vmax.f32 %v2715, 0.0
  %v2812 = vmax.f32 %v2718, 0.0
  %v2813 = vmax.f32 %v2723, 0.0
  %v2814 = vmax.f32 %v2726, 0.0
  %v2815 = vmax.f32 %v2731, 0.0
  %v2816 = vmax.f32 %v2734, 0.0
  %v2817 = vmax.f32 %v2739, 0.0
  %v2818 = vmax.f32 %v2742, 0.0
  %v2819 = vmax.f32 %v2747, 0.0
  %v2820 = vmax.f32 %v2750, 0.0
  %v2821 = vmax.f32 %v2755, 0.0
  %v2822 = vmax.f32 %v2758, 0.0
  %v2823 = vmax.f32 %v2763, 0.0
  %v2824 = vmax.f32 %v2766, 0.0
  %v2825 = vmax.f32 %v2771, 0.0
  %v2826 = vmax.f32 %v2774, 0.0
  %v2827 = vmax.f32 %v2779, 0.0
  %v2828 = vmax.f32 %v2782, 0.0
  %v2829 = vmax.f32 %v2787, 0.0
  %v2830 = vmax.f32 %v2790, 0.0
  %v2831 = vmax.f32 %v2795, 0.0
  %v2832 = vmax.f32 %v2798, 0.0
  %2865 = vrot.lane.b32.xlu0 %v2801, 118
  %v2866 = vpop.permute.xlu0 %2865
  %2867 = vrot.lane.b32.xlu0 %v2802, 118
  %v2868 = vpop.permute.xlu0 %2867
  %2869 = vrot.lane.b32.xlu0 %v2803, 118
  %v2870 = vpop.permute.xlu0 %2869
  %2871 = vrot.lane.b32.xlu0 %v2804, 118
  %v2872 = vpop.permute.xlu0 %2871
  %2873 = vrot.lane.b32.xlu0 %v2805, 118
  %v2874 = vpop.permute.xlu0 %2873
  %2875 = vrot.lane.b32.xlu0 %v2806, 118
  %v2876 = vpop.permute.xlu0 %2875
  %2877 = vrot.lane.b32.xlu0 %v2807, 118
  %v2878 = vpop.permute.xlu0 %2877
  %2879 = vrot.lane.b32.xlu0 %v2808, 118
  %v2880 = vpop.permute.xlu0 %2879
  %2881 = vrot.lane.b32.xlu0 %v2809, 118
  %v2882 = vpop.permute.xlu0 %2881
  %2883 = vrot.lane.b32.xlu0 %v2810, 118
  %v2884 = vpop.permute.xlu0 %2883
  %2885 = vrot.lane.b32.xlu0 %v2811, 118
  %v2886 = vpop.permute.xlu0 %2885
  %2887 = vrot.lane.b32.xlu0 %v2812, 118
  %v2888 = vpop.permute.xlu0 %2887
  %2889 = vrot.lane.b32.xlu0 %v2813, 118
  %v2890 = vpop.permute.xlu0 %2889
  %2891 = vrot.lane.b32.xlu0 %v2814, 118
  %v2892 = vpop.permute.xlu0 %2891
  %2893 = vrot.lane.b32.xlu0 %v2815, 118
  %v2894 = vpop.permute.xlu0 %2893
  %2895 = vrot.lane.b32.xlu0 %v2816, 118
  %v2896 = vpop.permute.xlu0 %2895
  %2897 = vrot.lane.b32.xlu0 %v2817, 118
  %v2898 = vpop.permute.xlu0 %2897
  %2899 = vrot.lane.b32.xlu0 %v2818, 118
  %v2900 = vpop.permute.xlu0 %2899
  %2901 = vrot.lane.b32.xlu0 %v2819, 118
  %v2902 = vpop.permute.xlu0 %2901
  %2903 = vrot.lane.b32.xlu0 %v2820, 118
  %v2904 = vpop.permute.xlu0 %2903
  %2905 = vrot.lane.b32.xlu0 %v2821, 118
  %v2906 = vpop.permute.xlu0 %2905
  %2907 = vrot.lane.b32.xlu0 %v2822, 118
  %v2908 = vpop.permute.xlu0 %2907
  %2909 = vrot.lane.b32.xlu0 %v2823, 118
  %v2910 = vpop.permute.xlu0 %2909
  %2911 = vrot.lane.b32.xlu0 %v2824, 118
  %v2912 = vpop.permute.xlu0 %2911
  %2913 = vrot.lane.b32.xlu0 %v2825, 118
  %v2914 = vpop.permute.xlu0 %2913
  %2915 = vrot.lane.b32.xlu0 %v2826, 118
  %v2916 = vpop.permute.xlu0 %2915
  %2917 = vrot.lane.b32.xlu0 %v2827, 118
  %v2918 = vpop.permute.xlu0 %2917
  %2919 = vrot.lane.b32.xlu0 %v2828, 118
  %v2920 = vpop.permute.xlu0 %2919
  %2921 = vrot.lane.b32.xlu0 %v2829, 118
  %v2922 = vpop.permute.xlu0 %2921
  %2923 = vrot.lane.b32.xlu0 %v2830, 118
  %v2924 = vpop.permute.xlu0 %2923
  %2925 = vrot.lane.b32.xlu0 %v2831, 118
  %v2926 = vpop.permute.xlu0 %2925
  %2927 = vrot.lane.b32.xlu0 %v2832, 118
  %v2928 = vpop.permute.xlu0 %2927
  %v2961 = vmax.f32 %v2801, %v2866
  %v2962 = vmax.f32 %v2802, %v2868
  %v2963 = vmax.f32 %v2803, %v2870
  %v2964 = vmax.f32 %v2804, %v2872
  %v2965 = vmax.f32 %v2805, %v2874
  %v2966 = vmax.f32 %v2806, %v2876
  %v2967 = vmax.f32 %v2807, %v2878
  %v2968 = vmax.f32 %v2808, %v2880
  %v2969 = vmax.f32 %v2809, %v2882
  %v2970 = vmax.f32 %v2810, %v2884
  %v2971 = vmax.f32 %v2811, %v2886
  %v2972 = vmax.f32 %v2812, %v2888
  %v2973 = vmax.f32 %v2813, %v2890
  %v2974 = vmax.f32 %v2814, %v2892
  %v2975 = vmax.f32 %v2815, %v2894
  %v2976 = vmax.f32 %v2816, %v2896
  %v2977 = vmax.f32 %v2817, %v2898
  %v2978 = vmax.f32 %v2818, %v2900
  %v2979 = vmax.f32 %v2819, %v2902
  %v2980 = vmax.f32 %v2820, %v2904
  %v2981 = vmax.f32 %v2821, %v2906
  %v2982 = vmax.f32 %v2822, %v2908
  %v2983 = vmax.f32 %v2823, %v2910
  %v2984 = vmax.f32 %v2824, %v2912
  %v2985 = vmax.f32 %v2825, %v2914
  %v2986 = vmax.f32 %v2826, %v2916
  %v2987 = vmax.f32 %v2827, %v2918
  %v2988 = vmax.f32 %v2828, %v2920
  %v2989 = vmax.f32 %v2829, %v2922
  %v2990 = vmax.f32 %v2830, %v2924
  %v2991 = vmax.f32 %v2831, %v2926
  %v2992 = vmax.f32 %v2832, %v2928
  %v2993 = vpack.c.bf16 %v2962, %v2961
  %v2994 = vpack.c.bf16 %v2964, %v2963
  %v2995 = vpack.c.bf16 %v2966, %v2965
  %v2996 = vpack.c.bf16 %v2968, %v2967
  %v2997 = vpack.c.bf16 %v2970, %v2969
  %v2998 = vpack.c.bf16 %v2972, %v2971
  %v2999 = vpack.c.bf16 %v2974, %v2973
  %v3000 = vpack.c.bf16 %v2976, %v2975
  %v3001 = vpack.c.bf16 %v2978, %v2977
  %v3002 = vpack.c.bf16 %v2980, %v2979
  %v3003 = vpack.c.bf16 %v2982, %v2981
  %v3004 = vpack.c.bf16 %v2984, %v2983
  %v3005 = vpack.c.bf16 %v2986, %v2985
  %v3006 = vpack.c.bf16 %v2988, %v2987
  %v3007 = vpack.c.bf16 %v2990, %v2989
  %v3008 = vpack.c.bf16 %v2992, %v2991
  %vm3009 = vsmask.f32 7424
  %v3011 = vshrl.u32 %v2993, 16
  %v3013 = vshll.u32 %v2993, 16
  %v3015 = vrot.slane %v3013, 1
  %v3016 = vor.u32 %v3011, %v3015
  %v3018 = vshll.u32 %v2994, 16
  %v3020 = vrot.slane %v3018, 1
  %v3021 = vsel %vm3009, %v3016, %v3020
  %v3022 = vshrl.u32 %v2994, 16
  %v3024 = vor.u32 %v3022, %v3020
  %v3026 = vshrl.u32 %v2995, 16
  %v3028 = vshll.u32 %v2995, 16
  %v3030 = vrot.slane %v3028, 1
  %v3031 = vor.u32 %v3026, %v3030
  %v3033 = vshll.u32 %v2996, 16
  %v3035 = vrot.slane %v3033, 1
  %v3036 = vsel %vm3009, %v3031, %v3035
  %v3037 = vshrl.u32 %v2996, 16
  %v3039 = vor.u32 %v3037, %v3035
  %v3041 = vshrl.u32 %v2997, 16
  %v3043 = vshll.u32 %v2997, 16
  %v3045 = vrot.slane %v3043, 1
  %v3046 = vor.u32 %v3041, %v3045
  %v3048 = vshll.u32 %v2998, 16
  %v3050 = vrot.slane %v3048, 1
  %v3051 = vsel %vm3009, %v3046, %v3050
  %v3052 = vshrl.u32 %v2998, 16
  %v3054 = vor.u32 %v3052, %v3050
  %v3056 = vshrl.u32 %v2999, 16
  %v3058 = vshll.u32 %v2999, 16
  %v3060 = vrot.slane %v3058, 1
  %v3061 = vor.u32 %v3056, %v3060
  %v3063 = vshll.u32 %v3000, 16
  %v3065 = vrot.slane %v3063, 1
  %v3066 = vsel %vm3009, %v3061, %v3065
  %v3067 = vshrl.u32 %v3000, 16
  %v3069 = vor.u32 %v3067, %v3065
  %v3071 = vshrl.u32 %v3001, 16
  %v3073 = vshll.u32 %v3001, 16
  %v3075 = vrot.slane %v3073, 1
  %v3076 = vor.u32 %v3071, %v3075
  %v3078 = vshll.u32 %v3002, 16
  %v3080 = vrot.slane %v3078, 1
  %v3081 = vsel %vm3009, %v3076, %v3080
  %v3082 = vshrl.u32 %v3002, 16
  %v3084 = vor.u32 %v3082, %v3080
  %v3086 = vshrl.u32 %v3003, 16
  %v3088 = vshll.u32 %v3003, 16
  %v3090 = vrot.slane %v3088, 1
  %v3091 = vor.u32 %v3086, %v3090
  %v3093 = vshll.u32 %v3004, 16
  %v3095 = vrot.slane %v3093, 1
  %v3096 = vsel %vm3009, %v3091, %v3095
  %v3097 = vshrl.u32 %v3004, 16
  %v3099 = vor.u32 %v3097, %v3095
  %v3101 = vshrl.u32 %v3005, 16
  %v3103 = vshll.u32 %v3005, 16
  %v3105 = vrot.slane %v3103, 1
  %v3106 = vor.u32 %v3101, %v3105
  %v3108 = vshll.u32 %v3006, 16
  %v3110 = vrot.slane %v3108, 1
  %v3111 = vsel %vm3009, %v3106, %v3110
  %v3112 = vshrl.u32 %v3006, 16
  %v3114 = vor.u32 %v3112, %v3110
  %v3116 = vshrl.u32 %v3007, 16
  %v3118 = vshll.u32 %v3007, 16
  %v3120 = vrot.slane %v3118, 1
  %v3121 = vor.u32 %v3116, %v3120
  %v3123 = vshll.u32 %v3008, 16
  %v3125 = vrot.slane %v3123, 1
  %v3126 = vsel %vm3009, %v3121, %v3125
  %v3127 = vshrl.u32 %v3008, 16
  %v3129 = vor.u32 %v3127, %v3125
  %3130 = vrot.lane.b32.xlu0 %v3021, 10
  %v3131 = vpop.permute.xlu0 %3130
  %3132 = vrot.lane.b32.xlu0 %v3024, 10
  %v3133 = vpop.permute.xlu0 %3132
  %3134 = vrot.lane.b32.xlu0 %v3036, 10
  %v3135 = vpop.permute.xlu0 %3134
  %3136 = vrot.lane.b32.xlu0 %v3039, 10
  %v3137 = vpop.permute.xlu0 %3136
  %3138 = vrot.lane.b32.xlu0 %v3051, 10
  %v3139 = vpop.permute.xlu0 %3138
  %3140 = vrot.lane.b32.xlu0 %v3054, 10
  %v3141 = vpop.permute.xlu0 %3140
  %3142 = vrot.lane.b32.xlu0 %v3066, 10
  %v3143 = vpop.permute.xlu0 %3142
  %3144 = vrot.lane.b32.xlu0 %v3069, 10
  %v3145 = vpop.permute.xlu0 %3144
  %3146 = vrot.lane.b32.xlu0 %v3081, 10
  %v3147 = vpop.permute.xlu0 %3146
  %3148 = vrot.lane.b32.xlu0 %v3084, 10
  %v3149 = vpop.permute.xlu0 %3148
  %3150 = vrot.lane.b32.xlu0 %v3096, 10
  %v3151 = vpop.permute.xlu0 %3150
  %3152 = vrot.lane.b32.xlu0 %v3099, 10
  %v3153 = vpop.permute.xlu0 %3152
  %3154 = vrot.lane.b32.xlu0 %v3111, 10
  %v3155 = vpop.permute.xlu0 %3154
  %3156 = vrot.lane.b32.xlu0 %v3114, 10
  %v3157 = vpop.permute.xlu0 %3156
  %3158 = vrot.lane.b32.xlu0 %v3126, 10
  %v3159 = vpop.permute.xlu0 %3158
  %3160 = vrot.lane.b32.xlu0 %v3129, 10
  %v3161 = vpop.permute.xlu0 %3160
  %vm3178 = vcmask 1046528
  %v3179 = vrot.slane %v2993, 1
  %v3180 = vrot.slane %v2994, 1
  %v3181 = vsel %vm3178, %v3179, %v3180
  %v3182 = vrot.slane %v2995, 1
  %v3183 = vrot.slane %v2996, 1
  %v3184 = vsel %vm3178, %v3182, %v3183
  %v3185 = vrot.slane %v2997, 1
  %v3186 = vrot.slane %v2998, 1
  %v3187 = vsel %vm3178, %v3185, %v3186
  %v3188 = vrot.slane %v2999, 1
  %v3189 = vrot.slane %v3000, 1
  %v3190 = vsel %vm3178, %v3188, %v3189
  %v3191 = vrot.slane %v3001, 1
  %v3192 = vrot.slane %v3002, 1
  %v3193 = vsel %vm3178, %v3191, %v3192
  %v3194 = vrot.slane %v3003, 1
  %v3195 = vrot.slane %v3004, 1
  %v3196 = vsel %vm3178, %v3194, %v3195
  %v3197 = vrot.slane %v3005, 1
  %v3198 = vrot.slane %v3006, 1
  %v3199 = vsel %vm3178, %v3197, %v3198
  %v3200 = vrot.slane %v3007, 1
  %v3201 = vrot.slane %v3008, 1
  %v3202 = vsel %vm3178, %v3200, %v3201
  %3203 = vrot.lane.b32.xlu0 %v3181, 20
  %v3204 = vpop.permute.xlu0 %3203
  %3205 = vrot.lane.b32.xlu0 %v3180, 20
  %v3206 = vpop.permute.xlu0 %3205
  %3207 = vrot.lane.b32.xlu0 %v3184, 20
  %v3208 = vpop.permute.xlu0 %3207
  %3209 = vrot.lane.b32.xlu0 %v3183, 20
  %v3210 = vpop.permute.xlu0 %3209
  %3211 = vrot.lane.b32.xlu0 %v3187, 20
  %v3212 = vpop.permute.xlu0 %3211
  %3213 = vrot.lane.b32.xlu0 %v3186, 20
  %v3214 = vpop.permute.xlu0 %3213
  %3215 = vrot.lane.b32.xlu0 %v3190, 20
  %v3216 = vpop.permute.xlu0 %3215
  %3217 = vrot.lane.b32.xlu0 %v3189, 20
  %v3218 = vpop.permute.xlu0 %3217
  %3219 = vrot.lane.b32.xlu0 %v3193, 20
  %v3220 = vpop.permute.xlu0 %3219
  %3221 = vrot.lane.b32.xlu0 %v3192, 20
  %v3222 = vpop.permute.xlu0 %3221
  %3223 = vrot.lane.b32.xlu0 %v3196, 20
  %v3224 = vpop.permute.xlu0 %3223
  %3225 = vrot.lane.b32.xlu0 %v3195, 20
  %v3226 = vpop.permute.xlu0 %3225
  %3227 = vrot.lane.b32.xlu0 %v3199, 20
  %v3228 = vpop.permute.xlu0 %3227
  %3229 = vrot.lane.b32.xlu0 %v3198, 20
  %v3230 = vpop.permute.xlu0 %3229
  %3231 = vrot.lane.b32.xlu0 %v3202, 20
  %v3232 = vpop.permute.xlu0 %3231
  %3233 = vrot.lane.b32.xlu0 %v3201, 20
  %v3234 = vpop.permute.xlu0 %3233
  %vm3235 = vsmask.f32 6400
  %v3236 = vrot.slane %v3011, 1
  %v3237 = vrot.slane %v3013, 2
  %v3238 = vor.u32 %v3236, %v3237
  %v3239 = vrot.slane %v3022, 1
  %v3240 = vrot.slane %v3018, 2
  %v3241 = vor.u32 %v3239, %v3240
  %v3242 = vsel %vm3235, %v3238, %v3241
  %v3243 = vrot.slane %v3026, 1
  %v3244 = vrot.slane %v3028, 2
  %v3245 = vor.u32 %v3243, %v3244
  %v3246 = vrot.slane %v3037, 1
  %v3247 = vrot.slane %v3033, 2
  %v3248 = vor.u32 %v3246, %v3247
  %v3249 = vsel %vm3235, %v3245, %v3248
  %v3250 = vrot.slane %v3041, 1
  %v3251 = vrot.slane %v3043, 2
  %v3252 = vor.u32 %v3250, %v3251
  %v3253 = vrot.slane %v3052, 1
  %v3254 = vrot.slane %v3048, 2
  %v3255 = vor.u32 %v3253, %v3254
  %v3256 = vsel %vm3235, %v3252, %v3255
  %v3257 = vrot.slane %v3056, 1
  %v3258 = vrot.slane %v3058, 2
  %v3259 = vor.u32 %v3257, %v3258
  %v3260 = vrot.slane %v3067, 1
  %v3261 = vrot.slane %v3063, 2
  %v3262 = vor.u32 %v3260, %v3261
  %v3263 = vsel %vm3235, %v3259, %v3262
  %v3264 = vrot.slane %v3071, 1
  %v3265 = vrot.slane %v3073, 2
  %v3266 = vor.u32 %v3264, %v3265
  %v3267 = vrot.slane %v3082, 1
  %v3268 = vrot.slane %v3078, 2
  %v3269 = vor.u32 %v3267, %v3268
  %v3270 = vsel %vm3235, %v3266, %v3269
  %v3271 = vrot.slane %v3086, 1
  %v3272 = vrot.slane %v3088, 2
  %v3273 = vor.u32 %v3271, %v3272
  %v3274 = vrot.slane %v3097, 1
  %v3275 = vrot.slane %v3093, 2
  %v3276 = vor.u32 %v3274, %v3275
  %v3277 = vsel %vm3235, %v3273, %v3276
  %v3278 = vrot.slane %v3101, 1
  %v3279 = vrot.slane %v3103, 2
  %v3280 = vor.u32 %v3278, %v3279
  %v3281 = vrot.slane %v3112, 1
  %v3282 = vrot.slane %v3108, 2
  %v3283 = vor.u32 %v3281, %v3282
  %v3284 = vsel %vm3235, %v3280, %v3283
  %v3285 = vrot.slane %v3116, 1
  %v3286 = vrot.slane %v3118, 2
  %v3287 = vor.u32 %v3285, %v3286
  %v3288 = vrot.slane %v3127, 1
  %v3289 = vrot.slane %v3123, 2
  %v3290 = vor.u32 %v3288, %v3289
  %v3291 = vsel %vm3235, %v3287, %v3290
  %3292 = vrot.lane.b32.xlu0 %v3242, 30
  %v3293 = vpop.permute.xlu0 %3292
  %3294 = vrot.lane.b32.xlu0 %v3241, 30
  %v3295 = vpop.permute.xlu0 %3294
  %3296 = vrot.lane.b32.xlu0 %v3249, 30
  %v3297 = vpop.permute.xlu0 %3296
  %3298 = vrot.lane.b32.xlu0 %v3248, 30
  %v3299 = vpop.permute.xlu0 %3298
  %3300 = vrot.lane.b32.xlu0 %v3256, 30
  %v3301 = vpop.permute.xlu0 %3300
  %3302 = vrot.lane.b32.xlu0 %v3255, 30
  %v3303 = vpop.permute.xlu0 %3302
  %3304 = vrot.lane.b32.xlu0 %v3263, 30
  %v3305 = vpop.permute.xlu0 %3304
  %3306 = vrot.lane.b32.xlu0 %v3262, 30
  %v3307 = vpop.permute.xlu0 %3306
  %3308 = vrot.lane.b32.xlu0 %v3270, 30
  %v3309 = vpop.permute.xlu0 %3308
  %3310 = vrot.lane.b32.xlu0 %v3269, 30
  %v3311 = vpop.permute.xlu0 %3310
  %3312 = vrot.lane.b32.xlu0 %v3277, 30
  %v3313 = vpop.permute.xlu0 %3312
  %3314 = vrot.lane.b32.xlu0 %v3276, 30
  %v3315 = vpop.permute.xlu0 %3314
  %3316 = vrot.lane.b32.xlu0 %v3284, 30
  %v3317 = vpop.permute.xlu0 %3316
  %3318 = vrot.lane.b32.xlu0 %v3283, 30
  %v3319 = vpop.permute.xlu0 %3318
  %3320 = vrot.lane.b32.xlu0 %v3291, 30
  %v3321 = vpop.permute.xlu0 %3320
  %3322 = vrot.lane.b32.xlu0 %v3290, 30
  %v3323 = vpop.permute.xlu0 %3322
  %vm3324 = vcmask 1045504
  %v3325 = vrot.slane %v2993, 2
  %v3326 = vrot.slane %v2994, 2
  %v3327 = vsel %vm3324, %v3325, %v3326
  %v3328 = vrot.slane %v2995, 2
  %v3329 = vrot.slane %v2996, 2
  %v3330 = vsel %vm3324, %v3328, %v3329
  %v3331 = vrot.slane %v2997, 2
  %v3332 = vrot.slane %v2998, 2
  %v3333 = vsel %vm3324, %v3331, %v3332
  %v3334 = vrot.slane %v2999, 2
  %v3335 = vrot.slane %v3000, 2
  %v3336 = vsel %vm3324, %v3334, %v3335
  %v3337 = vrot.slane %v3001, 2
  %v3338 = vrot.slane %v3002, 2
  %v3339 = vsel %vm3324, %v3337, %v3338
  %v3340 = vrot.slane %v3003, 2
  %v3341 = vrot.slane %v3004, 2
  %v3342 = vsel %vm3324, %v3340, %v3341
  %v3343 = vrot.slane %v3005, 2
  %v3344 = vrot.slane %v3006, 2
  %v3345 = vsel %vm3324, %v3343, %v3344
  %v3346 = vrot.slane %v3007, 2
  %v3347 = vrot.slane %v3008, 2
  %v3348 = vsel %vm3324, %v3346, %v3347
  %3349 = vrot.lane.b32.xlu0 %v3327, 40
  %v3350 = vpop.permute.xlu0 %3349
  %3351 = vrot.lane.b32.xlu0 %v3326, 40
  %v3352 = vpop.permute.xlu0 %3351
  %3353 = vrot.lane.b32.xlu0 %v3330, 40
  %v3354 = vpop.permute.xlu0 %3353
  %3355 = vrot.lane.b32.xlu0 %v3329, 40
  %v3356 = vpop.permute.xlu0 %3355
  %3357 = vrot.lane.b32.xlu0 %v3333, 40
  %v3358 = vpop.permute.xlu0 %3357
  %3359 = vrot.lane.b32.xlu0 %v3332, 40
  %v3360 = vpop.permute.xlu0 %3359
  %3361 = vrot.lane.b32.xlu0 %v3336, 40
  %v3362 = vpop.permute.xlu0 %3361
  %3363 = vrot.lane.b32.xlu0 %v3335, 40
  %v3364 = vpop.permute.xlu0 %3363
  %3365 = vrot.lane.b32.xlu0 %v3339, 40
  %v3366 = vpop.permute.xlu0 %3365
  %3367 = vrot.lane.b32.xlu0 %v3338, 40
  %v3368 = vpop.permute.xlu0 %3367
  %3369 = vrot.lane.b32.xlu0 %v3342, 40
  %v3370 = vpop.permute.xlu0 %3369
  %3371 = vrot.lane.b32.xlu0 %v3341, 40
  %v3372 = vpop.permute.xlu0 %3371
  %3373 = vrot.lane.b32.xlu0 %v3345, 40
  %v3374 = vpop.permute.xlu0 %3373
  %3375 = vrot.lane.b32.xlu0 %v3344, 40
  %v3376 = vpop.permute.xlu0 %3375
  %3377 = vrot.lane.b32.xlu0 %v3348, 40
  %v3378 = vpop.permute.xlu0 %3377
  %3379 = vrot.lane.b32.xlu0 %v3347, 40
  %v3380 = vpop.permute.xlu0 %3379
  %vm3381 = vsmask.f32 5376
  %v3382 = vrot.slane %v3011, 2
  %v3383 = vrot.slane %v3013, 3
  %v3384 = vor.u32 %v3382, %v3383
  %v3385 = vrot.slane %v3022, 2
  %v3386 = vrot.slane %v3018, 3
  %v3387 = vor.u32 %v3385, %v3386
  %v3388 = vsel %vm3381, %v3384, %v3387
  %v3389 = vrot.slane %v3026, 2
  %v3390 = vrot.slane %v3028, 3
  %v3391 = vor.u32 %v3389, %v3390
  %v3392 = vrot.slane %v3037, 2
  %v3393 = vrot.slane %v3033, 3
  %v3394 = vor.u32 %v3392, %v3393
  %v3395 = vsel %vm3381, %v3391, %v3394
  %v3396 = vrot.slane %v3041, 2
  %v3397 = vrot.slane %v3043, 3
  %v3398 = vor.u32 %v3396, %v3397
  %v3399 = vrot.slane %v3052, 2
  %v3400 = vrot.slane %v3048, 3
  %v3401 = vor.u32 %v3399, %v3400
  %v3402 = vsel %vm3381, %v3398, %v3401
  %v3403 = vrot.slane %v3056, 2
  %v3404 = vrot.slane %v3058, 3
  %v3405 = vor.u32 %v3403, %v3404
  %v3406 = vrot.slane %v3067, 2
  %v3407 = vrot.slane %v3063, 3
  %v3408 = vor.u32 %v3406, %v3407
  %v3409 = vsel %vm3381, %v3405, %v3408
  %v3410 = vrot.slane %v3071, 2
  %v3411 = vrot.slane %v3073, 3
  %v3412 = vor.u32 %v3410, %v3411
  %v3413 = vrot.slane %v3082, 2
  %v3414 = vrot.slane %v3078, 3
  %v3415 = vor.u32 %v3413, %v3414
  %v3416 = vsel %vm3381, %v3412, %v3415
  %v3417 = vrot.slane %v3086, 2
  %v3418 = vrot.slane %v3088, 3
  %v3419 = vor.u32 %v3417, %v3418
  %v3420 = vrot.slane %v3097, 2
  %v3421 = vrot.slane %v3093, 3
  %v3422 = vor.u32 %v3420, %v3421
  %v3423 = vsel %vm3381, %v3419, %v3422
  %v3424 = vrot.slane %v3101, 2
  %v3425 = vrot.slane %v3103, 3
  %v3426 = vor.u32 %v3424, %v3425
  %v3427 = vrot.slane %v3112, 2
  %v3428 = vrot.slane %v3108, 3
  %v3429 = vor.u32 %v3427, %v3428
  %v3430 = vsel %vm3381, %v3426, %v3429
  %v3431 = vrot.slane %v3116, 2
  %v3432 = vrot.slane %v3118, 3
  %v3433 = vor.u32 %v3431, %v3432
  %v3434 = vrot.slane %v3127, 2
  %v3435 = vrot.slane %v3123, 3
  %v3436 = vor.u32 %v3434, %v3435
  %v3437 = vsel %vm3381, %v3433, %v3436
  %3438 = vrot.lane.b32.xlu0 %v3388, 50
  %v3439 = vpop.permute.xlu0 %3438
  %3440 = vrot.lane.b32.xlu0 %v3387, 50
  %v3441 = vpop.permute.xlu0 %3440
  %3442 = vrot.lane.b32.xlu0 %v3395, 50
  %v3443 = vpop.permute.xlu0 %3442
  %3444 = vrot.lane.b32.xlu0 %v3394, 50
  %v3445 = vpop.permute.xlu0 %3444
  %3446 = vrot.lane.b32.xlu0 %v3402, 50
  %v3447 = vpop.permute.xlu0 %3446
  %3448 = vrot.lane.b32.xlu0 %v3401, 50
  %v3449 = vpop.permute.xlu0 %3448
  %3450 = vrot.lane.b32.xlu0 %v3409, 50
  %v3451 = vpop.permute.xlu0 %3450
  %3452 = vrot.lane.b32.xlu0 %v3408, 50
  %v3453 = vpop.permute.xlu0 %3452
  %3454 = vrot.lane.b32.xlu0 %v3416, 50
  %v3455 = vpop.permute.xlu0 %3454
  %3456 = vrot.lane.b32.xlu0 %v3415, 50
  %v3457 = vpop.permute.xlu0 %3456
  %3458 = vrot.lane.b32.xlu0 %v3423, 50
  %v3459 = vpop.permute.xlu0 %3458
  %3460 = vrot.lane.b32.xlu0 %v3422, 50
  %v3461 = vpop.permute.xlu0 %3460
  %3462 = vrot.lane.b32.xlu0 %v3430, 50
  %v3463 = vpop.permute.xlu0 %3462
  %3464 = vrot.lane.b32.xlu0 %v3429, 50
  %v3465 = vpop.permute.xlu0 %3464
  %3466 = vrot.lane.b32.xlu0 %v3437, 50
  %v3467 = vpop.permute.xlu0 %3466
  %3468 = vrot.lane.b32.xlu0 %v3436, 50
  %v3469 = vpop.permute.xlu0 %3468
  %vm3470 = vcmask 1044480
  %v3471 = vrot.slane %v2993, 3
  %v3472 = vrot.slane %v2994, 3
  %v3473 = vsel %vm3470, %v3471, %v3472
  %v3474 = vrot.slane %v2995, 3
  %v3475 = vrot.slane %v2996, 3
  %v3476 = vsel %vm3470, %v3474, %v3475
  %v3477 = vrot.slane %v2997, 3
  %v3478 = vrot.slane %v2998, 3
  %v3479 = vsel %vm3470, %v3477, %v3478
  %v3480 = vrot.slane %v2999, 3
  %v3481 = vrot.slane %v3000, 3
  %v3482 = vsel %vm3470, %v3480, %v3481
  %v3483 = vrot.slane %v3001, 3
  %v3484 = vrot.slane %v3002, 3
  %v3485 = vsel %vm3470, %v3483, %v3484
  %v3486 = vrot.slane %v3003, 3
  %v3487 = vrot.slane %v3004, 3
  %v3488 = vsel %vm3470, %v3486, %v3487
  %v3489 = vrot.slane %v3005, 3
  %v3490 = vrot.slane %v3006, 3
  %v3491 = vsel %vm3470, %v3489, %v3490
  %v3492 = vrot.slane %v3007, 3
  %v3493 = vrot.slane %v3008, 3
  %v3494 = vsel %vm3470, %v3492, %v3493
  %3495 = vrot.lane.b32.xlu0 %v3473, 60
  %v3496 = vpop.permute.xlu0 %3495
  %3497 = vrot.lane.b32.xlu0 %v3472, 60
  %v3498 = vpop.permute.xlu0 %3497
  %3499 = vrot.lane.b32.xlu0 %v3476, 60
  %v3500 = vpop.permute.xlu0 %3499
  %3501 = vrot.lane.b32.xlu0 %v3475, 60
  %v3502 = vpop.permute.xlu0 %3501
  %3503 = vrot.lane.b32.xlu0 %v3479, 60
  %v3504 = vpop.permute.xlu0 %3503
  %3505 = vrot.lane.b32.xlu0 %v3478, 60
  %v3506 = vpop.permute.xlu0 %3505
  %3507 = vrot.lane.b32.xlu0 %v3482, 60
  %v3508 = vpop.permute.xlu0 %3507
  %3509 = vrot.lane.b32.xlu0 %v3481, 60
  %v3510 = vpop.permute.xlu0 %3509
  %3511 = vrot.lane.b32.xlu0 %v3485, 60
  %v3512 = vpop.permute.xlu0 %3511
  %3513 = vrot.lane.b32.xlu0 %v3484, 60
  %v3514 = vpop.permute.xlu0 %3513
  %3515 = vrot.lane.b32.xlu0 %v3488, 60
  %v3516 = vpop.permute.xlu0 %3515
  %3517 = vrot.lane.b32.xlu0 %v3487, 60
  %v3518 = vpop.permute.xlu0 %3517
  %3519 = vrot.lane.b32.xlu0 %v3491, 60
  %v3520 = vpop.permute.xlu0 %3519
  %3521 = vrot.lane.b32.xlu0 %v3490, 60
  %v3522 = vpop.permute.xlu0 %3521
  %3523 = vrot.lane.b32.xlu0 %v3494, 60
  %v3524 = vpop.permute.xlu0 %3523
  %3525 = vrot.lane.b32.xlu0 %v3493, 60
  %v3526 = vpop.permute.xlu0 %3525
  %vm3527 = vsmask.f32 4352
  %v3528 = vrot.slane %v3011, 3
  %v3529 = vrot.slane %v3013, 4
  %v3530 = vor.u32 %v3528, %v3529
  %v3531 = vrot.slane %v3022, 3
  %v3532 = vrot.slane %v3018, 4
  %v3533 = vor.u32 %v3531, %v3532
  %v3534 = vsel %vm3527, %v3530, %v3533
  %v3535 = vrot.slane %v3026, 3
  %v3536 = vrot.slane %v3028, 4
  %v3537 = vor.u32 %v3535, %v3536
  %v3538 = vrot.slane %v3037, 3
  %v3539 = vrot.slane %v3033, 4
  %v3540 = vor.u32 %v3538, %v3539
  %v3541 = vsel %vm3527, %v3537, %v3540
  %v3542 = vrot.slane %v3041, 3
  %v3543 = vrot.slane %v3043, 4
  %v3544 = vor.u32 %v3542, %v3543
  %v3545 = vrot.slane %v3052, 3
  %v3546 = vrot.slane %v3048, 4
  %v3547 = vor.u32 %v3545, %v3546
  %v3548 = vsel %vm3527, %v3544, %v3547
  %v3549 = vrot.slane %v3056, 3
  %v3550 = vrot.slane %v3058, 4
  %v3551 = vor.u32 %v3549, %v3550
  %v3552 = vrot.slane %v3067, 3
  %v3553 = vrot.slane %v3063, 4
  %v3554 = vor.u32 %v3552, %v3553
  %v3555 = vsel %vm3527, %v3551, %v3554
  %v3556 = vrot.slane %v3071, 3
  %v3557 = vrot.slane %v3073, 4
  %v3558 = vor.u32 %v3556, %v3557
  %v3559 = vrot.slane %v3082, 3
  %v3560 = vrot.slane %v3078, 4
  %v3561 = vor.u32 %v3559, %v3560
  %v3562 = vsel %vm3527, %v3558, %v3561
  %v3563 = vrot.slane %v3086, 3
  %v3564 = vrot.slane %v3088, 4
  %v3565 = vor.u32 %v3563, %v3564
  %v3566 = vrot.slane %v3097, 3
  %v3567 = vrot.slane %v3093, 4
  %v3568 = vor.u32 %v3566, %v3567
  %v3569 = vsel %vm3527, %v3565, %v3568
  %v3570 = vrot.slane %v3101, 3
  %v3571 = vrot.slane %v3103, 4
  %v3572 = vor.u32 %v3570, %v3571
  %v3573 = vrot.slane %v3112, 3
  %v3574 = vrot.slane %v3108, 4
  %v3575 = vor.u32 %v3573, %v3574
  %v3576 = vsel %vm3527, %v3572, %v3575
  %v3577 = vrot.slane %v3116, 3
  %v3578 = vrot.slane %v3118, 4
  %v3579 = vor.u32 %v3577, %v3578
  %v3580 = vrot.slane %v3127, 3
  %v3581 = vrot.slane %v3123, 4
  %v3582 = vor.u32 %v3580, %v3581
  %v3583 = vsel %vm3527, %v3579, %v3582
  %3584 = vrot.lane.b32.xlu0 %v3534, 70
  %v3585 = vpop.permute.xlu0 %3584
  %3586 = vrot.lane.b32.xlu0 %v3533, 70
  %v3587 = vpop.permute.xlu0 %3586
  %3588 = vrot.lane.b32.xlu0 %v3541, 70
  %v3589 = vpop.permute.xlu0 %3588
  %3590 = vrot.lane.b32.xlu0 %v3540, 70
  %v3591 = vpop.permute.xlu0 %3590
  %3592 = vrot.lane.b32.xlu0 %v3548, 70
  %v3593 = vpop.permute.xlu0 %3592
  %3594 = vrot.lane.b32.xlu0 %v3547, 70
  %v3595 = vpop.permute.xlu0 %3594
  %3596 = vrot.lane.b32.xlu0 %v3555, 70
  %v3597 = vpop.permute.xlu0 %3596
  %3598 = vrot.lane.b32.xlu0 %v3554, 70
  %v3599 = vpop.permute.xlu0 %3598
  %3600 = vrot.lane.b32.xlu0 %v3562, 70
  %v3601 = vpop.permute.xlu0 %3600
  %3602 = vrot.lane.b32.xlu0 %v3561, 70
  %v3603 = vpop.permute.xlu0 %3602
  %3604 = vrot.lane.b32.xlu0 %v3569, 70
  %v3605 = vpop.permute.xlu0 %3604
  %3606 = vrot.lane.b32.xlu0 %v3568, 70
  %v3607 = vpop.permute.xlu0 %3606
  %3608 = vrot.lane.b32.xlu0 %v3576, 70
  %v3609 = vpop.permute.xlu0 %3608
  %3610 = vrot.lane.b32.xlu0 %v3575, 70
  %v3611 = vpop.permute.xlu0 %3610
  %3612 = vrot.lane.b32.xlu0 %v3583, 70
  %v3613 = vpop.permute.xlu0 %3612
  %3614 = vrot.lane.b32.xlu0 %v3582, 70
  %v3615 = vpop.permute.xlu0 %3614
  %vm3616 = vcmask 80896
  %v3618 = vsel %vm3616, %v2993, %v3131
  %v3620 = vsel %vm3616, %v2994, %v3133
  %v3622 = vsel %vm3616, %v2995, %v3135
  %v3624 = vsel %vm3616, %v2996, %v3137
  %v3626 = vsel %vm3616, %v2997, %v3139
  %v3628 = vsel %vm3616, %v2998, %v3141
  %v3630 = vsel %vm3616, %v2999, %v3143
  %v3632 = vsel %vm3616, %v3000, %v3145
  %v3634 = vsel %vm3616, %v3001, %v3147
  %v3636 = vsel %vm3616, %v3002, %v3149
  %v3638 = vsel %vm3616, %v3003, %v3151
  %v3640 = vsel %vm3616, %v3004, %v3153
  %v3642 = vsel %vm3616, %v3005, %v3155
  %v3644 = vsel %vm3616, %v3006, %v3157
  %v3646 = vsel %vm3616, %v3007, %v3159
  %v3648 = vsel %vm3616, %v3008, %v3161
  %vm3649 = vcmask 162816
  %v3651 = vsel %vm3649, %v3618, %v3204
  %v3653 = vsel %vm3649, %v3620, %v3206
  %v3655 = vsel %vm3649, %v3622, %v3208
  %v3657 = vsel %vm3649, %v3624, %v3210
  %v3659 = vsel %vm3649, %v3626, %v3212
  %v3661 = vsel %vm3649, %v3628, %v3214
  %v3663 = vsel %vm3649, %v3630, %v3216
  %v3665 = vsel %vm3649, %v3632, %v3218
  %v3667 = vsel %vm3649, %v3634, %v3220
  %v3669 = vsel %vm3649, %v3636, %v3222
  %v3671 = vsel %vm3649, %v3638, %v3224
  %v3673 = vsel %vm3649, %v3640, %v3226
  %v3675 = vsel %vm3649, %v3642, %v3228
  %v3677 = vsel %vm3649, %v3644, %v3230
  %v3679 = vsel %vm3649, %v3646, %v3232
  %v3681 = vsel %vm3649, %v3648, %v3234
  %vm3682 = vcmask 244736
  %v3684 = vsel %vm3682, %v3651, %v3293
  %v3686 = vsel %vm3682, %v3653, %v3295
  %v3688 = vsel %vm3682, %v3655, %v3297
  %v3690 = vsel %vm3682, %v3657, %v3299
  %v3692 = vsel %vm3682, %v3659, %v3301
  %v3694 = vsel %vm3682, %v3661, %v3303
  %v3696 = vsel %vm3682, %v3663, %v3305
  %v3698 = vsel %vm3682, %v3665, %v3307
  %v3700 = vsel %vm3682, %v3667, %v3309
  %v3702 = vsel %vm3682, %v3669, %v3311
  %v3704 = vsel %vm3682, %v3671, %v3313
  %v3706 = vsel %vm3682, %v3673, %v3315
  %v3708 = vsel %vm3682, %v3675, %v3317
  %v3710 = vsel %vm3682, %v3677, %v3319
  %v3712 = vsel %vm3682, %v3679, %v3321
  %v3714 = vsel %vm3682, %v3681, %v3323
  %vm3715 = vcmask 326656
  %v3717 = vsel %vm3715, %v3684, %v3350
  %v3719 = vsel %vm3715, %v3686, %v3352
  %v3721 = vsel %vm3715, %v3688, %v3354
  %v3723 = vsel %vm3715, %v3690, %v3356
  %v3725 = vsel %vm3715, %v3692, %v3358
  %v3727 = vsel %vm3715, %v3694, %v3360
  %v3729 = vsel %vm3715, %v3696, %v3362
  %v3731 = vsel %vm3715, %v3698, %v3364
  %v3733 = vsel %vm3715, %v3700, %v3366
  %v3735 = vsel %vm3715, %v3702, %v3368
  %v3737 = vsel %vm3715, %v3704, %v3370
  %v3739 = vsel %vm3715, %v3706, %v3372
  %v3741 = vsel %vm3715, %v3708, %v3374
  %v3743 = vsel %vm3715, %v3710, %v3376
  %v3745 = vsel %vm3715, %v3712, %v3378
  %v3747 = vsel %vm3715, %v3714, %v3380
  %vm3748 = vcmask 408576
  %v3750 = vsel %vm3748, %v3717, %v3439
  %v3752 = vsel %vm3748, %v3719, %v3441
  %v3754 = vsel %vm3748, %v3721, %v3443
  %v3756 = vsel %vm3748, %v3723, %v3445
  %v3758 = vsel %vm3748, %v3725, %v3447
  %v3760 = vsel %vm3748, %v3727, %v3449
  %v3762 = vsel %vm3748, %v3729, %v3451
  %v3764 = vsel %vm3748, %v3731, %v3453
  %v3766 = vsel %vm3748, %v3733, %v3455
  %v3768 = vsel %vm3748, %v3735, %v3457
  %v3770 = vsel %vm3748, %v3737, %v3459
  %v3772 = vsel %vm3748, %v3739, %v3461
  %v3774 = vsel %vm3748, %v3741, %v3463
  %v3776 = vsel %vm3748, %v3743, %v3465
  %v3778 = vsel %vm3748, %v3745, %v3467
  %v3780 = vsel %vm3748, %v3747, %v3469
  %vm3781 = vcmask 490496
  %v3783 = vsel %vm3781, %v3750, %v3496
  %v3785 = vsel %vm3781, %v3752, %v3498
  %v3787 = vsel %vm3781, %v3754, %v3500
  %v3789 = vsel %vm3781, %v3756, %v3502
  %v3791 = vsel %vm3781, %v3758, %v3504
  %v3793 = vsel %vm3781, %v3760, %v3506
  %v3795 = vsel %vm3781, %v3762, %v3508
  %v3797 = vsel %vm3781, %v3764, %v3510
  %v3799 = vsel %vm3781, %v3766, %v3512
  %v3801 = vsel %vm3781, %v3768, %v3514
  %v3803 = vsel %vm3781, %v3770, %v3516
  %v3805 = vsel %vm3781, %v3772, %v3518
  %v3807 = vsel %vm3781, %v3774, %v3520
  %v3809 = vsel %vm3781, %v3776, %v3522
  %v3811 = vsel %vm3781, %v3778, %v3524
  %v3813 = vsel %vm3781, %v3780, %v3526
  %vm3814 = vcmask 572416
  %v3816 = vsel %vm3814, %v3783, %v3585
  %v3818 = vsel %vm3814, %v3785, %v3587
  %v3820 = vsel %vm3814, %v3787, %v3589
  %v3822 = vsel %vm3814, %v3789, %v3591
  %v3824 = vsel %vm3814, %v3791, %v3593
  %v3826 = vsel %vm3814, %v3793, %v3595
  %v3828 = vsel %vm3814, %v3795, %v3597
  %v3830 = vsel %vm3814, %v3797, %v3599
  %v3832 = vsel %vm3814, %v3799, %v3601
  %v3834 = vsel %vm3814, %v3801, %v3603
  %v3836 = vsel %vm3814, %v3803, %v3605
  %v3838 = vsel %vm3814, %v3805, %v3607
  %v3840 = vsel %vm3814, %v3807, %v3609
  %v3842 = vsel %vm3814, %v3809, %v3611
  %v3844 = vsel %vm3814, %v3811, %v3613
  %v3846 = vsel %vm3814, %v3813, %v3615
  %v3863 = vunpack.c.l.b16 %v3816
  %v3864 = vunpack.c.h.b16 %v3816
  %v3865 = vunpack.c.l.b16 %v3818
  %v3866 = vunpack.c.l.b16 %v3820
  %v3867 = vunpack.c.h.b16 %v3820
  %v3868 = vunpack.c.l.b16 %v3822
  %v3869 = vunpack.c.l.b16 %v3824
  %v3870 = vunpack.c.h.b16 %v3824
  %v3871 = vunpack.c.l.b16 %v3826
  %v3872 = vunpack.c.l.b16 %v3828
  %v3873 = vunpack.c.h.b16 %v3828
  %v3874 = vunpack.c.l.b16 %v3830
  %v3875 = vunpack.c.l.b16 %v3832
  %v3876 = vunpack.c.h.b16 %v3832
  %v3877 = vunpack.c.l.b16 %v3834
  %v3878 = vunpack.c.l.b16 %v3836
  %v3879 = vunpack.c.h.b16 %v3836
  %v3880 = vunpack.c.l.b16 %v3838
  %v3881 = vunpack.c.l.b16 %v3840
  %v3882 = vunpack.c.h.b16 %v3840
  %v3883 = vunpack.c.l.b16 %v3842
  %v3884 = vunpack.c.l.b16 %v3844
  %v3885 = vunpack.c.h.b16 %v3844
  %v3886 = vunpack.c.l.b16 %v3846
  %v3887 = vld [vmem:[%s3] sm:$0xf]
  %v3888 = vld [vmem:[%s3 + $0x4] sm:$0xf]
  %v3889 = vld [vmem:[%s3 + $0x8] sm:$0xf]
  %v3890 = vld [vmem:[%s3 + $0xc] sm:$0xf]
  %v3891 = vld [vmem:[%s3 + $0x10] sm:$0xf]
  %v3892 = vld [vmem:[%s3 + $0x14] sm:$0xf]
  %v3893 = vld [vmem:[%s3 + $0x18] sm:$0xf]
  %v3894 = vld [vmem:[%s3 + $0x1c] sm:$0xf]
  %v3895 = vld [vmem:[%s3 + $0x20] sm:$0xf]
  %v3896 = vld [vmem:[%s3 + $0x24] sm:$0xf]
  %v3897 = vld [vmem:[%s4] sm:$0x1]
  %v3899 = vlaneseq
  %v3900 = vshrl.u32 %v3899, 7
  %v3901 = vsub.s32 0, %v3900
  %v3902 = vrot.slane %v3897, %v3901
  %v3904 = vpack.c.b16 %v3864, %v3863
  %v3905 = vpack.c.b16 %v3866, %v3865
  %v3906 = vpack.c.b16 %v3868, %v3867
  %v3907 = vpack.c.b16 %v3870, %v3869
  %v3908 = vpack.c.b16 %v3872, %v3871
  %v3909 = vpack.c.b16 %v3874, %v3873
  %v3910 = vpack.c.b16 %v3876, %v3875
  %v3911 = vpack.c.b16 %v3878, %v3877
  %v3912 = vpack.c.b16 %v3880, %v3879
  %v3913 = vpack.c.b16 %v3882, %v3881
  %v3914 = vpack.c.b16 %v3884, %v3883
  %v3915 = vpack.c.b16 %v3886, %v3885
  %v3926 = vunpack.c.l.b16 %v3887
  %v3927 = vunpack.c.l.b16 %v3888
  %v3928 = vunpack.c.l.b16 %v3889
  %v3929 = vunpack.c.l.b16 %v3890
  %v3930 = vunpack.c.l.b16 %v3891
  %v3931 = vunpack.c.l.b16 %v3892
  %v3932 = vunpack.c.l.b16 %v3893
  %v3933 = vunpack.c.l.b16 %v3894
  %v3934 = vunpack.c.l.b16 %v3895
  %v3935 = vunpack.c.l.b16 %v3896
  %v3936 = vpack.c.b16 %v3927, %v3926
  %v3937 = vpack.c.b16 %v3929, %v3928
  %v3938 = vpack.c.b16 %v3931, %v3930
  %v3939 = vpack.c.b16 %v3933, %v3932
  %v3940 = vpack.c.b16 %v3935, %v3934
  %vm3946 = vcmask 654336
  %v3948 = vsel %vm3946, %v3904, 0
  %v3951 = vsel %vm3946, %v3905, 0
  %v3954 = vsel %vm3946, %v3906, 0
  %v3957 = vsel %vm3946, %v3907, 0
  %v3960 = vsel %vm3946, %v3908, 0
  %v3963 = vsel %vm3946, %v3909, 0
  %v3966 = vsel %vm3946, %v3910, 0
  %v3969 = vsel %vm3946, %v3911, 0
  %v3972 = vsel %vm3946, %v3912, 0
  %v3975 = vsel %vm3946, %v3913, 0
  %v3978 = vsel %vm3946, %v3914, 0
  %v3981 = vsel %vm3946, %v3915, 0
  %3983 = vmatprep.subr.bf16.mxu0 0
  %3984 = vmatpush1.bf16.msra.mxu0 %v3936
  %3985 = vmatprep.subr.bf16.mxu0 0
  %3986 = vmatpush1.bf16.msra.mxu0 %v3937
  %3987 = vmatprep.subr.bf16.mxu0 0
  %3988 = vmatpush1.bf16.msra.mxu0 %v3938
  %3989 = vmatprep.subr.bf16.mxu0 0
  %3990 = vmatpush1.bf16.msra.mxu0 %v3939
  %3991 = vmatprep.subr.bf16.mxu0 0
  %3992 = vmatpush1.bf16.msra.mxu0 %v3940
  %3993 = vmatprep.subr.bf16.mxu0 0
  %3994 = vmatpush1.bf16.msra.mxu0 0
  %3995 = vmatprep.subr.bf16.mxu0 0
  %3996 = vmatpush1.bf16.msra.mxu0 0
  %3997 = vmatprep.subr.bf16.mxu0 0
  %3998 = vmatpush1.bf16.msra.mxu0 0
  %3999 = vmatprep.subr.bf16.mxu0 0
  %4000 = vmatpush1.bf16.msra.mxu0 0
  %4001 = vmatprep.subr.bf16.mxu0 0
  %4002 = vmatpush1.bf16.msra.mxu0 0
  %4003 = vmatprep.subr.bf16.mxu0 0
  %4004 = vmatpush1.bf16.msra.mxu0 0
  %4005 = vmatprep.subr.bf16.mxu0 0
  %4006 = vmatpush1.bf16.msra.mxu0 0
  %4007 = vmatprep.subr.bf16.mxu0 0
  %4008 = vmatpush1.bf16.msra.mxu0 0
  %4009 = vmatprep.subr.bf16.mxu0 0
  %4010 = vmatpush1.bf16.msra.mxu0 0
  %4011 = vmatprep.subr.bf16.mxu0 0
  %4012 = vmatpush1.bf16.msra.mxu0 0
  %4013 = vmatprep.subr.bf16.mxu0 0
  %4014 = vmatpush1.bf16.msra.mxu0 0
  %4015 = vmatprep.mubr.bf16.mxu0 0
  %4016 = vmatmul.mubr.bf16.gmra.mrb[0].mxu0 %v3948
  %v4017 = vpop.f32.mrb[0].mxu0
  %v4018 = vadd.f32 %v3902, %v4017
  %v4019 = vpop.f32.mrb[0].mxu0
  %v4020 = vpop.f32.mrb[0].mxu0
  %v4021 = vadd.f32 %v3902, %v4020
  %v4022 = vpop.f32.mrb[0].mxu0
  %4023 = vmatprep.mubr.bf16.mxu0 0
  %4024 = vmatmul.mubr.bf16.gmra.mrb[0].mxu0 %v3951
  %v4025 = vpop.f32.mrb[0].mxu0
  %v4026 = vadd.f32 %v3902, %v4025
  %v4027 = vpop.f32.mrb[0].mxu0
  %v4028 = vpop.f32.mrb[0].mxu0
  %v4029 = vadd.f32 %v3902, %v4028
  %v4030 = vpop.f32.mrb[0].mxu0
  %4031 = vmatprep.mubr.bf16.mxu0 0
  %4032 = vmatmul.mubr.bf16.gmra.mrb[0].mxu0 %v3954
  %v4033 = vpop.f32.mrb[0].mxu0
  %v4034 = vadd.f32 %v3902, %v4033
  %v4035 = vpop.f32.mrb[0].mxu0
  %v4036 = vpop.f32.mrb[0].mxu0
  %v4037 = vadd.f32 %v3902, %v4036
  %v4038 = vpop.f32.mrb[0].mxu0
  %4039 = vmatprep.mubr.bf16.mxu0 0
  %4040 = vmatmul.mubr.bf16.gmra.mrb[0].mxu0 %v3957
  %v4041 = vpop.f32.mrb[0].mxu0
  %v4042 = vadd.f32 %v3902, %v4041
  %v4043 = vpop.f32.mrb[0].mxu0
  %v4044 = vpop.f32.mrb[0].mxu0
  %v4045 = vadd.f32 %v3902, %v4044
  %v4046 = vpop.f32.mrb[0].mxu0
  %4047 = vmatprep.mubr.bf16.mxu0 0
  %4048 = vmatmul.mubr.bf16.gmra.mrb[0].mxu0 %v3960
  %v4049 = vpop.f32.mrb[0].mxu0
  %v4050 = vadd.f32 %v3902, %v4049
  %v4051 = vpop.f32.mrb[0].mxu0
  %v4052 = vpop.f32.mrb[0].mxu0
  %v4053 = vadd.f32 %v3902, %v4052
  %v4054 = vpop.f32.mrb[0].mxu0
  %4055 = vmatprep.mubr.bf16.mxu0 0
  %4056 = vmatmul.mubr.bf16.gmra.mrb[0].mxu0 %v3963
  %v4057 = vpop.f32.mrb[0].mxu0
  %v4058 = vadd.f32 %v3902, %v4057
  %v4059 = vpop.f32.mrb[0].mxu0
  %v4060 = vpop.f32.mrb[0].mxu0
  %v4061 = vadd.f32 %v3902, %v4060
  %v4062 = vpop.f32.mrb[0].mxu0
  %4063 = vmatprep.mubr.bf16.mxu0 0
  %4064 = vmatmul.mubr.bf16.gmra.mrb[0].mxu0 %v3966
  %v4065 = vpop.f32.mrb[0].mxu0
  %v4066 = vadd.f32 %v3902, %v4065
  %v4067 = vpop.f32.mrb[0].mxu0
  %v4068 = vpop.f32.mrb[0].mxu0
  %v4069 = vadd.f32 %v3902, %v4068
  %v4070 = vpop.f32.mrb[0].mxu0
  %4071 = vmatprep.mubr.bf16.mxu0 0
  %4072 = vmatmul.mubr.bf16.gmra.mrb[0].mxu0 %v3969
  %v4073 = vpop.f32.mrb[0].mxu0
  %v4074 = vadd.f32 %v3902, %v4073
  %v4075 = vpop.f32.mrb[0].mxu0
  %v4076 = vpop.f32.mrb[0].mxu0
  %v4077 = vadd.f32 %v3902, %v4076
  %v4078 = vpop.f32.mrb[0].mxu0
  %4079 = vmatprep.mubr.bf16.mxu0 0
  %4080 = vmatmul.mubr.bf16.gmra.mrb[0].mxu0 %v3972
  %v4081 = vpop.f32.mrb[0].mxu0
  %v4082 = vadd.f32 %v3902, %v4081
  %v4083 = vpop.f32.mrb[0].mxu0
  %v4084 = vpop.f32.mrb[0].mxu0
  %v4085 = vadd.f32 %v3902, %v4084
  %v4086 = vpop.f32.mrb[0].mxu0
  %4087 = vmatprep.mubr.bf16.mxu0 0
  %4088 = vmatmul.mubr.bf16.gmra.mrb[0].mxu0 %v3975
  %v4089 = vpop.f32.mrb[0].mxu0
  %v4090 = vadd.f32 %v3902, %v4089
  %v4091 = vpop.f32.mrb[0].mxu0
  %v4092 = vpop.f32.mrb[0].mxu0
  %v4093 = vadd.f32 %v3902, %v4092
  %v4094 = vpop.f32.mrb[0].mxu0
  %4095 = vmatprep.mubr.bf16.mxu0 0
  %4096 = vmatmul.mubr.bf16.gmra.mrb[0].mxu0 %v3978
  %v4097 = vpop.f32.mrb[0].mxu0
  %v4098 = vadd.f32 %v3902, %v4097
  %v4099 = vpop.f32.mrb[0].mxu0
  %v4100 = vpop.f32.mrb[0].mxu0
  %v4101 = vadd.f32 %v3902, %v4100
  %v4102 = vpop.f32.mrb[0].mxu0
  %4103 = vmatprep.mubr.bf16.mxu0 0
  %4104 = vmatmul.mubr.bf16.gmra.mrb[0].mxu0 %v3981
  %v4105 = vpop.f32.mrb[0].mxu0
  %v4106 = vadd.f32 %v3902, %v4105
  %v4107 = vpop.f32.mrb[0].mxu0
  %v4108 = vpop.f32.mrb[0].mxu0
  %v4109 = vadd.f32 %v3902, %v4108
  %v4110 = vpop.f32.mrb[0].mxu0
  %4111 = vdwg.mxu0
  %v4112 = vmax.f32 %v4018, 0.0
  %v4113 = vmax.f32 %v4021, 0.0
  %v4114 = vmax.f32 %v4026, 0.0
  %v4115 = vmax.f32 %v4029, 0.0
  %v4116 = vmax.f32 %v4034, 0.0
  %v4117 = vmax.f32 %v4037, 0.0
  %v4118 = vmax.f32 %v4042, 0.0
  %v4119 = vmax.f32 %v4045, 0.0
  %v4120 = vmax.f32 %v4050, 0.0
  %v4121 = vmax.f32 %v4053, 0.0
  %v4122 = vmax.f32 %v4058, 0.0
  %v4123 = vmax.f32 %v4061, 0.0
  %v4124 = vmax.f32 %v4066, 0.0
  %v4125 = vmax.f32 %v4069, 0.0
  %v4126 = vmax.f32 %v4074, 0.0
  %v4127 = vmax.f32 %v4077, 0.0
  %v4128 = vmax.f32 %v4082, 0.0
  %v4129 = vmax.f32 %v4085, 0.0
  %v4130 = vmax.f32 %v4090, 0.0
  %v4131 = vmax.f32 %v4093, 0.0
  %v4132 = vmax.f32 %v4098, 0.0
  %v4133 = vmax.f32 %v4101, 0.0
  %v4134 = vmax.f32 %v4106, 0.0
  %v4135 = vmax.f32 %v4109, 0.0
  %v4144 = vrot.slane %v4112, 1
  %v4145 = vrot.slane %v4115, 1
  %v4146 = vrot.slane %v4118, 1
  %v4147 = vrot.slane %v4121, 1
  %v4148 = vrot.slane %v4124, 1
  %v4149 = vrot.slane %v4127, 1
  %v4150 = vrot.slane %v4130, 1
  %v4151 = vrot.slane %v4133, 1
  %v4160 = vrot.slane %v4112, 2
  %v4161 = vrot.slane %v4115, 2
  %v4162 = vrot.slane %v4118, 2
  %v4163 = vrot.slane %v4121, 2
  %v4164 = vrot.slane %v4124, 2
  %v4165 = vrot.slane %v4127, 2
  %v4166 = vrot.slane %v4130, 2
  %v4167 = vrot.slane %v4133, 2
  %v4176 = vrot.slane %v4112, 3
  %v4177 = vrot.slane %v4115, 3
  %v4178 = vrot.slane %v4118, 3
  %v4179 = vrot.slane %v4121, 3
  %v4180 = vrot.slane %v4124, 3
  %v4181 = vrot.slane %v4127, 3
  %v4182 = vrot.slane %v4130, 3
  %v4183 = vrot.slane %v4133, 3
  %v4200 = vrot.slane %v4113, 4
  %v4201 = vrot.slane %v4116, 4
  %v4202 = vrot.slane %v4119, 4
  %v4203 = vrot.slane %v4122, 4
  %v4204 = vrot.slane %v4125, 4
  %v4205 = vrot.slane %v4128, 4
  %v4206 = vrot.slane %v4131, 4
  %v4207 = vrot.slane %v4134, 4
  %v4216 = vrot.slane %v4113, 5
  %v4217 = vrot.slane %v4116, 5
  %v4218 = vrot.slane %v4119, 5
  %v4219 = vrot.slane %v4122, 5
  %v4220 = vrot.slane %v4125, 5
  %v4221 = vrot.slane %v4128, 5
  %v4222 = vrot.slane %v4131, 5
  %v4223 = vrot.slane %v4134, 5
  %v4232 = vrot.slane %v4113, 6
  %v4233 = vrot.slane %v4116, 6
  %v4234 = vrot.slane %v4119, 6
  %v4235 = vrot.slane %v4122, 6
  %v4236 = vrot.slane %v4125, 6
  %v4237 = vrot.slane %v4128, 6
  %v4238 = vrot.slane %v4131, 6
  %v4239 = vrot.slane %v4134, 6
  %v4248 = vrot.slane %v4113, 7
  %v4249 = vrot.slane %v4116, 7
  %v4250 = vrot.slane %v4119, 7
  %v4251 = vrot.slane %v4122, 7
  %v4252 = vrot.slane %v4125, 7
  %v4253 = vrot.slane %v4128, 7
  %v4254 = vrot.slane %v4131, 7
  %v4255 = vrot.slane %v4134, 7
  %v4272 = vrot.slane %v4114, 1
  %v4273 = vrot.slane %v4117, 1
  %v4274 = vrot.slane %v4120, 1
  %v4275 = vrot.slane %v4123, 1
  %v4276 = vrot.slane %v4126, 1
  %v4277 = vrot.slane %v4129, 1
  %v4278 = vrot.slane %v4132, 1
  %v4279 = vrot.slane %v4135, 1
  %vm4288 = vcmask 1040384
  %v4289 = vsel %vm4288, %v4112, %v4144
  %v4290 = vsel %vm4288, %v4115, %v4145
  %v4291 = vsel %vm4288, %v4118, %v4146
  %v4292 = vsel %vm4288, %v4121, %v4147
  %v4293 = vsel %vm4288, %v4124, %v4148
  %v4294 = vsel %vm4288, %v4127, %v4149
  %v4295 = vsel %vm4288, %v4130, %v4150
  %v4296 = vsel %vm4288, %v4133, %v4151
  %vm4297 = vcmask 1041408
  %v4298 = vsel %vm4297, %v4289, %v4160
  %v4299 = vsel %vm4297, %v4290, %v4161
  %v4300 = vsel %vm4297, %v4291, %v4162
  %v4301 = vsel %vm4297, %v4292, %v4163
  %v4302 = vsel %vm4297, %v4293, %v4164
  %v4303 = vsel %vm4297, %v4294, %v4165
  %v4304 = vsel %vm4297, %v4295, %v4166
  %v4305 = vsel %vm4297, %v4296, %v4167
  %vm4306 = vcmask 1042432
  %v4307 = vsel %vm4306, %v4298, %v4176
  %v4308 = vsel %vm4306, %v4299, %v4177
  %v4309 = vsel %vm4306, %v4300, %v4178
  %v4310 = vsel %vm4306, %v4301, %v4179
  %v4311 = vsel %vm4306, %v4302, %v4180
  %v4312 = vsel %vm4306, %v4303, %v4181
  %v4313 = vsel %vm4306, %v4304, %v4182
  %v4314 = vsel %vm4306, %v4305, %v4183
  %vm4315 = vcmask 1043456
  %v4316 = vsel %vm4315, %v4307, %v4200
  %v4317 = vsel %vm4315, %v4308, %v4201
  %v4318 = vsel %vm4315, %v4309, %v4202
  %v4319 = vsel %vm4315, %v4310, %v4203
  %v4320 = vsel %vm4315, %v4311, %v4204
  %v4321 = vsel %vm4315, %v4312, %v4205
  %v4322 = vsel %vm4315, %v4313, %v4206
  %v4323 = vsel %vm4315, %v4314, %v4207
  %vm4324 = vcmask 1044480
  %v4325 = vsel %vm4324, %v4316, %v4216
  %v4326 = vsel %vm4324, %v4317, %v4217
  %v4327 = vsel %vm4324, %v4318, %v4218
  %v4328 = vsel %vm4324, %v4319, %v4219
  %v4329 = vsel %vm4324, %v4320, %v4220
  %v4330 = vsel %vm4324, %v4321, %v4221
  %v4331 = vsel %vm4324, %v4322, %v4222
  %v4332 = vsel %vm4324, %v4323, %v4223
  %vm4333 = vcmask 1045504
  %v4334 = vsel %vm4333, %v4325, %v4232
  %v4335 = vsel %vm4333, %v4326, %v4233
  %v4336 = vsel %vm4333, %v4327, %v4234
  %v4337 = vsel %vm4333, %v4328, %v4235
  %v4338 = vsel %vm4333, %v4329, %v4236
  %v4339 = vsel %vm4333, %v4330, %v4237
  %v4340 = vsel %vm4333, %v4331, %v4238
  %v4341 = vsel %vm4333, %v4332, %v4239
  %vm4342 = vcmask 1046528
  %v4343 = vsel %vm4342, %v4334, %v4248
  %v4344 = vsel %vm4342, %v4335, %v4249
  %v4345 = vsel %vm4342, %v4336, %v4250
  %v4346 = vsel %vm4342, %v4337, %v4251
  %v4347 = vsel %vm4342, %v4338, %v4252
  %v4348 = vsel %vm4342, %v4339, %v4253
  %v4349 = vsel %vm4342, %v4340, %v4254
  %v4350 = vsel %vm4342, %v4341, %v4255
  %v4351 = vsel %vm4288, %v4114, %v4272
  %v4352 = vsel %vm4288, %v4117, %v4273
  %v4353 = vsel %vm4288, %v4120, %v4274
  %v4354 = vsel %vm4288, %v4123, %v4275
  %v4355 = vsel %vm4288, %v4126, %v4276
  %v4356 = vsel %vm4288, %v4129, %v4277
  %v4357 = vsel %vm4288, %v4132, %v4278
  %v4358 = vsel %vm4288, %v4135, %v4279
  %v4359 = vrot.slane %v4112, 4
  %v4360 = vrot.slane %v4115, 4
  %v4361 = vrot.slane %v4118, 4
  %v4362 = vrot.slane %v4121, 4
  %v4363 = vrot.slane %v4124, 4
  %v4364 = vrot.slane %v4127, 4
  %v4365 = vrot.slane %v4130, 4
  %v4366 = vrot.slane %v4133, 4
  %v4375 = vrot.slane %v4114, 2
  %v4376 = vrot.slane %v4117, 2
  %v4377 = vrot.slane %v4120, 2
  %v4378 = vrot.slane %v4123, 2
  %v4379 = vrot.slane %v4126, 2
  %v4380 = vrot.slane %v4129, 2
  %v4381 = vrot.slane %v4132, 2
  %v4382 = vrot.slane %v4135, 2
  %v4391 = vsel %vm4288, %v4144, %v4160
  %v4392 = vsel %vm4288, %v4145, %v4161
  %v4393 = vsel %vm4288, %v4146, %v4162
  %v4394 = vsel %vm4288, %v4147, %v4163
  %v4395 = vsel %vm4288, %v4148, %v4164
  %v4396 = vsel %vm4288, %v4149, %v4165
  %v4397 = vsel %vm4288, %v4150, %v4166
  %v4398 = vsel %vm4288, %v4151, %v4167
  %v4399 = vsel %vm4297, %v4391, %v4176
  %v4400 = vsel %vm4297, %v4392, %v4177
  %v4401 = vsel %vm4297, %v4393, %v4178
  %v4402 = vsel %vm4297, %v4394, %v4179
  %v4403 = vsel %vm4297, %v4395, %v4180
  %v4404 = vsel %vm4297, %v4396, %v4181
  %v4405 = vsel %vm4297, %v4397, %v4182
  %v4406 = vsel %vm4297, %v4398, %v4183
  %v4407 = vsel %vm4306, %v4399, %v4359
  %v4408 = vsel %vm4306, %v4400, %v4360
  %v4409 = vsel %vm4306, %v4401, %v4361
  %v4410 = vsel %vm4306, %v4402, %v4362
  %v4411 = vsel %vm4306, %v4403, %v4363
  %v4412 = vsel %vm4306, %v4404, %v4364
  %v4413 = vsel %vm4306, %v4405, %v4365
  %v4414 = vsel %vm4306, %v4406, %v4366
  %v4415 = vsel %vm4315, %v4407, %v4216
  %v4416 = vsel %vm4315, %v4408, %v4217
  %v4417 = vsel %vm4315, %v4409, %v4218
  %v4418 = vsel %vm4315, %v4410, %v4219
  %v4419 = vsel %vm4315, %v4411, %v4220
  %v4420 = vsel %vm4315, %v4412, %v4221
  %v4421 = vsel %vm4315, %v4413, %v4222
  %v4422 = vsel %vm4315, %v4414, %v4223
  %v4423 = vsel %vm4324, %v4415, %v4232
  %v4424 = vsel %vm4324, %v4416, %v4233
  %v4425 = vsel %vm4324, %v4417, %v4234
  %v4426 = vsel %vm4324, %v4418, %v4235
  %v4427 = vsel %vm4324, %v4419, %v4236
  %v4428 = vsel %vm4324, %v4420, %v4237
  %v4429 = vsel %vm4324, %v4421, %v4238
  %v4430 = vsel %vm4324, %v4422, %v4239
  %v4431 = vsel %vm4333, %v4423, %v4248
  %v4432 = vsel %vm4333, %v4424, %v4249
  %v4433 = vsel %vm4333, %v4425, %v4250
  %v4434 = vsel %vm4333, %v4426, %v4251
  %v4435 = vsel %vm4333, %v4427, %v4252
  %v4436 = vsel %vm4333, %v4428, %v4253
  %v4437 = vsel %vm4333, %v4429, %v4254
  %v4438 = vsel %vm4333, %v4430, %v4255
  %v4439 = vsel %vm4342, %v4431, %v4113
  %v4440 = vsel %vm4342, %v4432, %v4116
  %v4441 = vsel %vm4342, %v4433, %v4119
  %v4442 = vsel %vm4342, %v4434, %v4122
  %v4443 = vsel %vm4342, %v4435, %v4125
  %v4444 = vsel %vm4342, %v4436, %v4128
  %v4445 = vsel %vm4342, %v4437, %v4131
  %v4446 = vsel %vm4342, %v4438, %v4134
  %v4447 = vsel %vm4288, %v4272, %v4375
  %v4448 = vsel %vm4288, %v4273, %v4376
  %v4449 = vsel %vm4288, %v4274, %v4377
  %v4450 = vsel %vm4288, %v4275, %v4378
  %v4451 = vsel %vm4288, %v4276, %v4379
  %v4452 = vsel %vm4288, %v4277, %v4380
  %v4453 = vsel %vm4288, %v4278, %v4381
  %v4454 = vsel %vm4288, %v4279, %v4382
  %v4455 = vmax.f32 %v4343, %v4439
  %v4456 = vmax.f32 %v4351, %v4447
  %v4457 = vmax.f32 %v4344, %v4440
  %v4458 = vmax.f32 %v4352, %v4448
  %v4459 = vmax.f32 %v4345, %v4441
  %v4460 = vmax.f32 %v4353, %v4449
  %v4461 = vmax.f32 %v4346, %v4442
  %v4462 = vmax.f32 %v4354, %v4450
  %v4463 = vmax.f32 %v4347, %v4443
  %v4464 = vmax.f32 %v4355, %v4451
  %v4465 = vmax.f32 %v4348, %v4444
  %v4466 = vmax.f32 %v4356, %v4452
  %v4467 = vmax.f32 %v4349, %v4445
  %v4468 = vmax.f32 %v4357, %v4453
  %v4469 = vmax.f32 %v4350, %v4446
  %v4470 = vmax.f32 %v4358, %v4454
  %v4471 = vpack.c.bf16 %v4456, %v4455
  %v4472 = vpack.c.bf16 %v4458, %v4457
  %v4473 = vpack.c.bf16 %v4460, %v4459
  %v4474 = vpack.c.bf16 %v4462, %v4461
  %v4475 = vpack.c.bf16 %v4464, %v4463
  %v4476 = vpack.c.bf16 %v4466, %v4465
  %v4477 = vpack.c.bf16 %v4468, %v4467
  %v4478 = vpack.c.bf16 %v4470, %v4469
  %v4481 = vsel %vm4324, %v4471, 0
  %v4483 = vsel %vm4324, %v4472, 0
  %v4485 = vsel %vm4324, %v4473, 0
  %v4487 = vsel %vm4324, %v4474, 0
  %v4489 = vsel %vm4324, %v4475, 0
  %v4491 = vsel %vm4324, %v4476, 0
  %v4493 = vsel %vm4324, %v4477, 0
  %v4495 = vsel %vm4324, %v4478, 0
  %v4496 = vshrl.u32 %v4481, 16
  %v4498 = vshll.u32 %v4481, 16
  %v4500 = vrot.slane %v4498, 1
  %v4501 = vor.u32 %v4496, %v4500
  %v4502 = vshrl.u32 %v4483, 16
  %v4504 = vshll.u32 %v4483, 16
  %v4506 = vrot.slane %v4504, 1
  %v4507 = vor.u32 %v4502, %v4506
  %v4508 = vshrl.u32 %v4485, 16
  %v4510 = vshll.u32 %v4485, 16
  %v4512 = vrot.slane %v4510, 1
  %v4513 = vor.u32 %v4508, %v4512
  %v4514 = vshrl.u32 %v4487, 16
  %v4516 = vshll.u32 %v4487, 16
  %v4518 = vrot.slane %v4516, 1
  %v4519 = vor.u32 %v4514, %v4518
  %v4520 = vshrl.u32 %v4489, 16
  %v4522 = vshll.u32 %v4489, 16
  %v4524 = vrot.slane %v4522, 1
  %v4525 = vor.u32 %v4520, %v4524
  %v4526 = vshrl.u32 %v4491, 16
  %v4528 = vshll.u32 %v4491, 16
  %v4530 = vrot.slane %v4528, 1
  %v4531 = vor.u32 %v4526, %v4530
  %v4532 = vshrl.u32 %v4493, 16
  %v4534 = vshll.u32 %v4493, 16
  %v4536 = vrot.slane %v4534, 1
  %v4537 = vor.u32 %v4532, %v4536
  %v4538 = vshrl.u32 %v4495, 16
  %v4540 = vshll.u32 %v4495, 16
  %v4542 = vrot.slane %v4540, 1
  %v4543 = vor.u32 %v4538, %v4542
  %4544 = vrot.lane.b32.xlu0 %v4501, 10
  %v4545 = vpop.permute.xlu0 %4544
  %4546 = vrot.lane.b32.xlu0 %v4507, 10
  %v4547 = vpop.permute.xlu0 %4546
  %4548 = vrot.lane.b32.xlu0 %v4513, 10
  %v4549 = vpop.permute.xlu0 %4548
  %4550 = vrot.lane.b32.xlu0 %v4519, 10
  %v4551 = vpop.permute.xlu0 %4550
  %4552 = vrot.lane.b32.xlu0 %v4525, 10
  %v4553 = vpop.permute.xlu0 %4552
  %4554 = vrot.lane.b32.xlu0 %v4531, 10
  %v4555 = vpop.permute.xlu0 %4554
  %4556 = vrot.lane.b32.xlu0 %v4537, 10
  %v4557 = vpop.permute.xlu0 %4556
  %4558 = vrot.lane.b32.xlu0 %v4543, 10
  %v4559 = vpop.permute.xlu0 %4558
  %v4568 = vrot.slane %v4481, 1
  %v4569 = vrot.slane %v4483, 1
  %v4570 = vrot.slane %v4485, 1
  %v4571 = vrot.slane %v4487, 1
  %v4572 = vrot.slane %v4489, 1
  %v4573 = vrot.slane %v4491, 1
  %v4574 = vrot.slane %v4493, 1
  %v4575 = vrot.slane %v4495, 1
  %4576 = vrot.lane.b32.xlu0 %v4568, 20
  %v4577 = vpop.permute.xlu0 %4576
  %4578 = vrot.lane.b32.xlu0 %v4569, 20
  %v4579 = vpop.permute.xlu0 %4578
  %4580 = vrot.lane.b32.xlu0 %v4570, 20
  %v4581 = vpop.permute.xlu0 %4580
  %4582 = vrot.lane.b32.xlu0 %v4571, 20
  %v4583 = vpop.permute.xlu0 %4582
  %4584 = vrot.lane.b32.xlu0 %v4572, 20
  %v4585 = vpop.permute.xlu0 %4584
  %4586 = vrot.lane.b32.xlu0 %v4573, 20
  %v4587 = vpop.permute.xlu0 %4586
  %4588 = vrot.lane.b32.xlu0 %v4574, 20
  %v4589 = vpop.permute.xlu0 %4588
  %4590 = vrot.lane.b32.xlu0 %v4575, 20
  %v4591 = vpop.permute.xlu0 %4590
  %v4592 = vrot.slane %v4496, 1
  %v4593 = vrot.slane %v4498, 2
  %v4594 = vor.u32 %v4592, %v4593
  %v4595 = vrot.slane %v4502, 1
  %v4596 = vrot.slane %v4504, 2
  %v4597 = vor.u32 %v4595, %v4596
  %v4598 = vrot.slane %v4508, 1
  %v4599 = vrot.slane %v4510, 2
  %v4600 = vor.u32 %v4598, %v4599
  %v4601 = vrot.slane %v4514, 1
  %v4602 = vrot.slane %v4516, 2
  %v4603 = vor.u32 %v4601, %v4602
  %v4604 = vrot.slane %v4520, 1
  %v4605 = vrot.slane %v4522, 2
  %v4606 = vor.u32 %v4604, %v4605
  %v4607 = vrot.slane %v4526, 1
  %v4608 = vrot.slane %v4528, 2
  %v4609 = vor.u32 %v4607, %v4608
  %v4610 = vrot.slane %v4532, 1
  %v4611 = vrot.slane %v4534, 2
  %v4612 = vor.u32 %v4610, %v4611
  %v4613 = vrot.slane %v4538, 1
  %v4614 = vrot.slane %v4540, 2
  %v4615 = vor.u32 %v4613, %v4614
  %4616 = vrot.lane.b32.xlu0 %v4594, 30
  %v4617 = vpop.permute.xlu0 %4616
  %4618 = vrot.lane.b32.xlu0 %v4597, 30
  %v4619 = vpop.permute.xlu0 %4618
  %4620 = vrot.lane.b32.xlu0 %v4600, 30
  %v4621 = vpop.permute.xlu0 %4620
  %4622 = vrot.lane.b32.xlu0 %v4603, 30
  %v4623 = vpop.permute.xlu0 %4622
  %4624 = vrot.lane.b32.xlu0 %v4606, 30
  %v4625 = vpop.permute.xlu0 %4624
  %4626 = vrot.lane.b32.xlu0 %v4609, 30
  %v4627 = vpop.permute.xlu0 %4626
  %4628 = vrot.lane.b32.xlu0 %v4612, 30
  %v4629 = vpop.permute.xlu0 %4628
  %4630 = vrot.lane.b32.xlu0 %v4615, 30
  %v4631 = vpop.permute.xlu0 %4630
  %v4632 = vrot.slane %v4481, 2
  %v4633 = vrot.slane %v4483, 2
  %v4634 = vrot.slane %v4485, 2
  %v4635 = vrot.slane %v4487, 2
  %v4636 = vrot.slane %v4489, 2
  %v4637 = vrot.slane %v4491, 2
  %v4638 = vrot.slane %v4493, 2
  %v4639 = vrot.slane %v4495, 2
  %4640 = vrot.lane.b32.xlu0 %v4632, 40
  %v4641 = vpop.permute.xlu0 %4640
  %4642 = vrot.lane.b32.xlu0 %v4633, 40
  %v4643 = vpop.permute.xlu0 %4642
  %4644 = vrot.lane.b32.xlu0 %v4634, 40
  %v4645 = vpop.permute.xlu0 %4644
  %4646 = vrot.lane.b32.xlu0 %v4635, 40
  %v4647 = vpop.permute.xlu0 %4646
  %4648 = vrot.lane.b32.xlu0 %v4636, 40
  %v4649 = vpop.permute.xlu0 %4648
  %4650 = vrot.lane.b32.xlu0 %v4637, 40
  %v4651 = vpop.permute.xlu0 %4650
  %4652 = vrot.lane.b32.xlu0 %v4638, 40
  %v4653 = vpop.permute.xlu0 %4652
  %4654 = vrot.lane.b32.xlu0 %v4639, 40
  %v4655 = vpop.permute.xlu0 %4654
  %v4657 = vsel %vm3616, %v4481, %v4545
  %v4659 = vsel %vm3616, %v4483, %v4547
  %v4661 = vsel %vm3616, %v4485, %v4549
  %v4663 = vsel %vm3616, %v4487, %v4551
  %v4665 = vsel %vm3616, %v4489, %v4553
  %v4667 = vsel %vm3616, %v4491, %v4555
  %v4669 = vsel %vm3616, %v4493, %v4557
  %v4671 = vsel %vm3616, %v4495, %v4559
  %v4673 = vsel %vm3649, %v4657, %v4577
  %v4675 = vsel %vm3649, %v4659, %v4579
  %v4677 = vsel %vm3649, %v4661, %v4581
  %v4679 = vsel %vm3649, %v4663, %v4583
  %v4681 = vsel %vm3649, %v4665, %v4585
  %v4683 = vsel %vm3649, %v4667, %v4587
  %v4685 = vsel %vm3649, %v4669, %v4589
  %v4687 = vsel %vm3649, %v4671, %v4591
  %v4689 = vsel %vm3682, %v4673, %v4617
  %v4691 = vsel %vm3682, %v4675, %v4619
  %v4693 = vsel %vm3682, %v4677, %v4621
  %v4695 = vsel %vm3682, %v4679, %v4623
  %v4697 = vsel %vm3682, %v4681, %v4625
  %v4699 = vsel %vm3682, %v4683, %v4627
  %v4701 = vsel %vm3682, %v4685, %v4629
  %v4703 = vsel %vm3682, %v4687, %v4631
  %v4705 = vsel %vm3715, %v4689, %v4641
  %v4707 = vsel %vm3715, %v4691, %v4643
  %v4709 = vsel %vm3715, %v4693, %v4645
  %v4711 = vsel %vm3715, %v4695, %v4647
  %v4713 = vsel %vm3715, %v4697, %v4649
  %v4715 = vsel %vm3715, %v4699, %v4651
  %v4717 = vsel %vm3715, %v4701, %v4653
  %v4719 = vsel %vm3715, %v4703, %v4655
  %v4720 = vld [vmem:[%s5] sm:$0xf]
  %v4721 = vld [vmem:[%s5 + $0x4] sm:$0xf]
  %v4722 = vld [vmem:[%s5 + $0x8] sm:$0xf]
  %v4723 = vld [vmem:[%s5 + $0xc] sm:$0xf]
  %v4724 = vld [vmem:[%s5 + $0x10] sm:$0xf]
  %v4725 = vld [vmem:[%s5 + $0x14] sm:$0xf]
  %v4726 = vld [vmem:[%s5 + $0x18] sm:$0x1]
  %v4727 = vld [vmem:[%s6] sm:$0x1]
  %v4729 = vlaneseq
  %v4730 = vshrl.u32 %v4729, 7
  %v4731 = vsub.s32 0, %v4730
  %v4732 = vrot.slane %v4727, %v4731
  %v4742 = vunpack.c.l.b16 %v4705
  %v4743 = vunpack.c.l.b16 %v4707
  %v4744 = vunpack.c.l.b16 %v4709
  %v4745 = vunpack.c.l.b16 %v4711
  %v4746 = vunpack.c.l.b16 %v4713
  %v4747 = vunpack.c.l.b16 %v4715
  %v4748 = vunpack.c.l.b16 %v4717
  %v4749 = vunpack.c.l.b16 %v4719
  %v4750 = vpack.c.b16 %v4743, %v4742
  %v4751 = vpack.c.b16 %v4745, %v4744
  %v4752 = vpack.c.b16 %v4747, %v4746
  %v4753 = vpack.c.b16 %v4749, %v4748
  %v4761 = vunpack.c.l.b16 %v4720
  %v4762 = vunpack.c.l.b16 %v4721
  %v4763 = vunpack.c.l.b16 %v4722
  %v4764 = vunpack.c.l.b16 %v4723
  %v4765 = vunpack.c.l.b16 %v4724
  %v4766 = vunpack.c.l.b16 %v4725
  %v4767 = vunpack.c.l.b16 %v4726
  %v4768 = vpack.c.b16 %v4762, %v4761
  %v4769 = vpack.c.b16 %v4764, %v4763
  %v4770 = vpack.c.b16 %v4766, %v4765
  %v4771 = vpack.c.b16 %v4767, %v4767
  %v4776 = vsel %vm3748, %v4750, 0
  %v4779 = vsel %vm3748, %v4751, 0
  %v4782 = vsel %vm3748, %v4752, 0
  %v4785 = vsel %vm3748, %v4753, 0
  %v4788 = vsel %vm4288, %v4771, 0
  %4790 = vmatprep.subr.bf16.mxu0 0
  %4791 = vmatpush1.bf16.msra.mxu0 %v4768
  %4792 = vmatprep.subr.bf16.mxu0 0
  %4793 = vmatpush1.bf16.msra.mxu0 %v4769
  %4794 = vmatprep.subr.bf16.mxu0 0
  %4795 = vmatpush1.bf16.msra.mxu0 %v4770
  %4796 = vmatprep.subr.bf16.mxu0 0
  %4797 = vmatpush1.bf16.msra.mxu0 %v4788
  %4798 = vmatprep.subr.bf16.mxu0 0
  %4799 = vmatpush1.bf16.msra.mxu0 0
  %4800 = vmatprep.subr.bf16.mxu0 0
  %4801 = vmatpush1.bf16.msra.mxu0 0
  %4802 = vmatprep.subr.bf16.mxu0 0
  %4803 = vmatpush1.bf16.msra.mxu0 0
  %4804 = vmatprep.subr.bf16.mxu0 0
  %4805 = vmatpush1.bf16.msra.mxu0 0
  %4806 = vmatprep.subr.bf16.mxu0 0
  %4807 = vmatpush1.bf16.msra.mxu0 0
  %4808 = vmatprep.subr.bf16.mxu0 0
  %4809 = vmatpush1.bf16.msra.mxu0 0
  %4810 = vmatprep.subr.bf16.mxu0 0
  %4811 = vmatpush1.bf16.msra.mxu0 0
  %4812 = vmatprep.subr.bf16.mxu0 0
  %4813 = vmatpush1.bf16.msra.mxu0 0
  %4814 = vmatprep.subr.bf16.mxu0 0
  %4815 = vmatpush1.bf16.msra.mxu0 0
  %4816 = vmatprep.subr.bf16.mxu0 0
  %4817 = vmatpush1.bf16.msra.mxu0 0
  %4818 = vmatprep.subr.bf16.mxu0 0
  %4819 = vmatpush1.bf16.msra.mxu0 0
  %4820 = vmatprep.subr.bf16.mxu0 0
  %4821 = vmatpush1.bf16.msra.mxu0 0
  %4822 = vmatprep.mubr.bf16.mxu0 0
  %4823 = vmatmul.mubr.bf16.gmra.mrb[0].mxu0 %v4776
  %v4824 = vpop.f32.mrb[0].mxu0
  %v4825 = vadd.f32 %v4732, %v4824
  %v4826 = vpop.f32.mrb[0].mxu0
  %v4827 = vpop.f32.mrb[0].mxu0
  %v4828 = vadd.f32 %v4732, %v4827
  %v4829 = vpop.f32.mrb[0].mxu0
  %4830 = vmatprep.mubr.bf16.mxu0 0
  %4831 = vmatmul.mubr.bf16.gmra.mrb[0].mxu0 %v4779
  %v4832 = vpop.f32.mrb[0].mxu0
  %v4833 = vadd.f32 %v4732, %v4832
  %v4834 = vpop.f32.mrb[0].mxu0
  %v4835 = vpop.f32.mrb[0].mxu0
  %v4836 = vadd.f32 %v4732, %v4835
  %v4837 = vpop.f32.mrb[0].mxu0
  %4838 = vmatprep.mubr.bf16.mxu0 0
  %4839 = vmatmul.mubr.bf16.gmra.mrb[0].mxu0 %v4782
  %v4840 = vpop.f32.mrb[0].mxu0
  %v4841 = vadd.f32 %v4732, %v4840
  %v4842 = vpop.f32.mrb[0].mxu0
  %v4843 = vpop.f32.mrb[0].mxu0
  %v4844 = vadd.f32 %v4732, %v4843
  %v4845 = vpop.f32.mrb[0].mxu0
  %4846 = vmatprep.mubr.bf16.mxu0 0
  %4847 = vmatmul.mubr.bf16.gmra.mrb[0].mxu0 %v4785
  %v4848 = vpop.f32.mrb[0].mxu0
  %v4849 = vadd.f32 %v4732, %v4848
  %v4850 = vpop.f32.mrb[0].mxu0
  %v4851 = vpop.f32.mrb[0].mxu0
  %v4852 = vadd.f32 %v4732, %v4851
  %v4853 = vpop.f32.mrb[0].mxu0
  %4854 = vdwg.mxu0
  %v4855 = vmax.f32 %v4825, 0.0
  %v4856 = vmax.f32 %v4828, 0.0
  %v4857 = vmax.f32 %v4833, 0.0
  %v4858 = vmax.f32 %v4836, 0.0
  %v4859 = vmax.f32 %v4841, 0.0
  %v4860 = vmax.f32 %v4844, 0.0
  %v4861 = vmax.f32 %v4849, 0.0
  %v4862 = vmax.f32 %v4852, 0.0
  %v4871 = vrot.slane %v4855, 1
  %v4872 = vrot.slane %v4856, 1
  %v4873 = vrot.slane %v4857, 1
  %v4874 = vrot.slane %v4858, 1
  %v4875 = vrot.slane %v4859, 1
  %v4876 = vrot.slane %v4860, 1
  %v4877 = vrot.slane %v4861, 1
  %v4878 = vrot.slane %v4862, 1
  %v4887 = vrot.slane %v4855, 2
  %v4888 = vrot.slane %v4856, 2
  %v4889 = vrot.slane %v4857, 2
  %v4890 = vrot.slane %v4858, 2
  %v4891 = vrot.slane %v4859, 2
  %v4892 = vrot.slane %v4860, 2
  %v4893 = vrot.slane %v4861, 2
  %v4894 = vrot.slane %v4862, 2
  %v4903 = vsel %vm4288, %v4855, %v4871
  %v4904 = vsel %vm4288, %v4856, %v4872
  %v4905 = vsel %vm4288, %v4857, %v4873
  %v4906 = vsel %vm4288, %v4858, %v4874
  %v4907 = vsel %vm4288, %v4859, %v4875
  %v4908 = vsel %vm4288, %v4860, %v4876
  %v4909 = vsel %vm4288, %v4861, %v4877
  %v4910 = vsel %vm4288, %v4862, %v4878
  %v4911 = vsel %vm4297, %v4903, %v4887
  %v4912 = vsel %vm4297, %v4904, %v4888
  %v4913 = vsel %vm4297, %v4905, %v4889
  %v4914 = vsel %vm4297, %v4906, %v4890
  %v4915 = vsel %vm4297, %v4907, %v4891
  %v4916 = vsel %vm4297, %v4908, %v4892
  %v4917 = vsel %vm4297, %v4909, %v4893
  %v4918 = vsel %vm4297, %v4910, %v4894
  %v4919 = vrot.slane %v4855, 3
  %v4920 = vrot.slane %v4856, 3
  %v4921 = vrot.slane %v4857, 3
  %v4922 = vrot.slane %v4858, 3
  %v4923 = vrot.slane %v4859, 3
  %v4924 = vrot.slane %v4860, 3
  %v4925 = vrot.slane %v4861, 3
  %v4926 = vrot.slane %v4862, 3
  %v4935 = vsel %vm4288, %v4871, %v4887
  %v4936 = vsel %vm4288, %v4872, %v4888
  %v4937 = vsel %vm4288, %v4873, %v4889
  %v4938 = vsel %vm4288, %v4874, %v4890
  %v4939 = vsel %vm4288, %v4875, %v4891
  %v4940 = vsel %vm4288, %v4876, %v4892
  %v4941 = vsel %vm4288, %v4877, %v4893
  %v4942 = vsel %vm4288, %v4878, %v4894
  %v4943 = vsel %vm4297, %v4935, %v4919
  %v4944 = vsel %vm4297, %v4936, %v4920
  %v4945 = vsel %vm4297, %v4937, %v4921
  %v4946 = vsel %vm4297, %v4938, %v4922
  %v4947 = vsel %vm4297, %v4939, %v4923
  %v4948 = vsel %vm4297, %v4940, %v4924
  %v4949 = vsel %vm4297, %v4941, %v4925
  %v4950 = vsel %vm4297, %v4942, %v4926
  %v4951 = vmax.f32 %v4911, %v4943
  %v4952 = vmax.f32 %v4912, %v4944
  %v4953 = vmax.f32 %v4913, %v4945
  %v4954 = vmax.f32 %v4914, %v4946
  %v4955 = vmax.f32 %v4915, %v4947
  %v4956 = vmax.f32 %v4916, %v4948
  %v4957 = vmax.f32 %v4917, %v4949
  %v4958 = vmax.f32 %v4918, %v4950
  %v4959 = vld [vmem:[%s7] sm:$0xff]
  %v4960 = vld [vmem:[%s7 + $0x8] sm:$0xff]
  %v4961 = vld [vmem:[%s7 + $0x10] sm:$0x11]
  %v4962 = vld [vmem:[%s7 + $0x18] sm:$0x11]
  %v4963 = vld [vmem:[%s8] sm:$0xff]
  %v4964 = vld [vmem:[%s8 + $0x8] sm:$0xff]
  %v4965 = vld [vmem:[%s8 + $0x10] sm:$0xff]
  %v4966 = vld [vmem:[%s8 + $0x18] sm:$0xff]
  %v4967 = vld [vmem:[%s8 + $0x20] sm:$0xff]
  %v4968 = vld [vmem:[%s8 + $0x28] sm:$0xff]
  %v4969 = vld [vmem:[%s8 + $0x30] sm:$0xff]
  %v4970 = vld [vmem:[%s8 + $0x38] sm:$0xff]
  %v4971 = vld [vmem:[%s8 + $0x40] sm:$0xff]
  %v4972 = vld [vmem:[%s8 + $0x48] sm:$0xff]
  %v4973 = vld [vmem:[%s8 + $0x50] sm:$0xff]
  %v4974 = vld [vmem:[%s8 + $0x58] sm:$0xff]
  %v4975 = vld [vmem:[%s8 + $0x60] sm:$0xff]
  %v4976 = vld [vmem:[%s8 + $0x68] sm:$0xff]
  %v4977 = vld [vmem:[%s8 + $0x70] sm:$0xff]
  %v4978 = vld [vmem:[%s8 + $0x78] sm:$0xff]
  %v4979 = vld [vmem:[%s8 + $0x80] sm:$0xff]
  %v4980 = vld [vmem:[%s8 + $0x88] sm:$0xff]
  %v4981 = vld [vmem:[%s8 + $0x90] sm:$0xff]
  %v4982 = vld [vmem:[%s8 + $0x98] sm:$0xff]
  %v4983 = vld [vmem:[%s9] sm:$0xf]
  %v4984 = vpack.c.bf16 %v4951, %v4951
  %v4985 = vpack.c.bf16 %v4952, %v4952
  %v4986 = vpack.c.bf16 %v4953, %v4953
  %v4987 = vpack.c.bf16 %v4954, %v4954
  %v4988 = vpack.c.bf16 %v4955, %v4955
  %v4989 = vpack.c.bf16 %v4956, %v4956
  %v4990 = vpack.c.bf16 %v4957, %v4957
  %v4991 = vpack.c.bf16 %v4958, %v4958
  %v5012 = vunpack.c.l.b16 %v4963
  %v5013 = vunpack.c.h.b16 %v4963
  %v5014 = vunpack.c.l.b16 %v4964
  %v5015 = vunpack.c.h.b16 %v4964
  %v5016 = vunpack.c.l.b16 %v4965
  %v5017 = vunpack.c.h.b16 %v4965
  %v5018 = vunpack.c.l.b16 %v4966
  %v5019 = vunpack.c.h.b16 %v4966
  %v5020 = vunpack.c.l.b16 %v4967
  %v5021 = vunpack.c.h.b16 %v4967
  %v5022 = vunpack.c.l.b16 %v4968
  %v5023 = vunpack.c.h.b16 %v4968
  %v5024 = vunpack.c.l.b16 %v4969
  %v5025 = vunpack.c.h.b16 %v4969
  %v5026 = vunpack.c.l.b16 %v4970
  %v5027 = vunpack.c.h.b16 %v4970
  %v5028 = vunpack.c.l.b16 %v4971
  %v5029 = vunpack.c.h.b16 %v4971
  %v5030 = vunpack.c.l.b16 %v4972
  %v5031 = vunpack.c.h.b16 %v4972
  %v5032 = vunpack.c.l.b16 %v4973
  %v5033 = vunpack.c.h.b16 %v4973
  %v5034 = vunpack.c.l.b16 %v4974
  %v5035 = vunpack.c.h.b16 %v4974
  %v5036 = vunpack.c.l.b16 %v4975
  %v5037 = vunpack.c.h.b16 %v4975
  %v5038 = vunpack.c.l.b16 %v4976
  %v5039 = vunpack.c.h.b16 %v4976
  %v5040 = vunpack.c.l.b16 %v4977
  %v5041 = vunpack.c.h.b16 %v4977
  %v5042 = vunpack.c.l.b16 %v4978
  %v5043 = vunpack.c.h.b16 %v4978
  %v5044 = vunpack.c.l.b16 %v4979
  %v5045 = vunpack.c.h.b16 %v4979
  %v5046 = vunpack.c.l.b16 %v4980
  %v5047 = vunpack.c.h.b16 %v4980
  %v5048 = vunpack.c.l.b16 %v4981
  %v5049 = vunpack.c.h.b16 %v4981
  %v5050 = vunpack.c.l.b16 %v4982
  %v5051 = vunpack.c.h.b16 %v4982
  %v5052 = vpack.c.b16 %v5016, %v5012
  %v5053 = vpack.c.b16 %v5017, %v5013
  %v5054 = vpack.c.b16 %v5018, %v5014
  %v5055 = vpack.c.b16 %v5019, %v5015
  %v5056 = vpack.c.b16 %v5024, %v5020
  %v5057 = vpack.c.b16 %v5025, %v5021
  %v5058 = vpack.c.b16 %v5026, %v5022
  %v5059 = vpack.c.b16 %v5027, %v5023
  %v5060 = vpack.c.b16 %v5032, %v5028
  %v5061 = vpack.c.b16 %v5033, %v5029
  %v5062 = vpack.c.b16 %v5034, %v5030
  %v5063 = vpack.c.b16 %v5035, %v5031
  %v5064 = vpack.c.b16 %v5040, %v5036
  %v5065 = vpack.c.b16 %v5041, %v5037
  %v5066 = vpack.c.b16 %v5042, %v5038
  %v5067 = vpack.c.b16 %v5043, %v5039
  %v5068 = vpack.c.b16 %v5048, %v5044
  %v5069 = vpack.c.b16 %v5049, %v5045
  %v5070 = vpack.c.b16 %v5050, %v5046
  %v5071 = vpack.c.b16 %v5051, %v5047
  %v5092 = vsel %vm3946, 0, 0
  %5094 = vmatprep.subr.bf16.mxu0 %v5053
  %5095 = vmatpush1.bf16.msra.mxu0 %v5052
  %5096 = vmatprep.subr.bf16.mxu0 %v5057
  %5097 = vmatpush1.bf16.msra.mxu0 %v5056
  %5098 = vmatprep.subr.bf16.mxu0 %v5061
  %5099 = vmatpush1.bf16.msra.mxu0 %v5060
  %5100 = vmatprep.subr.bf16.mxu0 %v5065
  %5101 = vmatpush1.bf16.msra.mxu0 %v5064
  %5102 = vmatprep.subr.bf16.mxu0 %v5069
  %5103 = vmatpush1.bf16.msra.mxu0 %v5068
  %5104 = vmatprep.subr.bf16.mxu0 0
  %5105 = vmatpush1.bf16.msra.mxu0 0
  %5106 = vmatprep.subr.bf16.mxu0 0
  %5107 = vmatpush1.bf16.msra.mxu0 0
  %5108 = vmatprep.subr.bf16.mxu0 0
  %5109 = vmatpush1.bf16.msra.mxu0 0
  %5110 = vmatprep.subr.bf16.mxu0 0
  %5111 = vmatpush1.bf16.msra.mxu0 0
  %5112 = vmatprep.subr.bf16.mxu0 0
  %5113 = vmatpush1.bf16.msra.mxu0 0
  %5114 = vmatprep.subr.bf16.mxu0 0
  %5115 = vmatpush1.bf16.msra.mxu0 0
  %5116 = vmatprep.subr.bf16.mxu0 0
  %5117 = vmatpush1.bf16.msra.mxu0 0
  %5118 = vmatprep.subr.bf16.mxu0 0
  %5119 = vmatpush1.bf16.msra.mxu0 0
  %5120 = vmatprep.subr.bf16.mxu0 0
  %5121 = vmatpush1.bf16.msra.mxu0 0
  %5122 = vmatprep.subr.bf16.mxu0 0
  %5123 = vmatpush1.bf16.msra.mxu0 0
  %5124 = vmatprep.subr.bf16.mxu0 0
  %5125 = vmatpush1.bf16.msra.mxu0 0
  %5126 = vmatprep.mubr.bf16.mxu0 0
  %5127 = vmatmul.mubr.bf16.gmra.mrb[0].mxu0 %v5092
  %v5128 = vpop.f32.mrb[0].mxu0
  %v5129 = vadd.f32 0.0, %v5128
  %v5130 = vpop.f32.mrb[0].mxu0
  %v5131 = vadd.f32 0.0, %v5130
  %v5132 = vpop.f32.mrb[0].mxu0
  %v5133 = vpop.f32.mrb[0].mxu0
  %5134 = vdwg.mxu0
  %5135 = vmatprep.subr.bf16.mxu0 %v5055
  %5136 = vmatpush1.bf16.msra.mxu0 %v5054
  %5137 = vmatprep.subr.bf16.mxu0 %v5059
  %5138 = vmatpush1.bf16.msra.mxu0 %v5058
  %5139 = vmatprep.subr.bf16.mxu0 %v5063
  %5140 = vmatpush1.bf16.msra.mxu0 %v5062
  %5141 = vmatprep.subr.bf16.mxu0 %v5067
  %5142 = vmatpush1.bf16.msra.mxu0 %v5066
  %5143 = vmatprep.subr.bf16.mxu0 %v5071
  %5144 = vmatpush1.bf16.msra.mxu0 %v5070
  %5145 = vmatprep.subr.bf16.mxu0 0
  %5146 = vmatpush1.bf16.msra.mxu0 0
  %5147 = vmatprep.subr.bf16.mxu0 0
  %5148 = vmatpush1.bf16.msra.mxu0 0
  %5149 = vmatprep.subr.bf16.mxu0 0
  %5150 = vmatpush1.bf16.msra.mxu0 0
  %5151 = vmatprep.subr.bf16.mxu0 0
  %5152 = vmatpush1.bf16.msra.mxu0 0
  %5153 = vmatprep.subr.bf16.mxu0 0
  %5154 = vmatpush1.bf16.msra.mxu0 0
  %5155 = vmatprep.subr.bf16.mxu0 0
  %5156 = vmatpush1.bf16.msra.mxu0 0
  %5157 = vmatprep.subr.bf16.mxu0 0
  %5158 = vmatpush1.bf16.msra.mxu0 0
  %5159 = vmatprep.subr.bf16.mxu0 0
  %5160 = vmatpush1.bf16.msra.mxu0 0
  %5161 = vmatprep.subr.bf16.mxu0 0
  %5162 = vmatpush1.bf16.msra.mxu0 0
  %5163 = vmatprep.subr.bf16.mxu0 0
  %5164 = vmatpush1.bf16.msra.mxu0 0
  %5165 = vmatprep.subr.bf16.mxu0 0
  %5166 = vmatpush1.bf16.msra.mxu0 0
  %5167 = vmatprep.mubr.bf16.mxu0 0
  %5168 = vmatmul.mubr.bf16.gmra.mrb[0].mxu0 %v5092
  %v5169 = vpop.f32.mrb[0].mxu0
  %v5170 = vadd.f32 0.0, %v5169
  %v5171 = vpop.f32.mrb[0].mxu0
  %v5172 = vadd.f32 0.0, %v5171
  %v5173 = vpop.f32.mrb[0].mxu0
  %v5174 = vpop.f32.mrb[0].mxu0
  %5175 = vdwg.mxu0
  %v5184 = vunpack.c.l.b16 %v4984
  %v5185 = vunpack.c.l.b16 %v4985
  %v5186 = vunpack.c.l.b16 %v4986
  %v5187 = vunpack.c.l.b16 %v4987
  %v5188 = vunpack.c.l.b16 %v4988
  %v5189 = vunpack.c.l.b16 %v4989
  %v5190 = vunpack.c.l.b16 %v4990
  %v5191 = vunpack.c.l.b16 %v4991
  %v5192 = vrot.slane %v5185, 7
  %vm5193 = vcmask 1041409
  %v5194 = vsel %vm5193, %v5192, %v5184
  %v5195 = vrot.slane %v5186, 6
  %vm5196 = vcmask 1042434
  %v5197 = vsel %vm5196, %v5195, %v5194
  %v5198 = vrot.slane %v5187, 5
  %vm5199 = vcmask 1043459
  %v5200 = vsel %vm5199, %v5198, %v5197
  %v5201 = vrot.slane %v5188, 4
  %vm5202 = vcmask 1044484
  %v5203 = vsel %vm5202, %v5201, %v5200
  %v5204 = vrot.slane %v5189, 3
  %vm5205 = vcmask 1045509
  %v5206 = vsel %vm5205, %v5204, %v5203
  %v5207 = vrot.slane %v5190, 2
  %vm5208 = vcmask 1046534
  %v5209 = vsel %vm5208, %v5207, %v5206
  %v5210 = vrot.slane %v5191, 1
  %vm5211 = vcmask 1047559
  %v5212 = vsel %vm5211, %v5210, %v5209
  %v5213 = vpack.c.b16 %v5212, %v5212
  %v5218 = vunpack.c.l.b16 %v4959
  %v5219 = vunpack.c.h.b16 %v4959
  %v5220 = vunpack.c.l.b16 %v4960
  %v5221 = vunpack.c.h.b16 %v4960
  %v5222 = vunpack.c.l.b16 %v4961
  %v5223 = vunpack.c.h.b16 %v4961
  %v5224 = vunpack.c.l.b16 %v4962
  %v5225 = vunpack.c.h.b16 %v4962
  %v5226 = vpack.c.b16 %v5222, %v5218
  %v5227 = vpack.c.b16 %v5223, %v5219
  %v5228 = vpack.c.b16 %v5224, %v5220
  %v5229 = vpack.c.b16 %v5225, %v5221
  %v5231 = vsel %vm3616, %v5213, 0
  %v5234 = vsel %vm4324, %v5226, 0
  %v5237 = vsel %vm4324, %v5227, 0
  %v5240 = vsel %vm4324, %v5228, 0
  %v5243 = vsel %vm4324, %v5229, 0
  %5245 = vmatprep.subr.bf16.mxu0 %v5237
  %5246 = vmatpush1.bf16.msra.mxu0 %v5234
  %5247 = vmatprep.subr.bf16.mxu0 0
  %5248 = vmatpush1.bf16.msra.mxu0 0
  %5249 = vmatprep.subr.bf16.mxu0 0
  %5250 = vmatpush1.bf16.msra.mxu0 0
  %5251 = vmatprep.subr.bf16.mxu0 0
  %5252 = vmatpush1.bf16.msra.mxu0 0
  %5253 = vmatprep.subr.bf16.mxu0 0
  %5254 = vmatpush1.bf16.msra.mxu0 0
  %5255 = vmatprep.subr.bf16.mxu0 0
  %5256 = vmatpush1.bf16.msra.mxu0 0
  %5257 = vmatprep.subr.bf16.mxu0 0
  %5258 = vmatpush1.bf16.msra.mxu0 0
  %5259 = vmatprep.subr.bf16.mxu0 0
  %5260 = vmatpush1.bf16.msra.mxu0 0
  %5261 = vmatprep.subr.bf16.mxu0 0
  %5262 = vmatpush1.bf16.msra.mxu0 0
  %5263 = vmatprep.subr.bf16.mxu0 0
  %5264 = vmatpush1.bf16.msra.mxu0 0
  %5265 = vmatprep.subr.bf16.mxu0 0
  %5266 = vmatpush1.bf16.msra.mxu0 0
  %5267 = vmatprep.subr.bf16.mxu0 0
  %5268 = vmatpush1.bf16.msra.mxu0 0
  %5269 = vmatprep.subr.bf16.mxu0 0
  %5270 = vmatpush1.bf16.msra.mxu0 0
  %5271 = vmatprep.subr.bf16.mxu0 0
  %5272 = vmatpush1.bf16.msra.mxu0 0
  %5273 = vmatprep.subr.bf16.mxu0 0
  %5274 = vmatpush1.bf16.msra.mxu0 0
  %5275 = vmatprep.subr.bf16.mxu0 0
  %5276 = vmatpush1.bf16.msra.mxu0 0
  %5277 = vmatprep.mubr.bf16.mxu0 0
  %5278 = vmatmul.mubr.bf16.gmra.mrb[0].mxu0 %v5231
  %v5279 = vpop.f32.mrb[0].mxu0
  %v5280 = vadd.f32 %v5129, %v5279
  %v5281 = vpop.f32.mrb[0].mxu0
  %v5282 = vadd.f32 %v5131, %v5281
  %v5283 = vpop.f32.mrb[0].mxu0
  %v5284 = vpop.f32.mrb[0].mxu0
  %5285 = vdwg.mxu0
  %5286 = vmatprep.subr.bf16.mxu0 %v5243
  %5287 = vmatpush1.bf16.msra.mxu0 %v5240
  %5288 = vmatprep.subr.bf16.mxu0 0
  %5289 = vmatpush1.bf16.msra.mxu0 0
  %5290 = vmatprep.subr.bf16.mxu0 0
  %5291 = vmatpush1.bf16.msra.mxu0 0
  %5292 = vmatprep.subr.bf16.mxu0 0
  %5293 = vmatpush1.bf16.msra.mxu0 0
  %5294 = vmatprep.subr.bf16.mxu0 0
  %5295 = vmatpush1.bf16.msra.mxu0 0
  %5296 = vmatprep.subr.bf16.mxu0 0
  %5297 = vmatpush1.bf16.msra.mxu0 0
  %5298 = vmatprep.subr.bf16.mxu0 0
  %5299 = vmatpush1.bf16.msra.mxu0 0
  %5300 = vmatprep.subr.bf16.mxu0 0
  %5301 = vmatpush1.bf16.msra.mxu0 0
  %5302 = vmatprep.subr.bf16.mxu0 0
  %5303 = vmatpush1.bf16.msra.mxu0 0
  %5304 = vmatprep.subr.bf16.mxu0 0
  %5305 = vmatpush1.bf16.msra.mxu0 0
  %5306 = vmatprep.subr.bf16.mxu0 0
  %5307 = vmatpush1.bf16.msra.mxu0 0
  %5308 = vmatprep.subr.bf16.mxu0 0
  %5309 = vmatpush1.bf16.msra.mxu0 0
  %5310 = vmatprep.subr.bf16.mxu0 0
  %5311 = vmatpush1.bf16.msra.mxu0 0
  %5312 = vmatprep.subr.bf16.mxu0 0
  %5313 = vmatpush1.bf16.msra.mxu0 0
  %5314 = vmatprep.subr.bf16.mxu0 0
  %5315 = vmatpush1.bf16.msra.mxu0 0
  %5316 = vmatprep.subr.bf16.mxu0 0
  %5317 = vmatpush1.bf16.msra.mxu0 0
  %5318 = vmatprep.mubr.bf16.mxu0 0
  %5319 = vmatmul.mubr.bf16.gmra.mrb[0].mxu0 %v5231
  %v5320 = vpop.f32.mrb[0].mxu0
  %v5321 = vadd.f32 %v5170, %v5320
  %v5322 = vpop.f32.mrb[0].mxu0
  %v5323 = vadd.f32 %v5172, %v5322
  %v5324 = vpop.f32.mrb[0].mxu0
  %v5325 = vpop.f32.mrb[0].mxu0
  %5326 = vdwg.mxu0
  %v5328 = vlaneseq
  %v5329 = vshrl.u32 %v5328, 7
  %v5330 = vsub.s32 0, %v5329
  %v5331 = vrot.slane %v4983, %v5330
  %v5332 = vlaneseq
  %v5333 = vshrl.u32 %v5332, 7
  %v5334 = vsub.s32 1, %v5333
  %v5335 = vrot.slane %v4983, %v5334
  %v5336 = vlaneseq
  %v5337 = vshrl.u32 %v5336, 7
  %v5338 = vsub.s32 2, %v5337
  %v5339 = vrot.slane %v4983, %v5338
  %v5340 = vlaneseq
  %v5341 = vshrl.u32 %v5340, 7
  %v5342 = vsub.s32 3, %v5341
  %v5343 = vrot.slane %v4983, %v5342
  %v5348 = vadd.f32 %v5280, %v5331
  %v5349 = vadd.f32 %v5282, %v5335
  %v5350 = vadd.f32 %v5321, %v5339
  %v5351 = vadd.f32 %v5323, %v5343
  %v5352 = vxor.u32 %v5348, 2147483648
  %v5353 = vmul.f32 %v5352, 1.442695
  %v5354 = vpow.pop %v5353
  %v5355 = vadd.f32 %v5354, 1.0
  %v5356 = vrcp.pop %v5355
  %v5357 = vmul.f32 1.0, %v5356
  %v5358 = vxor.u32 %v5349, 2147483648
  %v5359 = vmul.f32 %v5358, 1.442695
  %v5360 = vpow.pop %v5359
  %v5361 = vadd.f32 %v5360, 1.0
  %v5362 = vrcp.pop %v5361
  %v5363 = vmul.f32 1.0, %v5362
  %v5364 = vtanh.pop %v5350
  %v5365 = vxor.u32 %v5351, 2147483648
  %v5366 = vmul.f32 %v5365, 1.442695
  %v5367 = vpow.pop %v5366
  %v5368 = vadd.f32 %v5367, 1.0
  %v5369 = vrcp.pop %v5368
  %v5370 = vmul.f32 1.0, %v5369
  %v5371 = vmul.f32 %v5363, 0.0
  %v5372 = vmul.f32 %v5357, %v5364
  %v5373 = vadd.f32 %v5371, %v5372
  %v5374 = vtanh.pop %v5373
  %v5375 = vmul.f32 %v5370, %v5374
  %v5376 = vpack.c.bf16 %v5375, %v5375
  %v5378 = vsel %vm3946, %v5376, 0
  %5380 = vmatprep.subr.bf16.mxu0 %v5053
  %5381 = vmatpush1.bf16.msra.mxu0 %v5052
  %5382 = vmatprep.subr.bf16.mxu0 %v5057
  %5383 = vmatpush1.bf16.msra.mxu0 %v5056
  %5384 = vmatprep.subr.bf16.mxu0 %v5061
  %5385 = vmatpush1.bf16.msra.mxu0 %v5060
  %5386 = vmatprep.subr.bf16.mxu0 %v5065
  %5387 = vmatpush1.bf16.msra.mxu0 %v5064
  %5388 = vmatprep.subr.bf16.mxu0 %v5069
  %5389 = vmatpush1.bf16.msra.mxu0 %v5068
  %5390 = vmatprep.subr.bf16.mxu0 0
  %5391 = vmatpush1.bf16.msra.mxu0 0
  %5392 = vmatprep.subr.bf16.mxu0 0
  %5393 = vmatpush1.bf16.msra.mxu0 0
  %5394 = vmatprep.subr.bf16.mxu0 0
  %5395 = vmatpush1.bf16.msra.mxu0 0
  %5396 = vmatprep.subr.bf16.mxu0 0
  %5397 = vmatpush1.bf16.msra.mxu0 0
  %5398 = vmatprep.subr.bf16.mxu0 0
  %5399 = vmatpush1.bf16.msra.mxu0 0
  %5400 = vmatprep.subr.bf16.mxu0 0
  %5401 = vmatpush1.bf16.msra.mxu0 0
  %5402 = vmatprep.subr.bf16.mxu0 0
  %5403 = vmatpush1.bf16.msra.mxu0 0
  %5404 = vmatprep.subr.bf16.mxu0 0
  %5405 = vmatpush1.bf16.msra.mxu0 0
  %5406 = vmatprep.subr.bf16.mxu0 0
  %5407 = vmatpush1.bf16.msra.mxu0 0
  %5408 = vmatprep.subr.bf16.mxu0 0
  %5409 = vmatpush1.bf16.msra.mxu0 0
  %5410 = vmatprep.subr.bf16.mxu0 0
  %5411 = vmatpush1.bf16.msra.mxu0 0
  %5412 = vmatprep.mubr.bf16.mxu0 0
  %5413 = vmatmul.mubr.bf16.gmra.mrb[0].mxu0 %v5378
  %v5414 = vpop.f32.mrb[0].mxu0
  %v5415 = vadd.f32 0.0, %v5414
  %v5416 = vpop.f32.mrb[0].mxu0
  %v5417 = vadd.f32 0.0, %v5416
  %v5418 = vpop.f32.mrb[0].mxu0
  %v5419 = vpop.f32.mrb[0].mxu0
  %5420 = vdwg.mxu0
  %5421 = vmatprep.subr.bf16.mxu0 %v5055
  %5422 = vmatpush1.bf16.msra.mxu0 %v5054
  %5423 = vmatprep.subr.bf16.mxu0 %v5059
  %5424 = vmatpush1.bf16.msra.mxu0 %v5058
  %5425 = vmatprep.subr.bf16.mxu0 %v5063
  %5426 = vmatpush1.bf16.msra.mxu0 %v5062
  %5427 = vmatprep.subr.bf16.mxu0 %v5067
  %5428 = vmatpush1.bf16.msra.mxu0 %v5066
  %5429 = vmatprep.subr.bf16.mxu0 %v5071
  %5430 = vmatpush1.bf16.msra.mxu0 %v5070
  %5431 = vmatprep.subr.bf16.mxu0 0
  %5432 = vmatpush1.bf16.msra.mxu0 0
  %5433 = vmatprep.subr.bf16.mxu0 0
  %5434 = vmatpush1.bf16.msra.mxu0 0
  %5435 = vmatprep.subr.bf16.mxu0 0
  %5436 = vmatpush1.bf16.msra.mxu0 0
  %5437 = vmatprep.subr.bf16.mxu0 0
  %5438 = vmatpush1.bf16.msra.mxu0 0
  %5439 = vmatprep.subr.bf16.mxu0 0
  %5440 = vmatpush1.bf16.msra.mxu0 0
  %5441 = vmatprep.subr.bf16.mxu0 0
  %5442 = vmatpush1.bf16.msra.mxu0 0
  %5443 = vmatprep.subr.bf16.mxu0 0
  %5444 = vmatpush1.bf16.msra.mxu0 0
  %5445 = vmatprep.subr.bf16.mxu0 0
  %5446 = vmatpush1.bf16.msra.mxu0 0
  %5447 = vmatprep.subr.bf16.mxu0 0
  %5448 = vmatpush1.bf16.msra.mxu0 0
  %5449 = vmatprep.subr.bf16.mxu0 0
  %5450 = vmatpush1.bf16.msra.mxu0 0
  %5451 = vmatprep.subr.bf16.mxu0 0
  %5452 = vmatpush1.bf16.msra.mxu0 0
  %5453 = vmatprep.mubr.bf16.mxu0 0
  %5454 = vmatmul.mubr.bf16.gmra.mrb[0].mxu0 %v5378
  %v5455 = vpop.f32.mrb[0].mxu0
  %v5456 = vadd.f32 0.0, %v5455
  %v5457 = vpop.f32.mrb[0].mxu0
  %v5458 = vadd.f32 0.0, %v5457
  %v5459 = vpop.f32.mrb[0].mxu0
  %v5460 = vpop.f32.mrb[0].mxu0
  %5461 = vdwg.mxu0
  %v5462 = vrot.slane %v5184, 1
  %v5463 = vsel %vm5193, %v5185, %v5462
  %v5464 = vrot.slane %v5186, 7
  %v5465 = vsel %vm5196, %v5464, %v5463
  %v5466 = vrot.slane %v5187, 6
  %v5467 = vsel %vm5199, %v5466, %v5465
  %v5468 = vrot.slane %v5188, 5
  %v5469 = vsel %vm5202, %v5468, %v5467
  %v5470 = vrot.slane %v5189, 4
  %v5471 = vsel %vm5205, %v5470, %v5469
  %v5472 = vrot.slane %v5190, 3
  %v5473 = vsel %vm5208, %v5472, %v5471
  %v5474 = vrot.slane %v5191, 2
  %v5475 = vsel %vm5211, %v5474, %v5473
  %v5476 = vpack.c.b16 %v5475, %v5475
  %v5478 = vsel %vm3616, %v5476, 0
  %5480 = vmatprep.subr.bf16.mxu0 %v5237
  %5481 = vmatpush1.bf16.msra.mxu0 %v5234
  %5482 = vmatprep.subr.bf16.mxu0 0
  %5483 = vmatpush1.bf16.msra.mxu0 0
  %5484 = vmatprep.subr.bf16.mxu0 0
  %5485 = vmatpush1.bf16.msra.mxu0 0
  %5486 = vmatprep.subr.bf16.mxu0 0
  %5487 = vmatpush1.bf16.msra.mxu0 0
  %5488 = vmatprep.subr.bf16.mxu0 0
  %5489 = vmatpush1.bf16.msra.mxu0 0
  %5490 = vmatprep.subr.bf16.mxu0 0
  %5491 = vmatpush1.bf16.msra.mxu0 0
  %5492 = vmatprep.subr.bf16.mxu0 0
  %5493 = vmatpush1.bf16.msra.mxu0 0
  %5494 = vmatprep.subr.bf16.mxu0 0
  %5495 = vmatpush1.bf16.msra.mxu0 0
  %5496 = vmatprep.subr.bf16.mxu0 0
  %5497 = vmatpush1.bf16.msra.mxu0 0
  %5498 = vmatprep.subr.bf16.mxu0 0
  %5499 = vmatpush1.bf16.msra.mxu0 0
  %5500 = vmatprep.subr.bf16.mxu0 0
  %5501 = vmatpush1.bf16.msra.mxu0 0
  %5502 = vmatprep.subr.bf16.mxu0 0
  %5503 = vmatpush1.bf16.msra.mxu0 0
  %5504 = vmatprep.subr.bf16.mxu0 0
  %5505 = vmatpush1.bf16.msra.mxu0 0
  %5506 = vmatprep.subr.bf16.mxu0 0
  %5507 = vmatpush1.bf16.msra.mxu0 0
  %5508 = vmatprep.subr.bf16.mxu0 0
  %5509 = vmatpush1.bf16.msra.mxu0 0
  %5510 = vmatprep.subr.bf16.mxu0 0
  %5511 = vmatpush1.bf16.msra.mxu0 0
  %5512 = vmatprep.mubr.bf16.mxu0 0
  %5513 = vmatmul.mubr.bf16.gmra.mrb[0].mxu0 %v5478
  %v5514 = vpop.f32.mrb[0].mxu0
  %v5515 = vadd.f32 %v5415, %v5514
  %v5516 = vpop.f32.mrb[0].mxu0
  %v5517 = vadd.f32 %v5417, %v5516
  %v5518 = vpop.f32.mrb[0].mxu0
  %v5519 = vpop.f32.mrb[0].mxu0
  %5520 = vdwg.mxu0
  %5521 = vmatprep.subr.bf16.mxu0 %v5243
  %5522 = vmatpush1.bf16.msra.mxu0 %v5240
  %5523 = vmatprep.subr.bf16.mxu0 0
  %5524 = vmatpush1.bf16.msra.mxu0 0
  %5525 = vmatprep.subr.bf16.mxu0 0
  %5526 = vmatpush1.bf16.msra.mxu0 0
  %5527 = vmatprep.subr.bf16.mxu0 0
  %5528 = vmatpush1.bf16.msra.mxu0 0
  %5529 = vmatprep.subr.bf16.mxu0 0
  %5530 = vmatpush1.bf16.msra.mxu0 0
  %5531 = vmatprep.subr.bf16.mxu0 0
  %5532 = vmatpush1.bf16.msra.mxu0 0
  %5533 = vmatprep.subr.bf16.mxu0 0
  %5534 = vmatpush1.bf16.msra.mxu0 0
  %5535 = vmatprep.subr.bf16.mxu0 0
  %5536 = vmatpush1.bf16.msra.mxu0 0
  %5537 = vmatprep.subr.bf16.mxu0 0
  %5538 = vmatpush1.bf16.msra.mxu0 0
  %5539 = vmatprep.subr.bf16.mxu0 0
  %5540 = vmatpush1.bf16.msra.mxu0 0
  %5541 = vmatprep.subr.bf16.mxu0 0
  %5542 = vmatpush1.bf16.msra.mxu0 0
  %5543 = vmatprep.subr.bf16.mxu0 0
  %5544 = vmatpush1.bf16.msra.mxu0 0
  %5545 = vmatprep.subr.bf16.mxu0 0
  %5546 = vmatpush1.bf16.msra.mxu0 0
  %5547 = vmatprep.subr.bf16.mxu0 0
  %5548 = vmatpush1.bf16.msra.mxu0 0
  %5549 = vmatprep.subr.bf16.mxu0 0
  %5550 = vmatpush1.bf16.msra.mxu0 0
  %5551 = vmatprep.subr.bf16.mxu0 0
  %5552 = vmatpush1.bf16.msra.mxu0 0
  %5553 = vmatprep.mubr.bf16.mxu0 0
  %5554 = vmatmul.mubr.bf16.gmra.mrb[0].mxu0 %v5478
  %v5555 = vpop.f32.mrb[0].mxu0
  %v5556 = vadd.f32 %v5456, %v5555
  %v5557 = vpop.f32.mrb[0].mxu0
  %v5558 = vadd.f32 %v5458, %v5557
  %v5559 = vpop.f32.mrb[0].mxu0
  %v5560 = vpop.f32.mrb[0].mxu0
  %5561 = vdwg.mxu0
  %v5562 = vadd.f32 %v5515, %v5331
  %v5563 = vadd.f32 %v5517, %v5335
  %v5564 = vadd.f32 %v5556, %v5339
  %v5565 = vadd.f32 %v5558, %v5343
  %v5566 = vxor.u32 %v5562, 2147483648
  %v5567 = vmul.f32 %v5566, 1.442695
  %v5568 = vpow.pop %v5567
  %v5569 = vadd.f32 %v5568, 1.0
  %v5570 = vrcp.pop %v5569
  %v5571 = vmul.f32 1.0, %v5570
  %v5572 = vxor.u32 %v5563, 2147483648
  %v5573 = vmul.f32 %v5572, 1.442695
  %v5574 = vpow.pop %v5573
  %v5575 = vadd.f32 %v5574, 1.0
  %v5576 = vrcp.pop %v5575
  %v5577 = vmul.f32 1.0, %v5576
  %v5578 = vtanh.pop %v5564
  %v5579 = vxor.u32 %v5565, 2147483648
  %v5580 = vmul.f32 %v5579, 1.442695
  %v5581 = vpow.pop %v5580
  %v5582 = vadd.f32 %v5581, 1.0
  %v5583 = vrcp.pop %v5582
  %v5584 = vmul.f32 1.0, %v5583
  %v5585 = vmul.f32 %v5577, %v5373
  %v5586 = vmul.f32 %v5571, %v5578
  %v5587 = vadd.f32 %v5585, %v5586
  %v5588 = vtanh.pop %v5587
  %v5589 = vmul.f32 %v5584, %v5588
  %v5590 = vpack.c.bf16 %v5589, %v5589
  %v5592 = vsel %vm3946, %v5590, 0
  %5594 = vmatprep.subr.bf16.mxu0 %v5053
  %5595 = vmatpush1.bf16.msra.mxu0 %v5052
  %5596 = vmatprep.subr.bf16.mxu0 %v5057
  %5597 = vmatpush1.bf16.msra.mxu0 %v5056
  %5598 = vmatprep.subr.bf16.mxu0 %v5061
  %5599 = vmatpush1.bf16.msra.mxu0 %v5060
  %5600 = vmatprep.subr.bf16.mxu0 %v5065
  %5601 = vmatpush1.bf16.msra.mxu0 %v5064
  %5602 = vmatprep.subr.bf16.mxu0 %v5069
  %5603 = vmatpush1.bf16.msra.mxu0 %v5068
  %5604 = vmatprep.subr.bf16.mxu0 0
  %5605 = vmatpush1.bf16.msra.mxu0 0
  %5606 = vmatprep.subr.bf16.mxu0 0
  %5607 = vmatpush1.bf16.msra.mxu0 0
  %5608 = vmatprep.subr.bf16.mxu0 0
  %5609 = vmatpush1.bf16.msra.mxu0 0
  %5610 = vmatprep.subr.bf16.mxu0 0
  %5611 = vmatpush1.bf16.msra.mxu0 0
  %5612 = vmatprep.subr.bf16.mxu0 0
  %5613 = vmatpush1.bf16.msra.mxu0 0
  %5614 = vmatprep.subr.bf16.mxu0 0
  %5615 = vmatpush1.bf16.msra.mxu0 0
  %5616 = vmatprep.subr.bf16.mxu0 0
  %5617 = vmatpush1.bf16.msra.mxu0 0
  %5618 = vmatprep.subr.bf16.mxu0 0
  %5619 = vmatpush1.bf16.msra.mxu0 0
  %5620 = vmatprep.subr.bf16.mxu0 0
  %5621 = vmatpush1.bf16.msra.mxu0 0
  %5622 = vmatprep.subr.bf16.mxu0 0
  %5623 = vmatpush1.bf16.msra.mxu0 0
  %5624 = vmatprep.subr.bf16.mxu0 0
  %5625 = vmatpush1.bf16.msra.mxu0 0
  %5626 = vmatprep.mubr.bf16.mxu0 0
  %5627 = vmatmul.mubr.bf16.gmra.mrb[0].mxu0 %v5592
  %v5628 = vpop.f32.mrb[0].mxu0
  %v5629 = vadd.f32 0.0, %v5628
  %v5630 = vpop.f32.mrb[0].mxu0
  %v5631 = vadd.f32 0.0, %v5630
  %v5632 = vpop.f32.mrb[0].mxu0
  %v5633 = vpop.f32.mrb[0].mxu0
  %5634 = vdwg.mxu0
  %5635 = vmatprep.subr.bf16.mxu0 %v5055
  %5636 = vmatpush1.bf16.msra.mxu0 %v5054
  %5637 = vmatprep.subr.bf16.mxu0 %v5059
  %5638 = vmatpush1.bf16.msra.mxu0 %v5058
  %5639 = vmatprep.subr.bf16.mxu0 %v5063
  %5640 = vmatpush1.bf16.msra.mxu0 %v5062
  %5641 = vmatprep.subr.bf16.mxu0 %v5067
  %5642 = vmatpush1.bf16.msra.mxu0 %v5066
  %5643 = vmatprep.subr.bf16.mxu0 %v5071
  %5644 = vmatpush1.bf16.msra.mxu0 %v5070
  %5645 = vmatprep.subr.bf16.mxu0 0
  %5646 = vmatpush1.bf16.msra.mxu0 0
  %5647 = vmatprep.subr.bf16.mxu0 0
  %5648 = vmatpush1.bf16.msra.mxu0 0
  %5649 = vmatprep.subr.bf16.mxu0 0
  %5650 = vmatpush1.bf16.msra.mxu0 0
  %5651 = vmatprep.subr.bf16.mxu0 0
  %5652 = vmatpush1.bf16.msra.mxu0 0
  %5653 = vmatprep.subr.bf16.mxu0 0
  %5654 = vmatpush1.bf16.msra.mxu0 0
  %5655 = vmatprep.subr.bf16.mxu0 0
  %5656 = vmatpush1.bf16.msra.mxu0 0
  %5657 = vmatprep.subr.bf16.mxu0 0
  %5658 = vmatpush1.bf16.msra.mxu0 0
  %5659 = vmatprep.subr.bf16.mxu0 0
  %5660 = vmatpush1.bf16.msra.mxu0 0
  %5661 = vmatprep.subr.bf16.mxu0 0
  %5662 = vmatpush1.bf16.msra.mxu0 0
  %5663 = vmatprep.subr.bf16.mxu0 0
  %5664 = vmatpush1.bf16.msra.mxu0 0
  %5665 = vmatprep.subr.bf16.mxu0 0
  %5666 = vmatpush1.bf16.msra.mxu0 0
  %5667 = vmatprep.mubr.bf16.mxu0 0
  %5668 = vmatmul.mubr.bf16.gmra.mrb[0].mxu0 %v5592
  %v5669 = vpop.f32.mrb[0].mxu0
  %v5670 = vadd.f32 0.0, %v5669
  %v5671 = vpop.f32.mrb[0].mxu0
  %v5672 = vadd.f32 0.0, %v5671
  %v5673 = vpop.f32.mrb[0].mxu0
  %v5674 = vpop.f32.mrb[0].mxu0
  %5675 = vdwg.mxu0
  %v5676 = vrot.slane %v5184, 2
  %v5677 = vrot.slane %v5185, 1
  %v5678 = vsel %vm5193, %v5677, %v5676
  %v5679 = vsel %vm5196, %v5186, %v5678
  %v5680 = vrot.slane %v5187, 7
  %v5681 = vsel %vm5199, %v5680, %v5679
  %v5682 = vrot.slane %v5188, 6
  %v5683 = vsel %vm5202, %v5682, %v5681
  %v5684 = vrot.slane %v5189, 5
  %v5685 = vsel %vm5205, %v5684, %v5683
  %v5686 = vrot.slane %v5190, 4
  %v5687 = vsel %vm5208, %v5686, %v5685
  %v5688 = vrot.slane %v5191, 3
  %v5689 = vsel %vm5211, %v5688, %v5687
  %v5690 = vpack.c.b16 %v5689, %v5689
  %v5692 = vsel %vm3616, %v5690, 0
  %5694 = vmatprep.subr.bf16.mxu0 %v5237
  %5695 = vmatpush1.bf16.msra.mxu0 %v5234
  %5696 = vmatprep.subr.bf16.mxu0 0
  %5697 = vmatpush1.bf16.msra.mxu0 0
  %5698 = vmatprep.subr.bf16.mxu0 0
  %5699 = vmatpush1.bf16.msra.mxu0 0
  %5700 = vmatprep.subr.bf16.mxu0 0
  %5701 = vmatpush1.bf16.msra.mxu0 0
  %5702 = vmatprep.subr.bf16.mxu0 0
  %5703 = vmatpush1.bf16.msra.mxu0 0
  %5704 = vmatprep.subr.bf16.mxu0 0
  %5705 = vmatpush1.bf16.msra.mxu0 0
  %5706 = vmatprep.subr.bf16.mxu0 0
  %5707 = vmatpush1.bf16.msra.mxu0 0
  %5708 = vmatprep.subr.bf16.mxu0 0
  %5709 = vmatpush1.bf16.msra.mxu0 0
  %5710 = vmatprep.subr.bf16.mxu0 0
  %5711 = vmatpush1.bf16.msra.mxu0 0
  %5712 = vmatprep.subr.bf16.mxu0 0
  %5713 = vmatpush1.bf16.msra.mxu0 0
  %5714 = vmatprep.subr.bf16.mxu0 0
  %5715 = vmatpush1.bf16.msra.mxu0 0
  %5716 = vmatprep.subr.bf16.mxu0 0
  %5717 = vmatpush1.bf16.msra.mxu0 0
  %5718 = vmatprep.subr.bf16.mxu0 0
  %5719 = vmatpush1.bf16.msra.mxu0 0
  %5720 = vmatprep.subr.bf16.mxu0 0
  %5721 = vmatpush1.bf16.msra.mxu0 0
  %5722 = vmatprep.subr.bf16.mxu0 0
  %5723 = vmatpush1.bf16.msra.mxu0 0
  %5724 = vmatprep.subr.bf16.mxu0 0
  %5725 = vmatpush1.bf16.msra.mxu0 0
  %5726 = vmatprep.mubr.bf16.mxu0 0
  %5727 = vmatmul.mubr.bf16.gmra.mrb[0].mxu0 %v5692
  %v5728 = vpop.f32.mrb[0].mxu0
  %v5729 = vadd.f32 %v5629, %v5728
  %v5730 = vpop.f32.mrb[0].mxu0
  %v5731 = vadd.f32 %v5631, %v5730
  %v5732 = vpop.f32.mrb[0].mxu0
  %v5733 = vpop.f32.mrb[0].mxu0
  %5734 = vdwg.mxu0
  %5735 = vmatprep.subr.bf16.mxu0 %v5243
  %5736 = vmatpush1.bf16.msra.mxu0 %v5240
  %5737 = vmatprep.subr.bf16.mxu0 0
  %5738 = vmatpush1.bf16.msra.mxu0 0
  %5739 = vmatprep.subr.bf16.mxu0 0
  %5740 = vmatpush1.bf16.msra.mxu0 0
  %5741 = vmatprep.subr.bf16.mxu0 0
  %5742 = vmatpush1.bf16.msra.mxu0 0
  %5743 = vmatprep.subr.bf16.mxu0 0
  %5744 = vmatpush1.bf16.msra.mxu0 0
  %5745 = vmatprep.subr.bf16.mxu0 0
  %5746 = vmatpush1.bf16.msra.mxu0 0
  %5747 = vmatprep.subr.bf16.mxu0 0
  %5748 = vmatpush1.bf16.msra.mxu0 0
  %5749 = vmatprep.subr.bf16.mxu0 0
  %5750 = vmatpush1.bf16.msra.mxu0 0
  %5751 = vmatprep.subr.bf16.mxu0 0
  %5752 = vmatpush1.bf16.msra.mxu0 0
  %5753 = vmatprep.subr.bf16.mxu0 0
  %5754 = vmatpush1.bf16.msra.mxu0 0
  %5755 = vmatprep.subr.bf16.mxu0 0
  %5756 = vmatpush1.bf16.msra.mxu0 0
  %5757 = vmatprep.subr.bf16.mxu0 0
  %5758 = vmatpush1.bf16.msra.mxu0 0
  %5759 = vmatprep.subr.bf16.mxu0 0
  %5760 = vmatpush1.bf16.msra.mxu0 0
  %5761 = vmatprep.subr.bf16.mxu0 0
  %5762 = vmatpush1.bf16.msra.mxu0 0
  %5763 = vmatprep.subr.bf16.mxu0 0
  %5764 = vmatpush1.bf16.msra.mxu0 0
  %5765 = vmatprep.subr.bf16.mxu0 0
  %5766 = vmatpush1.bf16.msra.mxu0 0
  %5767 = vmatprep.mubr.bf16.mxu0 0
  %5768 = vmatmul.mubr.bf16.gmra.mrb[0].mxu0 %v5692
  %v5769 = vpop.f32.mrb[0].mxu0
  %v5770 = vadd.f32 %v5670, %v5769
  %v5771 = vpop.f32.mrb[0].mxu0
  %v5772 = vadd.f32 %v5672, %v5771
  %v5773 = vpop.f32.mrb[0].mxu0
  %v5774 = vpop.f32.mrb[0].mxu0
  %5775 = vdwg.mxu0
  %v5776 = vadd.f32 %v5729, %v5331
  %v5777 = vadd.f32 %v5731, %v5335
  %v5778 = vadd.f32 %v5770, %v5339
  %v5779 = vadd.f32 %v5772, %v5343
  %v5780 = vxor.u32 %v5776, 2147483648
  %v5781 = vmul.f32 %v5780, 1.442695
  %v5782 = vpow.pop %v5781
  %v5783 = vadd.f32 %v5782, 1.0
  %v5784 = vrcp.pop %v5783
  %v5785 = vmul.f32 1.0, %v5784
  %v5786 = vxor.u32 %v5777, 2147483648
  %v5787 = vmul.f32 %v5786, 1.442695
  %v5788 = vpow.pop %v5787
  %v5789 = vadd.f32 %v5788, 1.0
  %v5790 = vrcp.pop %v5789
  %v5791 = vmul.f32 1.0, %v5790
  %v5792 = vtanh.pop %v5778
  %v5793 = vxor.u32 %v5779, 2147483648
  %v5794 = vmul.f32 %v5793, 1.442695
  %v5795 = vpow.pop %v5794
  %v5796 = vadd.f32 %v5795, 1.0
  %v5797 = vrcp.pop %v5796
  %v5798 = vmul.f32 1.0, %v5797
  %v5799 = vmul.f32 %v5791, %v5587
  %v5800 = vmul.f32 %v5785, %v5792
  %v5801 = vadd.f32 %v5799, %v5800
  %v5802 = vtanh.pop %v5801
  %v5803 = vmul.f32 %v5798, %v5802
  %5805 = vrot.lane.b32.xlu0 %v5803, 80
  %v5806 = vpop.permute.xlu0 %5805
  %v5808 = vsel %vm3946, %v5803, %v5806
  %5809 = vst [vmem:[%s10] sm:$0xff] %v5808
  %vm5810 = vcmask 261120
  %5811 = vst.msk [vmem:[%s10 + $0x8] sm:$0xff] %vm5810, %v5806
  // Predicated region
  $region42: #{protein_forward.1} parent=0 // pred_check
    _
  $region43: #{protein_forward.1} parent=0 // pred_check_branch
    %5813 = sbr.rel (0) target = $region45
  $region44: #{protein_forward.1} parent=0 // pred_region
    _
  $region45: #{protein_forward.1} parent=0 // pred_fallthru
    _
  // Predicated region
  $region46: #{protein_forward.1} parent=0 // pred_check
    _
  $region47: #{protein_forward.1} parent=0 // pred_check_branch
    %5815 = sbr.rel (0) target = $region49
  $region48: #{protein_forward.1} parent=0 // pred_region
    _
  $region49: #{protein_forward.1} parent=0 // pred_fallthru
    _

</llo_original>
